<compile_context>
chip_gen: v5e
topology: v5e:2x2
jax: 0.10.0
libtpu: 0.0.40
codegen_flags: <defaults>
</compile_context>

<pallas_src>
import jax
import jax.numpy as jnp
from jax.experimental import pallas as pl
from jax.experimental.pallas import tpu as pltpu

D_IN  = 56320      # in_features of l1  (8 * 7040)
H     = 16         # hidden (l1 out)
C     = 101        # classes (l2 out)
C_PAD = 128        # classes padded to a full lane width


def classi_old1_kernel(x_ref, w1t_ref, b1_ref, w2_ref, b2_ref, o_ref):
    # x_ref  : (B, D_IN)        f32
    # w1t_ref: (H, D_IN)        f32  (PyTorch Linear layout: (out, in), lane-dense)
    # b1_ref : (1, H)           f32
    # w2_ref : (H, C_PAD)       f32  (transposed + zero-padded to 128 lanes)
    # b2_ref : (1, C_PAD)       f32
    # o_ref  : (B, C_PAD)       f32
    x = x_ref[...]
    w1t = w1t_ref[...]
    batch = x.shape[0]
    hidden = w1t.shape[0]

    # First linear:  h[b, j] = sum_k x[b, k] * W1[j, k]
    # VPU multiply + lane reduce against the lane-dense W1 (avoids MXU/
    # transpose work that would be wasted at M=2, N=16).
    rows = []
    for b in range(batch):                       # batch is tiny & static
        xb = x[b:b + 1, :]                       # (1, D_IN)
        prod = w1t * xb                          # (H, D_IN), sublane-broadcast
        rows.append(jnp.sum(prod, axis=-1).reshape(1, hidden))   # (1, H)
    h = jnp.concatenate(rows, axis=0)            # (B, H)

    h = h + b1_ref[...]                          # l1 bias
    h = jnp.where(h > 0.0, h, 0.1 * h)           # LeakyReLU(0.1)
    # Dropout(0.5): identity in eval mode (no masking, no scaling).

    out = jnp.dot(h, w2_ref[...],
                  preferred_element_type=jnp.float32) + b2_ref[...]
    o_ref[...] = out.astype(o_ref.dtype)


def classi_old1_forward(x, w1, b1, w2, b2):
    """x: (B, ...) with prod(...) == D_IN.  Weights in PyTorch Linear layout:
    w1 (H, D_IN), b1 (H,), w2 (C, H), b2 (C,)."""
    B = x.shape[0]
    xf = x.reshape(B, -1).astype(jnp.float32)
    assert xf.shape[1] == D_IN, f"flattened input must be {D_IN} wide"

    # Wrapper-side layout plumbing (pure XLA, tiny):
    b1r = b1.reshape(1, H).astype(jnp.float32)
    w2p = jnp.zeros((H, C_PAD), jnp.float32).at[:, :C].set(w2.T.astype(jnp.float32))
    b2p = jnp.zeros((1, C_PAD), jnp.float32).at[:, :C].set(b2.astype(jnp.float32))

    out_padded = pl.pallas_call(
        classi_old1_kernel,
        out_shape=jax.ShapeDtypeStruct((B, C_PAD), jnp.float32),
        grid=(1,),                                   # single step: no pipeline overhead
        in_specs=[
            pl.BlockSpec((B, D_IN),   lambda i: (0, 0)),   # x (full)
            pl.BlockSpec((H, D_IN),   lambda i: (0, 0)),   # W1 (lane-dense, full)
            pl.BlockSpec((1, H),      lambda i: (0, 0)),   # b1
            pl.BlockSpec((H, C_PAD),  lambda i: (0, 0)),   # W2 (padded)
            pl.BlockSpec((1, C_PAD),  lambda i: (0, 0)),   # b2 (padded)
        ],
        out_specs=pl.BlockSpec((B, C_PAD), lambda i: (0, 0)),
        compiler_params=pltpu.CompilerParams(
            dimension_semantics=("arbitrary",),
            vmem_limit_bytes=40 * 1024 * 1024,   # ~18 MiB resident + headroom;
                                                 # above v5e's 16 MiB default,
                                                 # well under v7x's 64 MiB.
        ),
    )(xf, w1.astype(jnp.float32), b1r, w2p, b2p)

    return out_padded[:, :C]


def reference_forward(x, w1, b1, w2, b2):
    xf = x.reshape(x.shape[0], -1)
    h = jnp.dot(xf, w1.T, precision=jax.lax.Precision.HIGHEST) + b1
    h = jnp.where(h > 0, h, 0.1 * h)
    return jnp.dot(h, w2.T, precision=jax.lax.Precision.HIGHEST) + b2


if __name__ == "__main__":
    key = jax.random.PRNGKey(0)
    k_x, k_w1, k_b1, k_w2, k_b2 = jax.random.split(key, 5)

    B = 2  # small batch

    # PyTorch nn.Linear init style: uniform(-1/sqrt(fan_in), 1/sqrt(fan_in)),
    # weights stored as (out_features, in_features).
    lim1 = 1.0 / jnp.sqrt(jnp.float32(D_IN))
    lim2 = 1.0 / jnp.sqrt(jnp.float32(H))
    w1 = jax.random.uniform(k_w1, (H, D_IN), jnp.float32, -lim1, lim1)
    b1 = jax.random.uniform(k_b1, (H,),      jnp.float32, -lim1, lim1)
    w2 = jax.random.uniform(k_w2, (C, H),    jnp.float32, -lim2, lim2)
    b2 = jax.random.uniform(k_b2, (C,),      jnp.float32, -lim2, lim2)

    # Input shaped so that x.view(B, -1) -> (B, 56320), matching the module.
    x = jax.random.normal(k_x, (B, 8, 7040), jnp.float32)

    out = classi_old1_forward(x, w1, b1, w2, b2)
    out = jax.block_until_ready(out)

    ref = reference_forward(x, w1, b1, w2, b2)
    assert out.shape == (B, C)
    assert jnp.allclose(out, ref, atol=1e-3, rtol=1e-3), "mismatch vs reference"

    print("KERNEL_OK")
</pallas_src>

<mosaic_0001>
module attributes {stable_mosaic.version = 11 : i64} {
  func.func @classi_old1_kernel(%arg0: i32, %arg1: memref<2x56320xf32, #tpu.memory_space<vmem>>, %arg2: memref<16x56320xf32, #tpu.memory_space<vmem>>, %arg3: memref<1x16xf32, #tpu.memory_space<vmem>>, %arg4: memref<16x128xf32, #tpu.memory_space<vmem>>, %arg5: memref<1x128xf32, #tpu.memory_space<vmem>>, %arg6: memref<2x128xf32, #tpu.memory_space<vmem>>) attributes {dimension_semantics = [#tpu.dimension_semantics<arbitrary>], iteration_bounds = array<i64: 1>, scalar_prefetch = 0 : i64, scratch_operands = 0 : i64, tpu.core_type = #tpu.core_type<tc>, window_params = [{pipeline_mode = #tpu.pipeline_mode<synchronous>, transform_indices = @transform_0, window_bounds = array<i64: 2, 56320>}, {pipeline_mode = #tpu.pipeline_mode<synchronous>, transform_indices = @transform_1, window_bounds = array<i64: 16, 56320>}, {pipeline_mode = #tpu.pipeline_mode<synchronous>, transform_indices = @transform_2, window_bounds = array<i64: 1, 16>}, {pipeline_mode = #tpu.pipeline_mode<synchronous>, transform_indices = @transform_3, window_bounds = array<i64: 16, 128>}, {pipeline_mode = #tpu.pipeline_mode<synchronous>, transform_indices = @transform_4, window_bounds = array<i64: 1, 128>}, {pipeline_mode = #tpu.pipeline_mode<synchronous>, transform_indices = @transform_5, window_bounds = array<i64: 2, 128>}]} {
    %c0 = arith.constant 0 : index
    %c0_0 = arith.constant 0 : index
    %0 = vector.load %arg1[%c0, %c0_0] : memref<2x56320xf32, #tpu.memory_space<vmem>>, vector<2x56320xf32>
    %c0_1 = arith.constant 0 : index
    %c0_2 = arith.constant 0 : index
    %1 = vector.load %arg2[%c0_1, %c0_2] : memref<16x56320xf32, #tpu.memory_space<vmem>>, vector<16x56320xf32>
    %2 = vector.extract_strided_slice %0 {offsets = [0, 0], sizes = [1, 56320], strides = [1, 1]} : vector<2x56320xf32> to vector<1x56320xf32>
    %3 = vector.broadcast %2 : vector<1x56320xf32> to vector<16x56320xf32>
    %4 = arith.mulf %1, %3 : vector<16x56320xf32>
    %cst = arith.constant dense<0.000000e+00> : vector<16xf32>
    %5 = vector.multi_reduction <add>, %4, %cst [1] : vector<16x56320xf32> to vector<16xf32>
    %6 = vector.shape_cast %5 : vector<16xf32> to vector<1x16xf32>
    %7 = vector.extract_strided_slice %0 {offsets = [1, 0], sizes = [1, 56320], strides = [1, 1]} : vector<2x56320xf32> to vector<1x56320xf32>
    %8 = vector.broadcast %7 : vector<1x56320xf32> to vector<16x56320xf32>
    %9 = arith.mulf %1, %8 : vector<16x56320xf32>
    %cst_3 = arith.constant dense<0.000000e+00> : vector<16xf32>
    %10 = vector.multi_reduction <add>, %9, %cst_3 [1] : vector<16x56320xf32> to vector<16xf32>
    %11 = vector.shape_cast %10 : vector<16xf32> to vector<1x16xf32>
    %12 = tpu.concatenate %6, %11 in 0 : vector<1x16xf32>, vector<1x16xf32> -> vector<2x16xf32>
    %c0_4 = arith.constant 0 : index
    %c0_5 = arith.constant 0 : index
    %13 = vector.load %arg3[%c0_4, %c0_5] : memref<1x16xf32, #tpu.memory_space<vmem>>, vector<1x16xf32>
    %14 = vector.broadcast %13 : vector<1x16xf32> to vector<2x16xf32>
    %15 = arith.addf %12, %14 : vector<2x16xf32>
    %cst_6 = arith.constant 0.000000e+00 : f32
    %16 = vector.broadcast %cst_6 : f32 to vector<2x16xf32>
    %17 = arith.cmpf ogt, %15, %16 : vector<2x16xf32>
    %cst_7 = arith.constant 1.000000e-01 : f32
    %18 = vector.broadcast %cst_7 : f32 to vector<2x16xf32>
    %19 = arith.mulf %18, %15 : vector<2x16xf32>
    %20 = arith.select %17, %15, %19 : vector<2x16xi1>, vector<2x16xf32>
    %c0_8 = arith.constant 0 : index
    %c0_9 = arith.constant 0 : index
    %21 = vector.load %arg4[%c0_8, %c0_9] : memref<16x128xf32, #tpu.memory_space<vmem>>, vector<16x128xf32>
    %cst_10 = arith.constant dense<0.000000e+00> : vector<2x128xf32>
    %22 = tpu.matmul %20, %21, %cst_10 {dimension_numbers = #tpu.dot_dimension_numbers<[1], [0], [0], [1], [0, 0, 1, 1], [], []>} : vector<2x16xf32>, vector<16x128xf32>, vector<2x128xf32> -> vector<2x128xf32>
    %c0_11 = arith.constant 0 : index
    %c0_12 = arith.constant 0 : index
    %23 = vector.load %arg5[%c0_11, %c0_12] : memref<1x128xf32, #tpu.memory_space<vmem>>, vector<1x128xf32>
    %24 = vector.broadcast %23 : vector<1x128xf32> to vector<2x128xf32>
    %25 = arith.addf %22, %24 : vector<2x128xf32>
    %c0_13 = arith.constant 0 : index
    %c0_14 = arith.constant 0 : index
    %26 = vector.load %arg6[%c0_13, %c0_14] : memref<2x128xf32, #tpu.memory_space<vmem>>, vector<2x128xf32>
    tpu.vector_store %arg6[%c0_13, %c0_14], %25 {strides = array<i32>} : memref<2x128xf32, #tpu.memory_space<vmem>>, vector<2x128xf32>,
    return
  }
  func.func @transform_0(%arg0: i32) -> (i32, i32) {
    %c0_i32 = arith.constant 0 : i32
    %c0_i32_0 = arith.constant 0 : i32
    %c0_i32_1 = arith.constant 0 : i32
    return %c0_i32, %c0_i32_0 : i32, i32
  }
  func.func @transform_1(%arg0: i32) -> (i32, i32) {
    %c0_i32 = arith.constant 0 : i32
    %c0_i32_0 = arith.constant 0 : i32
    %c0_i32_1 = arith.constant 0 : i32
    return %c0_i32, %c0_i32_0 : i32, i32
  }
  func.func @transform_2(%arg0: i32) -> (i32, i32) {
    %c0_i32 = arith.constant 0 : i32
    %c0_i32_0 = arith.constant 0 : i32
    %c0_i32_1 = arith.constant 0 : i32
    return %c0_i32, %c0_i32_0 : i32, i32
  }
  func.func @transform_3(%arg0: i32) -> (i32, i32) {
    %c0_i32 = arith.constant 0 : i32
    %c0_i32_0 = arith.constant 0 : i32
    %c0_i32_1 = arith.constant 0 : i32
    return %c0_i32, %c0_i32_0 : i32, i32
  }
  func.func @transform_4(%arg0: i32) -> (i32, i32) {
    %c0_i32 = arith.constant 0 : i32
    %c0_i32_0 = arith.constant 0 : i32
    %c0_i32_1 = arith.constant 0 : i32
    return %c0_i32, %c0_i32_0 : i32, i32
  }
  func.func @transform_5(%arg0: i32) -> (i32, i32) {
    %c0_i32 = arith.constant 0 : i32
    %c0_i32_0 = arith.constant 0 : i32
    %c0_i32_1 = arith.constant 0 : i32
    return %c0_i32, %c0_i32_0 : i32, i32
  }
}

</mosaic_0001>

<llo_original>
// kernel: tpu_custom_call.1
$region0: #{tpu_custom_call.1}
  #allocation0 [shape = 'u32[]', space=smem, size = 0x4, offset = 0x4, fixed_abs, tag = 'smem constant byte address 0x4 - core index']
  #allocation1 [shape = 'u32[72,128]{1,0:T(1,128)}', space=vmem, size = 0x9000, scoped, tag = 'internal scratch']
  %s0 = inlined_call_operand.hbm [shape: f32[2,56320], index: 0, kind: input, shape index: {}]
  %s1 = inlined_call_operand.hbm [shape: f32[16,56320], index: 1, kind: input, shape index: {}]
  %s2 = inlined_call_operand.hbm [shape: f32[1,16], index: 2, kind: input, shape index: {}]
  %s3 = inlined_call_operand.hbm [shape: f32[16,128], index: 3, kind: input, shape index: {}]
  %s4 = inlined_call_operand.hbm [shape: f32[1,128], index: 4, kind: input, shape index: {}]
  %s5 = inlined_call_operand.hbm [shape: f32[2,128], index: 5, kind: output, shape index: {}]
  %s6 = sld [smem:[#allocation0]]
  $region50: #{tpu_custom_call.1} parent=0
    _
  %s8 = ssub.s32 1, %s6
  %s9 = scalar_select 0, %s8, %s6
  $region1: #{tpu_custom_call.1} parent=0
    #allocation2 [shape = 'u8[450560]{0}', space=vmem, size = 0x6e000, scoped, tag = 'input window, operand 0, single buffered']
    #allocation3 [shape = 's32[1]{0}', space=sflag, size = 0x4, scoped, tag = 'scoped memory for tpu_custom_call.1']
    #allocation4 [shape = 's32[1]{0}', space=sflag, size = 0x4, scoped, tag = 'scoped memory for tpu_custom_call.1']
    #allocation5 [shape = 'u8[3604480]{0}', space=vmem, size = 0x370000, scoped, tag = 'input window, operand 1, single buffered']
    #allocation6 [shape = 's32[1]{0}', space=sflag, size = 0x4, scoped, tag = 'scoped memory for tpu_custom_call.1']
    #allocation7 [shape = 'u8[512]{0}', space=vmem, size = 0x400, scoped, tag = 'input window, operand 2, single buffered']
    #allocation8 [shape = 'u8[8192]{0}', space=vmem, size = 0x2000, scoped, tag = 'input window, operand 3, single buffered']
    #allocation9 [shape = 's32[1]{0}', space=sflag, size = 0x4, scoped, tag = 'scoped memory for tpu_custom_call.1']
    #allocation10 [shape = 'u8[512]{0}', space=vmem, size = 0x400, scoped, tag = 'input window, operand 4, single buffered']
    #allocation11 [shape = 'u8[1024]{0}', space=vmem, size = 0x400, scoped, tag = 'output window, operand 0, single buffered']
    %10 = vsyncpa [#allocation3], 0
    %11 = vsyncpa [#allocation6], 0
    %12 = vsyncpa [#allocation9], 0
    %13 = vsyncpa [#allocation4], 0
    // Predicated region
    $region2: #{tpu_custom_call.1} parent=1 // pred_check
      _
    $region3: #{tpu_custom_call.1} parent=1 // pred_check_branch
      %15 = sbr.rel (0) target = $region5
    $region4: #{tpu_custom_call.1} parent=1 // pred_region
      %17 = vsyncadd [#allocation3], 0
      %s19 = sshll.u32 %s0, 4
      %s20 = int_to_ptr.hbm [resolvable:$true] %s19
      %s21 = sshll.u32 [#allocation2], 4
      %s22 = int_to_ptr.vmem [resolvable:$true] %s21
      %24 = dma.hbm_to_vmem [thread:$0]  %s20, 14080, %s22, [#allocation3]
    $region5: #{tpu_custom_call.1} parent=1 // pred_fallthru
      _
    // Predicated region
    $region6: #{tpu_custom_call.1} parent=1 // pred_check
      _
    $region7: #{tpu_custom_call.1} parent=1 // pred_check_branch
      %26 = sbr.rel (0) target = $region9
    $region8: #{tpu_custom_call.1} parent=1 // pred_region
      %28 = vsyncadd [#allocation6], 0
      %s29 = sshll.u32 %s1, 4
      %s30 = int_to_ptr.hbm [resolvable:$true] %s29
      %s31 = sshll.u32 [#allocation5], 4
      %s32 = int_to_ptr.vmem [resolvable:$true] %s31
      %37 = dma.hbm_to_vmem [thread:$0]  %s30, 112640, %s32, [#allocation6], 56320, 56320, 3520
    $region9: #{tpu_custom_call.1} parent=1 // pred_fallthru
      _
    // Predicated region
    $region10: #{tpu_custom_call.1} parent=1 // pred_check
      _
    $region11: #{tpu_custom_call.1} parent=1 // pred_check_branch
      %39 = sbr.rel (0) target = $region13
    $region12: #{tpu_custom_call.1} parent=1 // pred_region
      %41 = vsyncadd [#allocation6], 0
      %s43 = sshll.u32 %s2, 4
      %s44 = int_to_ptr.hbm [resolvable:$true] %s43
      %s45 = sshll.u32 [#allocation7], 4
      %s46 = int_to_ptr.vmem [resolvable:$true] %s45
      %48 = dma.hbm_to_vmem [thread:$0]  %s44, 16, %s46, [#allocation6]
    $region13: #{tpu_custom_call.1} parent=1 // pred_fallthru
      _
    // Predicated region
    $region14: #{tpu_custom_call.1} parent=1 // pred_check
      _
    $region15: #{tpu_custom_call.1} parent=1 // pred_check_branch
      %50 = sbr.rel (0) target = $region17
    $region16: #{tpu_custom_call.1} parent=1 // pred_region
      %52 = vsyncadd [#allocation9], 0
      %s53 = sshll.u32 %s3, 4
      %s54 = int_to_ptr.hbm [resolvable:$true] %s53
      %s55 = sshll.u32 [#allocation8], 4
      %s56 = int_to_ptr.vmem [resolvable:$true] %s55
      %61 = dma.hbm_to_vmem [thread:$0]  %s54, 256, %s56, [#allocation9], 128, 128, 8
    $region17: #{tpu_custom_call.1} parent=1 // pred_fallthru
      _
    // Predicated region
    $region18: #{tpu_custom_call.1} parent=1 // pred_check
      _
    $region19: #{tpu_custom_call.1} parent=1 // pred_check_branch
      %63 = sbr.rel (0) target = $region21
    $region20: #{tpu_custom_call.1} parent=1 // pred_region
      %65 = vsyncadd [#allocation9], 0
      %s67 = sshll.u32 %s4, 4
      %s68 = int_to_ptr.hbm [resolvable:$true] %s67
      %s69 = sshll.u32 [#allocation10], 4
      %s70 = int_to_ptr.vmem [resolvable:$true] %s69
      %72 = dma.hbm_to_vmem [thread:$0]  %s68, 16, %s70, [#allocation9]
    $region21: #{tpu_custom_call.1} parent=1 // pred_fallthru
      _
    // Predicated region
    $region22: #{tpu_custom_call.1} parent=1 // pred_check
      _
    $region23: #{tpu_custom_call.1} parent=1 // pred_check_branch
      %74 = sbr.rel (0) target = $region25
    $region24: #{tpu_custom_call.1} parent=1 // pred_region
      %76 = dma.done [#allocation3], 14080
    $region25: #{tpu_custom_call.1} parent=1 // pred_fallthru
      _
    // Predicated region
    $region26: #{tpu_custom_call.1} parent=1 // pred_check
      _
    $region27: #{tpu_custom_call.1} parent=1 // pred_check_branch
      %78 = sbr.rel (0) target = $region29
    $region28: #{tpu_custom_call.1} parent=1 // pred_region
      %80 = dma.done [#allocation6], 112640
    $region29: #{tpu_custom_call.1} parent=1 // pred_fallthru
      _
    // Predicated region
    $region30: #{tpu_custom_call.1} parent=1 // pred_check
      _
    $region31: #{tpu_custom_call.1} parent=1 // pred_check_branch
      %82 = sbr.rel (0) target = $region33
    $region32: #{tpu_custom_call.1} parent=1 // pred_region
      %84 = dma.done [#allocation6], 16
    $region33: #{tpu_custom_call.1} parent=1 // pred_fallthru
      _
    // Predicated region
    $region34: #{tpu_custom_call.1} parent=1 // pred_check
      _
    $region35: #{tpu_custom_call.1} parent=1 // pred_check_branch
      %86 = sbr.rel (0) target = $region37
    $region36: #{tpu_custom_call.1} parent=1 // pred_region
      %88 = dma.done [#allocation9], 256
    $region37: #{tpu_custom_call.1} parent=1 // pred_fallthru
      _
    // Predicated region
    $region38: #{tpu_custom_call.1} parent=1 // pred_check
      _
    $region39: #{tpu_custom_call.1} parent=1 // pred_check_branch
      %90 = sbr.rel (0) target = $region41
    $region40: #{tpu_custom_call.1} parent=1 // pred_region
      %92 = dma.done [#allocation9], 16
    $region41: #{tpu_custom_call.1} parent=1 // pred_fallthru
      _
    %v93 = vld [vmem:[#allocation2] sm:$0xff]
    %v94 = vld [vmem:[#allocation2 + $0x8] sm:$0xff]
    %v95 = vld [vmem:[#allocation2 + $0x10] sm:$0xff]
    %v96 = vld [vmem:[#allocation2 + $0x18] sm:$0xff]
    %v97 = vld [vmem:[#allocation2 + $0x20] sm:$0xff]
    %v98 = vld [vmem:[#allocation2 + $0x28] sm:$0xff]
    %v99 = vld [vmem:[#allocation2 + $0x30] sm:$0xff]
    %v100 = vld [vmem:[#allocation2 + $0x38] sm:$0xff]
    %v101 = vld [vmem:[#allocation2 + $0x40] sm:$0xff]
    %v102 = vld [vmem:[#allocation2 + $0x48] sm:$0xff]
    %v103 = vld [vmem:[#allocation2 + $0x50] sm:$0xff]
    %v104 = vld [vmem:[#allocation2 + $0x58] sm:$0xff]
    %v105 = vld [vmem:[#allocation2 + $0x60] sm:$0xff]
    %v106 = vld [vmem:[#allocation2 + $0x68] sm:$0xff]
    %v107 = vld [vmem:[#allocation2 + $0x70] sm:$0xff]
    %v108 = vld [vmem:[#allocation2 + $0x78] sm:$0xff]
    %v109 = vld [vmem:[#allocation2 + $0x80] sm:$0xff]
    %v110 = vld [vmem:[#allocation2 + $0x88] sm:$0xff]
    %v111 = vld [vmem:[#allocation2 + $0x90] sm:$0xff]
    %v112 = vld [vmem:[#allocation2 + $0x98] sm:$0xff]
    %v113 = vld [vmem:[#allocation2 + $0xa0] sm:$0xff]
    %v114 = vld [vmem:[#allocation2 + $0xa8] sm:$0xff]
    %v115 = vld [vmem:[#allocation2 + $0xb0] sm:$0xff]
    %v116 = vld [vmem:[#allocation2 + $0xb8] sm:$0xff]
    %v117 = vld [vmem:[#allocation2 + $0xc0] sm:$0xff]
    %v118 = vld [vmem:[#allocation2 + $0xc8] sm:$0xff]
    %v119 = vld [vmem:[#allocation2 + $0xd0] sm:$0xff]
    %v120 = vld [vmem:[#allocation2 + $0xd8] sm:$0xff]
    %v121 = vld [vmem:[#allocation2 + $0xe0] sm:$0xff]
    %v122 = vld [vmem:[#allocation2 + $0xe8] sm:$0xff]
    %v123 = vld [vmem:[#allocation2 + $0xf0] sm:$0xff]
    %v124 = vld [vmem:[#allocation2 + $0xf8] sm:$0xff]
    %v125 = vld [vmem:[#allocation2 + $0x100] sm:$0xff]
    %v126 = vld [vmem:[#allocation2 + $0x108] sm:$0xff]
    %v127 = vld [vmem:[#allocation2 + $0x110] sm:$0xff]
    %v128 = vld [vmem:[#allocation2 + $0x118] sm:$0xff]
    %v129 = vld [vmem:[#allocation2 + $0x120] sm:$0xff]
    %v130 = vld [vmem:[#allocation2 + $0x128] sm:$0xff]
    %v131 = vld [vmem:[#allocation2 + $0x130] sm:$0xff]
    %v132 = vld [vmem:[#allocation2 + $0x138] sm:$0xff]
    %v133 = vld [vmem:[#allocation2 + $0x140] sm:$0xff]
    %v134 = vld [vmem:[#allocation2 + $0x148] sm:$0xff]
    %v135 = vld [vmem:[#allocation2 + $0x150] sm:$0xff]
    %v136 = vld [vmem:[#allocation2 + $0x158] sm:$0xff]
    %v137 = vld [vmem:[#allocation2 + $0x160] sm:$0xff]
    %v138 = vld [vmem:[#allocation2 + $0x168] sm:$0xff]
    %v139 = vld [vmem:[#allocation2 + $0x170] sm:$0xff]
    %v140 = vld [vmem:[#allocation2 + $0x178] sm:$0xff]
    %v141 = vld [vmem:[#allocation2 + $0x180] sm:$0xff]
    %v142 = vld [vmem:[#allocation2 + $0x188] sm:$0xff]
    %v143 = vld [vmem:[#allocation2 + $0x190] sm:$0xff]
    %v144 = vld [vmem:[#allocation2 + $0x198] sm:$0xff]
    %v145 = vld [vmem:[#allocation2 + $0x1a0] sm:$0xff]
    %v146 = vld [vmem:[#allocation2 + $0x1a8] sm:$0xff]
    %v147 = vld [vmem:[#allocation2 + $0x1b0] sm:$0xff]
    %v148 = vld [vmem:[#allocation2 + $0x1b8] sm:$0xff]
    %v149 = vld [vmem:[#allocation2 + $0x1c0] sm:$0xff]
    %v150 = vld [vmem:[#allocation2 + $0x1c8] sm:$0xff]
    %v151 = vld [vmem:[#allocation2 + $0x1d0] sm:$0xff]
    %v152 = vld [vmem:[#allocation2 + $0x1d8] sm:$0xff]
    %v153 = vld [vmem:[#allocation2 + $0x1e0] sm:$0xff]
    %v154 = vld [vmem:[#allocation2 + $0x1e8] sm:$0xff]
    %v155 = vld [vmem:[#allocation2 + $0x1f0] sm:$0xff]
    %v156 = vld [vmem:[#allocation2 + $0x1f8] sm:$0xff]
    %v157 = vld [vmem:[#allocation2 + $0x200] sm:$0xff]
    %v158 = vld [vmem:[#allocation2 + $0x208] sm:$0xff]
    %v159 = vld [vmem:[#allocation2 + $0x210] sm:$0xff]
    %v160 = vld [vmem:[#allocation2 + $0x218] sm:$0xff]
    %v161 = vld [vmem:[#allocation2 + $0x220] sm:$0xff]
    %v162 = vld [vmem:[#allocation2 + $0x228] sm:$0xff]
    %v163 = vld [vmem:[#allocation2 + $0x230] sm:$0xff]
    %v164 = vld [vmem:[#allocation2 + $0x238] sm:$0xff]
    %v165 = vld [vmem:[#allocation2 + $0x240] sm:$0xff]
    %v166 = vld [vmem:[#allocation2 + $0x248] sm:$0xff]
    %v167 = vld [vmem:[#allocation2 + $0x250] sm:$0xff]
    %v168 = vld [vmem:[#allocation2 + $0x258] sm:$0xff]
    %v169 = vld [vmem:[#allocation2 + $0x260] sm:$0xff]
    %v170 = vld [vmem:[#allocation2 + $0x268] sm:$0xff]
    %v171 = vld [vmem:[#allocation2 + $0x270] sm:$0xff]
    %v172 = vld [vmem:[#allocation2 + $0x278] sm:$0xff]
    %v173 = vld [vmem:[#allocation2 + $0x280] sm:$0xff]
    %v174 = vld [vmem:[#allocation2 + $0x288] sm:$0xff]
    %v175 = vld [vmem:[#allocation2 + $0x290] sm:$0xff]
    %v176 = vld [vmem:[#allocation2 + $0x298] sm:$0xff]
    %v177 = vld [vmem:[#allocation2 + $0x2a0] sm:$0xff]
    %v178 = vld [vmem:[#allocation2 + $0x2a8] sm:$0xff]
    %v179 = vld [vmem:[#allocation2 + $0x2b0] sm:$0xff]
    %v180 = vld [vmem:[#allocation2 + $0x2b8] sm:$0xff]
    %v181 = vld [vmem:[#allocation2 + $0x2c0] sm:$0xff]
    %v182 = vld [vmem:[#allocation2 + $0x2c8] sm:$0xff]
    %v183 = vld [vmem:[#allocation2 + $0x2d0] sm:$0xff]
    %v184 = vld [vmem:[#allocation2 + $0x2d8] sm:$0xff]
    %v185 = vld [vmem:[#allocation2 + $0x2e0] sm:$0xff]
    %v186 = vld [vmem:[#allocation2 + $0x2e8] sm:$0xff]
    %v187 = vld [vmem:[#allocation2 + $0x2f0] sm:$0xff]
    %v188 = vld [vmem:[#allocation2 + $0x2f8] sm:$0xff]
    %v189 = vld [vmem:[#allocation2 + $0x300] sm:$0xff]
    %v190 = vld [vmem:[#allocation2 + $0x308] sm:$0xff]
    %v191 = vld [vmem:[#allocation2 + $0x310] sm:$0xff]
    %v192 = vld [vmem:[#allocation2 + $0x318] sm:$0xff]
    %v193 = vld [vmem:[#allocation2 + $0x320] sm:$0xff]
    %v194 = vld [vmem:[#allocation2 + $0x328] sm:$0xff]
    %v195 = vld [vmem:[#allocation2 + $0x330] sm:$0xff]
    %v196 = vld [vmem:[#allocation2 + $0x338] sm:$0xff]
    %v197 = vld [vmem:[#allocation2 + $0x340] sm:$0xff]
    %v198 = vld [vmem:[#allocation2 + $0x348] sm:$0xff]
    %v199 = vld [vmem:[#allocation2 + $0x350] sm:$0xff]
    %v200 = vld [vmem:[#allocation2 + $0x358] sm:$0xff]
    %v201 = vld [vmem:[#allocation2 + $0x360] sm:$0xff]
    %v202 = vld [vmem:[#allocation2 + $0x368] sm:$0xff]
    %v203 = vld [vmem:[#allocation5] sm:$0xff]
    %v204 = vld [vmem:[#allocation5 + $0x8] sm:$0xff]
    %v205 = vld [vmem:[#allocation5 + $0x10] sm:$0xff]
    %v206 = vld [vmem:[#allocation5 + $0x18] sm:$0xff]
    %v207 = vld [vmem:[#allocation5 + $0x20] sm:$0xff]
    %v208 = vld [vmem:[#allocation5 + $0x28] sm:$0xff]
    %v209 = vld [vmem:[#allocation5 + $0x30] sm:$0xff]
    %v210 = vld [vmem:[#allocation5 + $0x38] sm:$0xff]
    %v211 = vld [vmem:[#allocation5 + $0x40] sm:$0xff]
    %v212 = vld [vmem:[#allocation5 + $0x48] sm:$0xff]
    %v213 = vld [vmem:[#allocation5 + $0x50] sm:$0xff]
    %v214 = vld [vmem:[#allocation5 + $0x58] sm:$0xff]
    %v215 = vld [vmem:[#allocation5 + $0x60] sm:$0xff]
    %v216 = vld [vmem:[#allocation5 + $0x68] sm:$0xff]
    %v217 = vld [vmem:[#allocation5 + $0x70] sm:$0xff]
    %v218 = vld [vmem:[#allocation5 + $0x78] sm:$0xff]
    %v219 = vld [vmem:[#allocation5 + $0x80] sm:$0xff]
    %v220 = vld [vmem:[#allocation5 + $0x88] sm:$0xff]
    %v221 = vld [vmem:[#allocation5 + $0x90] sm:$0xff]
    %v222 = vld [vmem:[#allocation5 + $0x98] sm:$0xff]
    %v223 = vld [vmem:[#allocation5 + $0xa0] sm:$0xff]
    %v224 = vld [vmem:[#allocation5 + $0xa8] sm:$0xff]
    %v225 = vld [vmem:[#allocation5 + $0xb0] sm:$0xff]
    %v226 = vld [vmem:[#allocation5 + $0xb8] sm:$0xff]
    %v227 = vld [vmem:[#allocation5 + $0xc0] sm:$0xff]
    %v228 = vld [vmem:[#allocation5 + $0xc8] sm:$0xff]
    %v229 = vld [vmem:[#allocation5 + $0xd0] sm:$0xff]
    %v230 = vld [vmem:[#allocation5 + $0xd8] sm:$0xff]
    %v231 = vld [vmem:[#allocation5 + $0xe0] sm:$0xff]
    %v232 = vld [vmem:[#allocation5 + $0xe8] sm:$0xff]
    %v233 = vld [vmem:[#allocation5 + $0xf0] sm:$0xff]
    %v234 = vld [vmem:[#allocation5 + $0xf8] sm:$0xff]
    %v235 = vld [vmem:[#allocation5 + $0x100] sm:$0xff]
    %v236 = vld [vmem:[#allocation5 + $0x108] sm:$0xff]
    %v237 = vld [vmem:[#allocation5 + $0x110] sm:$0xff]
    %v238 = vld [vmem:[#allocation5 + $0x118] sm:$0xff]
    %v239 = vld [vmem:[#allocation5 + $0x120] sm:$0xff]
    %v240 = vld [vmem:[#allocation5 + $0x128] sm:$0xff]
    %v241 = vld [vmem:[#allocation5 + $0x130] sm:$0xff]
    %v242 = vld [vmem:[#allocation5 + $0x138] sm:$0xff]
    %v243 = vld [vmem:[#allocation5 + $0x140] sm:$0xff]
    %v244 = vld [vmem:[#allocation5 + $0x148] sm:$0xff]
    %v245 = vld [vmem:[#allocation5 + $0x150] sm:$0xff]
    %v246 = vld [vmem:[#allocation5 + $0x158] sm:$0xff]
    %v247 = vld [vmem:[#allocation5 + $0x160] sm:$0xff]
    %v248 = vld [vmem:[#allocation5 + $0x168] sm:$0xff]
    %v249 = vld [vmem:[#allocation5 + $0x170] sm:$0xff]
    %v250 = vld [vmem:[#allocation5 + $0x178] sm:$0xff]
    %v251 = vld [vmem:[#allocation5 + $0x180] sm:$0xff]
    %v252 = vld [vmem:[#allocation5 + $0x188] sm:$0xff]
    %v253 = vld [vmem:[#allocation5 + $0x190] sm:$0xff]
    %v254 = vld [vmem:[#allocation5 + $0x198] sm:$0xff]
    %v255 = vld [vmem:[#allocation5 + $0x1a0] sm:$0xff]
    %v256 = vld [vmem:[#allocation5 + $0x1a8] sm:$0xff]
    %v257 = vld [vmem:[#allocation5 + $0x1b0] sm:$0xff]
    %v258 = vld [vmem:[#allocation5 + $0x1b8] sm:$0xff]
    %v259 = vld [vmem:[#allocation5 + $0x1c0] sm:$0xff]
    %v260 = vld [vmem:[#allocation5 + $0x1c8] sm:$0xff]
    %v261 = vld [vmem:[#allocation5 + $0x1d0] sm:$0xff]
    %v262 = vld [vmem:[#allocation5 + $0x1d8] sm:$0xff]
    %v263 = vld [vmem:[#allocation5 + $0x1e0] sm:$0xff]
    %v264 = vld [vmem:[#allocation5 + $0x1e8] sm:$0xff]
    %v265 = vld [vmem:[#allocation5 + $0x1f0] sm:$0xff]
    %v266 = vld [vmem:[#allocation5 + $0x1f8] sm:$0xff]
    %v267 = vld [vmem:[#allocation5 + $0x200] sm:$0xff]
    %v268 = vld [vmem:[#allocation5 + $0x208] sm:$0xff]
    %v269 = vld [vmem:[#allocation5 + $0x210] sm:$0xff]
    %v270 = vld [vmem:[#allocation5 + $0x218] sm:$0xff]
    %v271 = vld [vmem:[#allocation5 + $0x220] sm:$0xff]
    %v272 = vld [vmem:[#allocation5 + $0x228] sm:$0xff]
    %v273 = vld [vmem:[#allocation5 + $0x230] sm:$0xff]
    %v274 = vld [vmem:[#allocation5 + $0x238] sm:$0xff]
    %v275 = vld [vmem:[#allocation5 + $0x240] sm:$0xff]
    %v276 = vld [vmem:[#allocation5 + $0x248] sm:$0xff]
    %v277 = vld [vmem:[#allocation5 + $0x250] sm:$0xff]
    %v278 = vld [vmem:[#allocation5 + $0x258] sm:$0xff]
    %v279 = vld [vmem:[#allocation5 + $0x260] sm:$0xff]
    %v280 = vld [vmem:[#allocation5 + $0x268] sm:$0xff]
    %v281 = vld [vmem:[#allocation5 + $0x270] sm:$0xff]
    %v282 = vld [vmem:[#allocation5 + $0x278] sm:$0xff]
    %v283 = vld [vmem:[#allocation5 + $0x280] sm:$0xff]
    %v284 = vld [vmem:[#allocation5 + $0x288] sm:$0xff]
    %v285 = vld [vmem:[#allocation5 + $0x290] sm:$0xff]
    %v286 = vld [vmem:[#allocation5 + $0x298] sm:$0xff]
    %v287 = vld [vmem:[#allocation5 + $0x2a0] sm:$0xff]
    %v288 = vld [vmem:[#allocation5 + $0x2a8] sm:$0xff]
    %v289 = vld [vmem:[#allocation5 + $0x2b0] sm:$0xff]
    %v290 = vld [vmem:[#allocation5 + $0x2b8] sm:$0xff]
    %v291 = vld [vmem:[#allocation5 + $0x2c0] sm:$0xff]
    %v292 = vld [vmem:[#allocation5 + $0x2c8] sm:$0xff]
    %v293 = vld [vmem:[#allocation5 + $0x2d0] sm:$0xff]
    %v294 = vld [vmem:[#allocation5 + $0x2d8] sm:$0xff]
    %v295 = vld [vmem:[#allocation5 + $0x2e0] sm:$0xff]
    %v296 = vld [vmem:[#allocation5 + $0x2e8] sm:$0xff]
    %v297 = vld [vmem:[#allocation5 + $0x2f0] sm:$0xff]
    %v298 = vld [vmem:[#allocation5 + $0x2f8] sm:$0xff]
    %v299 = vld [vmem:[#allocation5 + $0x300] sm:$0xff]
    %v300 = vld [vmem:[#allocation5 + $0x308] sm:$0xff]
    %v301 = vld [vmem:[#allocation5 + $0x310] sm:$0xff]
    %v302 = vld [vmem:[#allocation5 + $0x318] sm:$0xff]
    %v303 = vld [vmem:[#allocation5 + $0x320] sm:$0xff]
    %v304 = vld [vmem:[#allocation5 + $0x328] sm:$0xff]
    %v305 = vld [vmem:[#allocation5 + $0x330] sm:$0xff]
    %v306 = vld [vmem:[#allocation5 + $0x338] sm:$0xff]
    %v307 = vld [vmem:[#allocation5 + $0x340] sm:$0xff]
    %v308 = vld [vmem:[#allocation5 + $0x348] sm:$0xff]
    %v309 = vld [vmem:[#allocation5 + $0x350] sm:$0xff]
    %v310 = vld [vmem:[#allocation5 + $0x358] sm:$0xff]
    %v311 = vld [vmem:[#allocation5 + $0x360] sm:$0xff]
    %v312 = vld [vmem:[#allocation5 + $0x368] sm:$0xff]
    %v313 = vld [vmem:[#allocation5 + $0x370] sm:$0xff]
    %v314 = vld [vmem:[#allocation5 + $0x378] sm:$0xff]
    %v315 = vld [vmem:[#allocation5 + $0x380] sm:$0xff]
    %v316 = vld [vmem:[#allocation5 + $0x388] sm:$0xff]
    %v317 = vld [vmem:[#allocation5 + $0x390] sm:$0xff]
    %v318 = vld [vmem:[#allocation5 + $0x398] sm:$0xff]
    %v319 = vld [vmem:[#allocation5 + $0x3a0] sm:$0xff]
    %v320 = vld [vmem:[#allocation5 + $0x3a8] sm:$0xff]
    %v321 = vld [vmem:[#allocation5 + $0x3b0] sm:$0xff]
    %v322 = vld [vmem:[#allocation5 + $0x3b8] sm:$0xff]
    %v323 = vld [vmem:[#allocation5 + $0x3c0] sm:$0xff]
    %v324 = vld [vmem:[#allocation5 + $0x3c8] sm:$0xff]
    %v325 = vld [vmem:[#allocation5 + $0x3d0] sm:$0xff]
    %v326 = vld [vmem:[#allocation5 + $0x3d8] sm:$0xff]
    %v327 = vld [vmem:[#allocation5 + $0x3e0] sm:$0xff]
    %v328 = vld [vmem:[#allocation5 + $0x3e8] sm:$0xff]
    %v329 = vld [vmem:[#allocation5 + $0x3f0] sm:$0xff]
    %v330 = vld [vmem:[#allocation5 + $0x3f8] sm:$0xff]
    %v331 = vld [vmem:[#allocation5 + $0x400] sm:$0xff]
    %v332 = vld [vmem:[#allocation5 + $0x408] sm:$0xff]
    %v333 = vld [vmem:[#allocation5 + $0x410] sm:$0xff]
    %v334 = vld [vmem:[#allocation5 + $0x418] sm:$0xff]
    %v335 = vld [vmem:[#allocation5 + $0x420] sm:$0xff]
    %v336 = vld [vmem:[#allocation5 + $0x428] sm:$0xff]
    %v337 = vld [vmem:[#allocation5 + $0x430] sm:$0xff]
    %v338 = vld [vmem:[#allocation5 + $0x438] sm:$0xff]
    %v339 = vld [vmem:[#allocation5 + $0x440] sm:$0xff]
    %v340 = vld [vmem:[#allocation5 + $0x448] sm:$0xff]
    %v341 = vld [vmem:[#allocation5 + $0x450] sm:$0xff]
    %v342 = vld [vmem:[#allocation5 + $0x458] sm:$0xff]
    %v343 = vld [vmem:[#allocation5 + $0x460] sm:$0xff]
    %v344 = vld [vmem:[#allocation5 + $0x468] sm:$0xff]
    %v345 = vld [vmem:[#allocation5 + $0x470] sm:$0xff]
    %v346 = vld [vmem:[#allocation5 + $0x478] sm:$0xff]
    %v347 = vld [vmem:[#allocation5 + $0x480] sm:$0xff]
    %v348 = vld [vmem:[#allocation5 + $0x488] sm:$0xff]
    %v349 = vld [vmem:[#allocation5 + $0x490] sm:$0xff]
    %v350 = vld [vmem:[#allocation5 + $0x498] sm:$0xff]
    %v351 = vld [vmem:[#allocation5 + $0x4a0] sm:$0xff]
    %v352 = vld [vmem:[#allocation5 + $0x4a8] sm:$0xff]
    %v353 = vld [vmem:[#allocation5 + $0x4b0] sm:$0xff]
    %v354 = vld [vmem:[#allocation5 + $0x4b8] sm:$0xff]
    %v355 = vld [vmem:[#allocation5 + $0x4c0] sm:$0xff]
    %v356 = vld [vmem:[#allocation5 + $0x4c8] sm:$0xff]
    %v357 = vld [vmem:[#allocation5 + $0x4d0] sm:$0xff]
    %v358 = vld [vmem:[#allocation5 + $0x4d8] sm:$0xff]
    %v359 = vld [vmem:[#allocation5 + $0x4e0] sm:$0xff]
    %v360 = vld [vmem:[#allocation5 + $0x4e8] sm:$0xff]
    %v361 = vld [vmem:[#allocation5 + $0x4f0] sm:$0xff]
    %v362 = vld [vmem:[#allocation5 + $0x4f8] sm:$0xff]
    %v363 = vld [vmem:[#allocation5 + $0x500] sm:$0xff]
    %v364 = vld [vmem:[#allocation5 + $0x508] sm:$0xff]
    %v365 = vld [vmem:[#allocation5 + $0x510] sm:$0xff]
    %v366 = vld [vmem:[#allocation5 + $0x518] sm:$0xff]
    %v367 = vld [vmem:[#allocation5 + $0x520] sm:$0xff]
    %v368 = vld [vmem:[#allocation5 + $0x528] sm:$0xff]
    %v369 = vld [vmem:[#allocation5 + $0x530] sm:$0xff]
    %v370 = vld [vmem:[#allocation5 + $0x538] sm:$0xff]
    %v371 = vld [vmem:[#allocation5 + $0x540] sm:$0xff]
    %v372 = vld [vmem:[#allocation5 + $0x548] sm:$0xff]
    %v373 = vld [vmem:[#allocation5 + $0x550] sm:$0xff]
    %v374 = vld [vmem:[#allocation5 + $0x558] sm:$0xff]
    %v375 = vld [vmem:[#allocation5 + $0x560] sm:$0xff]
    %v376 = vld [vmem:[#allocation5 + $0x568] sm:$0xff]
    %v377 = vld [vmem:[#allocation5 + $0x570] sm:$0xff]
    %v378 = vld [vmem:[#allocation5 + $0x578] sm:$0xff]
    %v379 = vld [vmem:[#allocation5 + $0x580] sm:$0xff]
    %v380 = vld [vmem:[#allocation5 + $0x588] sm:$0xff]
    %v381 = vld [vmem:[#allocation5 + $0x590] sm:$0xff]
    %v382 = vld [vmem:[#allocation5 + $0x598] sm:$0xff]
    %v383 = vld [vmem:[#allocation5 + $0x5a0] sm:$0xff]
    %v384 = vld [vmem:[#allocation5 + $0x5a8] sm:$0xff]
    %v385 = vld [vmem:[#allocation5 + $0x5b0] sm:$0xff]
    %v386 = vld [vmem:[#allocation5 + $0x5b8] sm:$0xff]
    %v387 = vld [vmem:[#allocation5 + $0x5c0] sm:$0xff]
    %v388 = vld [vmem:[#allocation5 + $0x5c8] sm:$0xff]
    %v389 = vld [vmem:[#allocation5 + $0x5d0] sm:$0xff]
    %v390 = vld [vmem:[#allocation5 + $0x5d8] sm:$0xff]
    %v391 = vld [vmem:[#allocation5 + $0x5e0] sm:$0xff]
    %v392 = vld [vmem:[#allocation5 + $0x5e8] sm:$0xff]
    %v393 = vld [vmem:[#allocation5 + $0x5f0] sm:$0xff]
    %v394 = vld [vmem:[#allocation5 + $0x5f8] sm:$0xff]
    %v395 = vld [vmem:[#allocation5 + $0x600] sm:$0xff]
    %v396 = vld [vmem:[#allocation5 + $0x608] sm:$0xff]
    %v397 = vld [vmem:[#allocation5 + $0x610] sm:$0xff]
    %v398 = vld [vmem:[#allocation5 + $0x618] sm:$0xff]
    %v399 = vld [vmem:[#allocation5 + $0x620] sm:$0xff]
    %v400 = vld [vmem:[#allocation5 + $0x628] sm:$0xff]
    %v401 = vld [vmem:[#allocation5 + $0x630] sm:$0xff]
    %v402 = vld [vmem:[#allocation5 + $0x638] sm:$0xff]
    %v403 = vld [vmem:[#allocation5 + $0x640] sm:$0xff]
    %v404 = vld [vmem:[#allocation5 + $0x648] sm:$0xff]
    %v405 = vld [vmem:[#allocation5 + $0x650] sm:$0xff]
    %v406 = vld [vmem:[#allocation5 + $0x658] sm:$0xff]
    %v407 = vld [vmem:[#allocation5 + $0x660] sm:$0xff]
    %v408 = vld [vmem:[#allocation5 + $0x668] sm:$0xff]
    %v409 = vld [vmem:[#allocation5 + $0x670] sm:$0xff]
    %v410 = vld [vmem:[#allocation5 + $0x678] sm:$0xff]
    %v411 = vld [vmem:[#allocation5 + $0x680] sm:$0xff]
    %v412 = vld [vmem:[#allocation5 + $0x688] sm:$0xff]
    %v413 = vld [vmem:[#allocation5 + $0x690] sm:$0xff]
    %v414 = vld [vmem:[#allocation5 + $0x698] sm:$0xff]
    %v415 = vld [vmem:[#allocation5 + $0x6a0] sm:$0xff]
    %v416 = vld [vmem:[#allocation5 + $0x6a8] sm:$0xff]
    %v417 = vld [vmem:[#allocation5 + $0x6b0] sm:$0xff]
    %v418 = vld [vmem:[#allocation5 + $0x6b8] sm:$0xff]
    %v419 = vld [vmem:[#allocation5 + $0x6c0] sm:$0xff]
    %v420 = vld [vmem:[#allocation5 + $0x6c8] sm:$0xff]
    %v421 = vld [vmem:[#allocation5 + $0x6d0] sm:$0xff]
    %v422 = vld [vmem:[#allocation5 + $0x6d8] sm:$0xff]
    %v423 = vld [vmem:[#allocation5 + $0x6e0] sm:$0xff]
    %v424 = vld [vmem:[#allocation5 + $0x6e8] sm:$0xff]
    %v425 = vld [vmem:[#allocation5 + $0x6f0] sm:$0xff]
    %v426 = vld [vmem:[#allocation5 + $0x6f8] sm:$0xff]
    %v427 = vld [vmem:[#allocation5 + $0x700] sm:$0xff]
    %v428 = vld [vmem:[#allocation5 + $0x708] sm:$0xff]
    %v429 = vld [vmem:[#allocation5 + $0x710] sm:$0xff]
    %v430 = vld [vmem:[#allocation5 + $0x718] sm:$0xff]
    %v431 = vld [vmem:[#allocation5 + $0x720] sm:$0xff]
    %v432 = vld [vmem:[#allocation5 + $0x728] sm:$0xff]
    %v433 = vld [vmem:[#allocation5 + $0x730] sm:$0xff]
    %v434 = vld [vmem:[#allocation5 + $0x738] sm:$0xff]
    %v435 = vld [vmem:[#allocation5 + $0x740] sm:$0xff]
    %v436 = vld [vmem:[#allocation5 + $0x748] sm:$0xff]
    %v437 = vld [vmem:[#allocation5 + $0x750] sm:$0xff]
    %v438 = vld [vmem:[#allocation5 + $0x758] sm:$0xff]
    %v439 = vld [vmem:[#allocation5 + $0x760] sm:$0xff]
    %v440 = vld [vmem:[#allocation5 + $0x768] sm:$0xff]
    %v441 = vld [vmem:[#allocation5 + $0x770] sm:$0xff]
    %v442 = vld [vmem:[#allocation5 + $0x778] sm:$0xff]
    %v443 = vld [vmem:[#allocation5 + $0x780] sm:$0xff]
    %v444 = vld [vmem:[#allocation5 + $0x788] sm:$0xff]
    %v445 = vld [vmem:[#allocation5 + $0x790] sm:$0xff]
    %v446 = vld [vmem:[#allocation5 + $0x798] sm:$0xff]
    %v447 = vld [vmem:[#allocation5 + $0x7a0] sm:$0xff]
    %v448 = vld [vmem:[#allocation5 + $0x7a8] sm:$0xff]
    %v449 = vld [vmem:[#allocation5 + $0x7b0] sm:$0xff]
    %v450 = vld [vmem:[#allocation5 + $0x7b8] sm:$0xff]
    %v451 = vld [vmem:[#allocation5 + $0x7c0] sm:$0xff]
    %v452 = vld [vmem:[#allocation5 + $0x7c8] sm:$0xff]
    %v453 = vld [vmem:[#allocation5 + $0x7d0] sm:$0xff]
    %v454 = vld [vmem:[#allocation5 + $0x7d8] sm:$0xff]
    %v455 = vld [vmem:[#allocation5 + $0x7e0] sm:$0xff]
    %v456 = vld [vmem:[#allocation5 + $0x7e8] sm:$0xff]
    %v457 = vld [vmem:[#allocation5 + $0x7f0] sm:$0xff]
    %v458 = vld [vmem:[#allocation5 + $0x7f8] sm:$0xff]
    %v459 = vld [vmem:[#allocation5 + $0x800] sm:$0xff]
    %v460 = vld [vmem:[#allocation5 + $0x808] sm:$0xff]
    %v461 = vld [vmem:[#allocation5 + $0x810] sm:$0xff]
    %v462 = vld [vmem:[#allocation5 + $0x818] sm:$0xff]
    %v463 = vld [vmem:[#allocation5 + $0x820] sm:$0xff]
    %v464 = vld [vmem:[#allocation5 + $0x828] sm:$0xff]
    %v465 = vld [vmem:[#allocation5 + $0x830] sm:$0xff]
    %v466 = vld [vmem:[#allocation5 + $0x838] sm:$0xff]
    %v467 = vld [vmem:[#allocation5 + $0x840] sm:$0xff]
    %v468 = vld [vmem:[#allocation5 + $0x848] sm:$0xff]
    %v469 = vld [vmem:[#allocation5 + $0x850] sm:$0xff]
    %v470 = vld [vmem:[#allocation5 + $0x858] sm:$0xff]
    %v471 = vld [vmem:[#allocation5 + $0x860] sm:$0xff]
    %v472 = vld [vmem:[#allocation5 + $0x868] sm:$0xff]
    %v473 = vld [vmem:[#allocation5 + $0x870] sm:$0xff]
    %v474 = vld [vmem:[#allocation5 + $0x878] sm:$0xff]
    %v475 = vld [vmem:[#allocation5 + $0x880] sm:$0xff]
    %v476 = vld [vmem:[#allocation5 + $0x888] sm:$0xff]
    %v477 = vld [vmem:[#allocation5 + $0x890] sm:$0xff]
    %v478 = vld [vmem:[#allocation5 + $0x898] sm:$0xff]
    %v479 = vld [vmem:[#allocation5 + $0x8a0] sm:$0xff]
    %v480 = vld [vmem:[#allocation5 + $0x8a8] sm:$0xff]
    %v481 = vld [vmem:[#allocation5 + $0x8b0] sm:$0xff]
    %v482 = vld [vmem:[#allocation5 + $0x8b8] sm:$0xff]
    %v483 = vld [vmem:[#allocation5 + $0x8c0] sm:$0xff]
    %v484 = vld [vmem:[#allocation5 + $0x8c8] sm:$0xff]
    %v485 = vld [vmem:[#allocation5 + $0x8d0] sm:$0xff]
    %v486 = vld [vmem:[#allocation5 + $0x8d8] sm:$0xff]
    %v487 = vld [vmem:[#allocation5 + $0x8e0] sm:$0xff]
    %v488 = vld [vmem:[#allocation5 + $0x8e8] sm:$0xff]
    %v489 = vld [vmem:[#allocation5 + $0x8f0] sm:$0xff]
    %v490 = vld [vmem:[#allocation5 + $0x8f8] sm:$0xff]
    %v491 = vld [vmem:[#allocation5 + $0x900] sm:$0xff]
    %v492 = vld [vmem:[#allocation5 + $0x908] sm:$0xff]
    %v493 = vld [vmem:[#allocation5 + $0x910] sm:$0xff]
    %v494 = vld [vmem:[#allocation5 + $0x918] sm:$0xff]
    %v495 = vld [vmem:[#allocation5 + $0x920] sm:$0xff]
    %v496 = vld [vmem:[#allocation5 + $0x928] sm:$0xff]
    %v497 = vld [vmem:[#allocation5 + $0x930] sm:$0xff]
    %v498 = vld [vmem:[#allocation5 + $0x938] sm:$0xff]
    %v499 = vld [vmem:[#allocation5 + $0x940] sm:$0xff]
    %v500 = vld [vmem:[#allocation5 + $0x948] sm:$0xff]
    %v501 = vld [vmem:[#allocation5 + $0x950] sm:$0xff]
    %v502 = vld [vmem:[#allocation5 + $0x958] sm:$0xff]
    %v503 = vld [vmem:[#allocation5 + $0x960] sm:$0xff]
    %v504 = vld [vmem:[#allocation5 + $0x968] sm:$0xff]
    %v505 = vld [vmem:[#allocation5 + $0x970] sm:$0xff]
    %v506 = vld [vmem:[#allocation5 + $0x978] sm:$0xff]
    %v507 = vld [vmem:[#allocation5 + $0x980] sm:$0xff]
    %v508 = vld [vmem:[#allocation5 + $0x988] sm:$0xff]
    %v509 = vld [vmem:[#allocation5 + $0x990] sm:$0xff]
    %v510 = vld [vmem:[#allocation5 + $0x998] sm:$0xff]
    %v511 = vld [vmem:[#allocation5 + $0x9a0] sm:$0xff]
    %v512 = vld [vmem:[#allocation5 + $0x9a8] sm:$0xff]
    %v513 = vld [vmem:[#allocation5 + $0x9b0] sm:$0xff]
    %v514 = vld [vmem:[#allocation5 + $0x9b8] sm:$0xff]
    %v515 = vld [vmem:[#allocation5 + $0x9c0] sm:$0xff]
    %v516 = vld [vmem:[#allocation5 + $0x9c8] sm:$0xff]
    %v517 = vld [vmem:[#allocation5 + $0x9d0] sm:$0xff]
    %v518 = vld [vmem:[#allocation5 + $0x9d8] sm:$0xff]
    %v519 = vld [vmem:[#allocation5 + $0x9e0] sm:$0xff]
    %v520 = vld [vmem:[#allocation5 + $0x9e8] sm:$0xff]
    %v521 = vld [vmem:[#allocation5 + $0x9f0] sm:$0xff]
    %v522 = vld [vmem:[#allocation5 + $0x9f8] sm:$0xff]
    %v523 = vld [vmem:[#allocation5 + $0xa00] sm:$0xff]
    %v524 = vld [vmem:[#allocation5 + $0xa08] sm:$0xff]
    %v525 = vld [vmem:[#allocation5 + $0xa10] sm:$0xff]
    %v526 = vld [vmem:[#allocation5 + $0xa18] sm:$0xff]
    %v527 = vld [vmem:[#allocation5 + $0xa20] sm:$0xff]
    %v528 = vld [vmem:[#allocation5 + $0xa28] sm:$0xff]
    %v529 = vld [vmem:[#allocation5 + $0xa30] sm:$0xff]
    %v530 = vld [vmem:[#allocation5 + $0xa38] sm:$0xff]
    %v531 = vld [vmem:[#allocation5 + $0xa40] sm:$0xff]
    %v532 = vld [vmem:[#allocation5 + $0xa48] sm:$0xff]
    %v533 = vld [vmem:[#allocation5 + $0xa50] sm:$0xff]
    %v534 = vld [vmem:[#allocation5 + $0xa58] sm:$0xff]
    %v535 = vld [vmem:[#allocation5 + $0xa60] sm:$0xff]
    %v536 = vld [vmem:[#allocation5 + $0xa68] sm:$0xff]
    %v537 = vld [vmem:[#allocation5 + $0xa70] sm:$0xff]
    %v538 = vld [vmem:[#allocation5 + $0xa78] sm:$0xff]
    %v539 = vld [vmem:[#allocation5 + $0xa80] sm:$0xff]
    %v540 = vld [vmem:[#allocation5 + $0xa88] sm:$0xff]
    %v541 = vld [vmem:[#allocation5 + $0xa90] sm:$0xff]
    %v542 = vld [vmem:[#allocation5 + $0xa98] sm:$0xff]
    %v543 = vld [vmem:[#allocation5 + $0xaa0] sm:$0xff]
    %v544 = vld [vmem:[#allocation5 + $0xaa8] sm:$0xff]
    %v545 = vld [vmem:[#allocation5 + $0xab0] sm:$0xff]
    %v546 = vld [vmem:[#allocation5 + $0xab8] sm:$0xff]
    %v547 = vld [vmem:[#allocation5 + $0xac0] sm:$0xff]
    %v548 = vld [vmem:[#allocation5 + $0xac8] sm:$0xff]
    %v549 = vld [vmem:[#allocation5 + $0xad0] sm:$0xff]
    %v550 = vld [vmem:[#allocation5 + $0xad8] sm:$0xff]
    %v551 = vld [vmem:[#allocation5 + $0xae0] sm:$0xff]
    %v552 = vld [vmem:[#allocation5 + $0xae8] sm:$0xff]
    %v553 = vld [vmem:[#allocation5 + $0xaf0] sm:$0xff]
    %v554 = vld [vmem:[#allocation5 + $0xaf8] sm:$0xff]
    %v555 = vld [vmem:[#allocation5 + $0xb00] sm:$0xff]
    %v556 = vld [vmem:[#allocation5 + $0xb08] sm:$0xff]
    %v557 = vld [vmem:[#allocation5 + $0xb10] sm:$0xff]
    %v558 = vld [vmem:[#allocation5 + $0xb18] sm:$0xff]
    %v559 = vld [vmem:[#allocation5 + $0xb20] sm:$0xff]
    %v560 = vld [vmem:[#allocation5 + $0xb28] sm:$0xff]
    %v561 = vld [vmem:[#allocation5 + $0xb30] sm:$0xff]
    %v562 = vld [vmem:[#allocation5 + $0xb38] sm:$0xff]
    %v563 = vld [vmem:[#allocation5 + $0xb40] sm:$0xff]
    %v564 = vld [vmem:[#allocation5 + $0xb48] sm:$0xff]
    %v565 = vld [vmem:[#allocation5 + $0xb50] sm:$0xff]
    %v566 = vld [vmem:[#allocation5 + $0xb58] sm:$0xff]
    %v567 = vld [vmem:[#allocation5 + $0xb60] sm:$0xff]
    %v568 = vld [vmem:[#allocation5 + $0xb68] sm:$0xff]
    %v569 = vld [vmem:[#allocation5 + $0xb70] sm:$0xff]
    %v570 = vld [vmem:[#allocation5 + $0xb78] sm:$0xff]
    %v571 = vld [vmem:[#allocation5 + $0xb80] sm:$0xff]
    %v572 = vld [vmem:[#allocation5 + $0xb88] sm:$0xff]
    %v573 = vld [vmem:[#allocation5 + $0xb90] sm:$0xff]
    %v574 = vld [vmem:[#allocation5 + $0xb98] sm:$0xff]
    %v575 = vld [vmem:[#allocation5 + $0xba0] sm:$0xff]
    %v576 = vld [vmem:[#allocation5 + $0xba8] sm:$0xff]
    %v577 = vld [vmem:[#allocation5 + $0xbb0] sm:$0xff]
    %v578 = vld [vmem:[#allocation5 + $0xbb8] sm:$0xff]
    %v579 = vld [vmem:[#allocation5 + $0xbc0] sm:$0xff]
    %v580 = vld [vmem:[#allocation5 + $0xbc8] sm:$0xff]
    %v581 = vld [vmem:[#allocation5 + $0xbd0] sm:$0xff]
    %v582 = vld [vmem:[#allocation5 + $0xbd8] sm:$0xff]
    %v583 = vld [vmem:[#allocation5 + $0xbe0] sm:$0xff]
    %v584 = vld [vmem:[#allocation5 + $0xbe8] sm:$0xff]
    %v585 = vld [vmem:[#allocation5 + $0xbf0] sm:$0xff]
    %v586 = vld [vmem:[#allocation5 + $0xbf8] sm:$0xff]
    %v587 = vld [vmem:[#allocation5 + $0xc00] sm:$0xff]
    %v588 = vld [vmem:[#allocation5 + $0xc08] sm:$0xff]
    %v589 = vld [vmem:[#allocation5 + $0xc10] sm:$0xff]
    %v590 = vld [vmem:[#allocation5 + $0xc18] sm:$0xff]
    %v591 = vld [vmem:[#allocation5 + $0xc20] sm:$0xff]
    %v592 = vld [vmem:[#allocation5 + $0xc28] sm:$0xff]
    %v593 = vld [vmem:[#allocation5 + $0xc30] sm:$0xff]
    %v594 = vld [vmem:[#allocation5 + $0xc38] sm:$0xff]
    %v595 = vld [vmem:[#allocation5 + $0xc40] sm:$0xff]
    %v596 = vld [vmem:[#allocation5 + $0xc48] sm:$0xff]
    %v597 = vld [vmem:[#allocation5 + $0xc50] sm:$0xff]
    %v598 = vld [vmem:[#allocation5 + $0xc58] sm:$0xff]
    %v599 = vld [vmem:[#allocation5 + $0xc60] sm:$0xff]
    %v600 = vld [vmem:[#allocation5 + $0xc68] sm:$0xff]
    %v601 = vld [vmem:[#allocation5 + $0xc70] sm:$0xff]
    %v602 = vld [vmem:[#allocation5 + $0xc78] sm:$0xff]
    %v603 = vld [vmem:[#allocation5 + $0xc80] sm:$0xff]
    %v604 = vld [vmem:[#allocation5 + $0xc88] sm:$0xff]
    %v605 = vld [vmem:[#allocation5 + $0xc90] sm:$0xff]
    %v606 = vld [vmem:[#allocation5 + $0xc98] sm:$0xff]
    %v607 = vld [vmem:[#allocation5 + $0xca0] sm:$0xff]
    %v608 = vld [vmem:[#allocation5 + $0xca8] sm:$0xff]
    %v609 = vld [vmem:[#allocation5 + $0xcb0] sm:$0xff]
    %v610 = vld [vmem:[#allocation5 + $0xcb8] sm:$0xff]
    %v611 = vld [vmem:[#allocation5 + $0xcc0] sm:$0xff]
    %v612 = vld [vmem:[#allocation5 + $0xcc8] sm:$0xff]
    %v613 = vld [vmem:[#allocation5 + $0xcd0] sm:$0xff]
    %v614 = vld [vmem:[#allocation5 + $0xcd8] sm:$0xff]
    %v615 = vld [vmem:[#allocation5 + $0xce0] sm:$0xff]
    %v616 = vld [vmem:[#allocation5 + $0xce8] sm:$0xff]
    %v617 = vld [vmem:[#allocation5 + $0xcf0] sm:$0xff]
    %v618 = vld [vmem:[#allocation5 + $0xcf8] sm:$0xff]
    %v619 = vld [vmem:[#allocation5 + $0xd00] sm:$0xff]
    %v620 = vld [vmem:[#allocation5 + $0xd08] sm:$0xff]
    %v621 = vld [vmem:[#allocation5 + $0xd10] sm:$0xff]
    %v622 = vld [vmem:[#allocation5 + $0xd18] sm:$0xff]
    %v623 = vld [vmem:[#allocation5 + $0xd20] sm:$0xff]
    %v624 = vld [vmem:[#allocation5 + $0xd28] sm:$0xff]
    %v625 = vld [vmem:[#allocation5 + $0xd30] sm:$0xff]
    %v626 = vld [vmem:[#allocation5 + $0xd38] sm:$0xff]
    %v627 = vld [vmem:[#allocation5 + $0xd40] sm:$0xff]
    %v628 = vld [vmem:[#allocation5 + $0xd48] sm:$0xff]
    %v629 = vld [vmem:[#allocation5 + $0xd50] sm:$0xff]
    %v630 = vld [vmem:[#allocation5 + $0xd58] sm:$0xff]
    %v631 = vld [vmem:[#allocation5 + $0xd60] sm:$0xff]
    %v632 = vld [vmem:[#allocation5 + $0xd68] sm:$0xff]
    %v633 = vld [vmem:[#allocation5 + $0xd70] sm:$0xff]
    %v634 = vld [vmem:[#allocation5 + $0xd78] sm:$0xff]
    %v635 = vld [vmem:[#allocation5 + $0xd80] sm:$0xff]
    %v636 = vld [vmem:[#allocation5 + $0xd88] sm:$0xff]
    %v637 = vld [vmem:[#allocation5 + $0xd90] sm:$0xff]
    %v638 = vld [vmem:[#allocation5 + $0xd98] sm:$0xff]
    %v639 = vld [vmem:[#allocation5 + $0xda0] sm:$0xff]
    %v640 = vld [vmem:[#allocation5 + $0xda8] sm:$0xff]
    %v641 = vld [vmem:[#allocation5 + $0xdb0] sm:$0xff]
    %v642 = vld [vmem:[#allocation5 + $0xdb8] sm:$0xff]
    %v643 = vld [vmem:[#allocation5 + $0xdc0] sm:$0xff]
    %v644 = vld [vmem:[#allocation5 + $0xdc8] sm:$0xff]
    %v645 = vld [vmem:[#allocation5 + $0xdd0] sm:$0xff]
    %v646 = vld [vmem:[#allocation5 + $0xdd8] sm:$0xff]
    %v647 = vld [vmem:[#allocation5 + $0xde0] sm:$0xff]
    %v648 = vld [vmem:[#allocation5 + $0xde8] sm:$0xff]
    %v649 = vld [vmem:[#allocation5 + $0xdf0] sm:$0xff]
    %v650 = vld [vmem:[#allocation5 + $0xdf8] sm:$0xff]
    %v651 = vld [vmem:[#allocation5 + $0xe00] sm:$0xff]
    %v652 = vld [vmem:[#allocation5 + $0xe08] sm:$0xff]
    %v653 = vld [vmem:[#allocation5 + $0xe10] sm:$0xff]
    %v654 = vld [vmem:[#allocation5 + $0xe18] sm:$0xff]
    %v655 = vld [vmem:[#allocation5 + $0xe20] sm:$0xff]
    %v656 = vld [vmem:[#allocation5 + $0xe28] sm:$0xff]
    %v657 = vld [vmem:[#allocation5 + $0xe30] sm:$0xff]
    %v658 = vld [vmem:[#allocation5 + $0xe38] sm:$0xff]
    %v659 = vld [vmem:[#allocation5 + $0xe40] sm:$0xff]
    %v660 = vld [vmem:[#allocation5 + $0xe48] sm:$0xff]
    %v661 = vld [vmem:[#allocation5 + $0xe50] sm:$0xff]
    %v662 = vld [vmem:[#allocation5 + $0xe58] sm:$0xff]
    %v663 = vld [vmem:[#allocation5 + $0xe60] sm:$0xff]
    %v664 = vld [vmem:[#allocation5 + $0xe68] sm:$0xff]
    %v665 = vld [vmem:[#allocation5 + $0xe70] sm:$0xff]
    %v666 = vld [vmem:[#allocation5 + $0xe78] sm:$0xff]
    %v667 = vld [vmem:[#allocation5 + $0xe80] sm:$0xff]
    %v668 = vld [vmem:[#allocation5 + $0xe88] sm:$0xff]
    %v669 = vld [vmem:[#allocation5 + $0xe90] sm:$0xff]
    %v670 = vld [vmem:[#allocation5 + $0xe98] sm:$0xff]
    %v671 = vld [vmem:[#allocation5 + $0xea0] sm:$0xff]
    %v672 = vld [vmem:[#allocation5 + $0xea8] sm:$0xff]
    %v673 = vld [vmem:[#allocation5 + $0xeb0] sm:$0xff]
    %v674 = vld [vmem:[#allocation5 + $0xeb8] sm:$0xff]
    %v675 = vld [vmem:[#allocation5 + $0xec0] sm:$0xff]
    %v676 = vld [vmem:[#allocation5 + $0xec8] sm:$0xff]
    %v677 = vld [vmem:[#allocation5 + $0xed0] sm:$0xff]
    %v678 = vld [vmem:[#allocation5 + $0xed8] sm:$0xff]
    %v679 = vld [vmem:[#allocation5 + $0xee0] sm:$0xff]
    %v680 = vld [vmem:[#allocation5 + $0xee8] sm:$0xff]
    %v681 = vld [vmem:[#allocation5 + $0xef0] sm:$0xff]
    %v682 = vld [vmem:[#allocation5 + $0xef8] sm:$0xff]
    %v683 = vld [vmem:[#allocation5 + $0xf00] sm:$0xff]
    %v684 = vld [vmem:[#allocation5 + $0xf08] sm:$0xff]
    %v685 = vld [vmem:[#allocation5 + $0xf10] sm:$0xff]
    %v686 = vld [vmem:[#allocation5 + $0xf18] sm:$0xff]
    %v687 = vld [vmem:[#allocation5 + $0xf20] sm:$0xff]
    %v688 = vld [vmem:[#allocation5 + $0xf28] sm:$0xff]
    %v689 = vld [vmem:[#allocation5 + $0xf30] sm:$0xff]
    %v690 = vld [vmem:[#allocation5 + $0xf38] sm:$0xff]
    %v691 = vld [vmem:[#allocation5 + $0xf40] sm:$0xff]
    %v692 = vld [vmem:[#allocation5 + $0xf48] sm:$0xff]
    %v693 = vld [vmem:[#allocation5 + $0xf50] sm:$0xff]
    %v694 = vld [vmem:[#allocation5 + $0xf58] sm:$0xff]
    %v695 = vld [vmem:[#allocation5 + $0xf60] sm:$0xff]
    %v696 = vld [vmem:[#allocation5 + $0xf68] sm:$0xff]
    %v697 = vld [vmem:[#allocation5 + $0xf70] sm:$0xff]
    %v698 = vld [vmem:[#allocation5 + $0xf78] sm:$0xff]
    %v699 = vld [vmem:[#allocation5 + $0xf80] sm:$0xff]
    %v700 = vld [vmem:[#allocation5 + $0xf88] sm:$0xff]
    %v701 = vld [vmem:[#allocation5 + $0xf90] sm:$0xff]
    %v702 = vld [vmem:[#allocation5 + $0xf98] sm:$0xff]
    %v703 = vld [vmem:[#allocation5 + $0xfa0] sm:$0xff]
    %v704 = vld [vmem:[#allocation5 + $0xfa8] sm:$0xff]
    %v705 = vld [vmem:[#allocation5 + $0xfb0] sm:$0xff]
    %v706 = vld [vmem:[#allocation5 + $0xfb8] sm:$0xff]
    %v707 = vld [vmem:[#allocation5 + $0xfc0] sm:$0xff]
    %v708 = vld [vmem:[#allocation5 + $0xfc8] sm:$0xff]
    %v709 = vld [vmem:[#allocation5 + $0xfd0] sm:$0xff]
    %v710 = vld [vmem:[#allocation5 + $0xfd8] sm:$0xff]
    %v711 = vld [vmem:[#allocation5 + $0xfe0] sm:$0xff]
    %v712 = vld [vmem:[#allocation5 + $0xfe8] sm:$0xff]
    %v713 = vld [vmem:[#allocation5 + $0xff0] sm:$0xff]
    %v714 = vld [vmem:[#allocation5 + $0xff8] sm:$0xff]
    %v715 = vld [vmem:[#allocation5 + $0x1000] sm:$0xff]
    %v716 = vld [vmem:[#allocation5 + $0x1008] sm:$0xff]
    %v717 = vld [vmem:[#allocation5 + $0x1010] sm:$0xff]
    %v718 = vld [vmem:[#allocation5 + $0x1018] sm:$0xff]
    %v719 = vld [vmem:[#allocation5 + $0x1020] sm:$0xff]
    %v720 = vld [vmem:[#allocation5 + $0x1028] sm:$0xff]
    %v721 = vld [vmem:[#allocation5 + $0x1030] sm:$0xff]
    %v722 = vld [vmem:[#allocation5 + $0x1038] sm:$0xff]
    %v723 = vld [vmem:[#allocation5 + $0x1040] sm:$0xff]
    %v724 = vld [vmem:[#allocation5 + $0x1048] sm:$0xff]
    %v725 = vld [vmem:[#allocation5 + $0x1050] sm:$0xff]
    %v726 = vld [vmem:[#allocation5 + $0x1058] sm:$0xff]
    %v727 = vld [vmem:[#allocation5 + $0x1060] sm:$0xff]
    %v728 = vld [vmem:[#allocation5 + $0x1068] sm:$0xff]
    %v729 = vld [vmem:[#allocation5 + $0x1070] sm:$0xff]
    %v730 = vld [vmem:[#allocation5 + $0x1078] sm:$0xff]
    %v731 = vld [vmem:[#allocation5 + $0x1080] sm:$0xff]
    %v732 = vld [vmem:[#allocation5 + $0x1088] sm:$0xff]
    %v733 = vld [vmem:[#allocation5 + $0x1090] sm:$0xff]
    %v734 = vld [vmem:[#allocation5 + $0x1098] sm:$0xff]
    %v735 = vld [vmem:[#allocation5 + $0x10a0] sm:$0xff]
    %v736 = vld [vmem:[#allocation5 + $0x10a8] sm:$0xff]
    %v737 = vld [vmem:[#allocation5 + $0x10b0] sm:$0xff]
    %v738 = vld [vmem:[#allocation5 + $0x10b8] sm:$0xff]
    %v739 = vld [vmem:[#allocation5 + $0x10c0] sm:$0xff]
    %v740 = vld [vmem:[#allocation5 + $0x10c8] sm:$0xff]
    %v741 = vld [vmem:[#allocation5 + $0x10d0] sm:$0xff]
    %v742 = vld [vmem:[#allocation5 + $0x10d8] sm:$0xff]
    %v743 = vld [vmem:[#allocation5 + $0x10e0] sm:$0xff]
    %v744 = vld [vmem:[#allocation5 + $0x10e8] sm:$0xff]
    %v745 = vld [vmem:[#allocation5 + $0x10f0] sm:$0xff]
    %v746 = vld [vmem:[#allocation5 + $0x10f8] sm:$0xff]
    %v747 = vld [vmem:[#allocation5 + $0x1100] sm:$0xff]
    %v748 = vld [vmem:[#allocation5 + $0x1108] sm:$0xff]
    %v749 = vld [vmem:[#allocation5 + $0x1110] sm:$0xff]
    %v750 = vld [vmem:[#allocation5 + $0x1118] sm:$0xff]
    %v751 = vld [vmem:[#allocation5 + $0x1120] sm:$0xff]
    %v752 = vld [vmem:[#allocation5 + $0x1128] sm:$0xff]
    %v753 = vld [vmem:[#allocation5 + $0x1130] sm:$0xff]
    %v754 = vld [vmem:[#allocation5 + $0x1138] sm:$0xff]
    %v755 = vld [vmem:[#allocation5 + $0x1140] sm:$0xff]
    %v756 = vld [vmem:[#allocation5 + $0x1148] sm:$0xff]
    %v757 = vld [vmem:[#allocation5 + $0x1150] sm:$0xff]
    %v758 = vld [vmem:[#allocation5 + $0x1158] sm:$0xff]
    %v759 = vld [vmem:[#allocation5 + $0x1160] sm:$0xff]
    %v760 = vld [vmem:[#allocation5 + $0x1168] sm:$0xff]
    %v761 = vld [vmem:[#allocation5 + $0x1170] sm:$0xff]
    %v762 = vld [vmem:[#allocation5 + $0x1178] sm:$0xff]
    %v763 = vld [vmem:[#allocation5 + $0x1180] sm:$0xff]
    %v764 = vld [vmem:[#allocation5 + $0x1188] sm:$0xff]
    %v765 = vld [vmem:[#allocation5 + $0x1190] sm:$0xff]
    %v766 = vld [vmem:[#allocation5 + $0x1198] sm:$0xff]
    %v767 = vld [vmem:[#allocation5 + $0x11a0] sm:$0xff]
    %v768 = vld [vmem:[#allocation5 + $0x11a8] sm:$0xff]
    %v769 = vld [vmem:[#allocation5 + $0x11b0] sm:$0xff]
    %v770 = vld [vmem:[#allocation5 + $0x11b8] sm:$0xff]
    %v771 = vld [vmem:[#allocation5 + $0x11c0] sm:$0xff]
    %v772 = vld [vmem:[#allocation5 + $0x11c8] sm:$0xff]
    %v773 = vld [vmem:[#allocation5 + $0x11d0] sm:$0xff]
    %v774 = vld [vmem:[#allocation5 + $0x11d8] sm:$0xff]
    %v775 = vld [vmem:[#allocation5 + $0x11e0] sm:$0xff]
    %v776 = vld [vmem:[#allocation5 + $0x11e8] sm:$0xff]
    %v777 = vld [vmem:[#allocation5 + $0x11f0] sm:$0xff]
    %v778 = vld [vmem:[#allocation5 + $0x11f8] sm:$0xff]
    %v779 = vld [vmem:[#allocation5 + $0x1200] sm:$0xff]
    %v780 = vld [vmem:[#allocation5 + $0x1208] sm:$0xff]
    %v781 = vld [vmem:[#allocation5 + $0x1210] sm:$0xff]
    %v782 = vld [vmem:[#allocation5 + $0x1218] sm:$0xff]
    %v783 = vld [vmem:[#allocation5 + $0x1220] sm:$0xff]
    %v784 = vld [vmem:[#allocation5 + $0x1228] sm:$0xff]
    %v785 = vld [vmem:[#allocation5 + $0x1230] sm:$0xff]
    %v786 = vld [vmem:[#allocation5 + $0x1238] sm:$0xff]
    %v787 = vld [vmem:[#allocation5 + $0x1240] sm:$0xff]
    %v788 = vld [vmem:[#allocation5 + $0x1248] sm:$0xff]
    %v789 = vld [vmem:[#allocation5 + $0x1250] sm:$0xff]
    %v790 = vld [vmem:[#allocation5 + $0x1258] sm:$0xff]
    %v791 = vld [vmem:[#allocation5 + $0x1260] sm:$0xff]
    %v792 = vld [vmem:[#allocation5 + $0x1268] sm:$0xff]
    %v793 = vld [vmem:[#allocation5 + $0x1270] sm:$0xff]
    %v794 = vld [vmem:[#allocation5 + $0x1278] sm:$0xff]
    %v795 = vld [vmem:[#allocation5 + $0x1280] sm:$0xff]
    %v796 = vld [vmem:[#allocation5 + $0x1288] sm:$0xff]
    %v797 = vld [vmem:[#allocation5 + $0x1290] sm:$0xff]
    %v798 = vld [vmem:[#allocation5 + $0x1298] sm:$0xff]
    %v799 = vld [vmem:[#allocation5 + $0x12a0] sm:$0xff]
    %v800 = vld [vmem:[#allocation5 + $0x12a8] sm:$0xff]
    %v801 = vld [vmem:[#allocation5 + $0x12b0] sm:$0xff]
    %v802 = vld [vmem:[#allocation5 + $0x12b8] sm:$0xff]
    %v803 = vld [vmem:[#allocation5 + $0x12c0] sm:$0xff]
    %v804 = vld [vmem:[#allocation5 + $0x12c8] sm:$0xff]
    %v805 = vld [vmem:[#allocation5 + $0x12d0] sm:$0xff]
    %v806 = vld [vmem:[#allocation5 + $0x12d8] sm:$0xff]
    %v807 = vld [vmem:[#allocation5 + $0x12e0] sm:$0xff]
    %v808 = vld [vmem:[#allocation5 + $0x12e8] sm:$0xff]
    %v809 = vld [vmem:[#allocation5 + $0x12f0] sm:$0xff]
    %v810 = vld [vmem:[#allocation5 + $0x12f8] sm:$0xff]
    %v811 = vld [vmem:[#allocation5 + $0x1300] sm:$0xff]
    %v812 = vld [vmem:[#allocation5 + $0x1308] sm:$0xff]
    %v813 = vld [vmem:[#allocation5 + $0x1310] sm:$0xff]
    %v814 = vld [vmem:[#allocation5 + $0x1318] sm:$0xff]
    %v815 = vld [vmem:[#allocation5 + $0x1320] sm:$0xff]
    %v816 = vld [vmem:[#allocation5 + $0x1328] sm:$0xff]
    %v817 = vld [vmem:[#allocation5 + $0x1330] sm:$0xff]
    %v818 = vld [vmem:[#allocation5 + $0x1338] sm:$0xff]
    %v819 = vld [vmem:[#allocation5 + $0x1340] sm:$0xff]
    %v820 = vld [vmem:[#allocation5 + $0x1348] sm:$0xff]
    %v821 = vld [vmem:[#allocation5 + $0x1350] sm:$0xff]
    %v822 = vld [vmem:[#allocation5 + $0x1358] sm:$0xff]
    %v823 = vld [vmem:[#allocation5 + $0x1360] sm:$0xff]
    %v824 = vld [vmem:[#allocation5 + $0x1368] sm:$0xff]
    %v825 = vld [vmem:[#allocation5 + $0x1370] sm:$0xff]
    %v826 = vld [vmem:[#allocation5 + $0x1378] sm:$0xff]
    %v827 = vld [vmem:[#allocation5 + $0x1380] sm:$0xff]
    %v828 = vld [vmem:[#allocation5 + $0x1388] sm:$0xff]
    %v829 = vld [vmem:[#allocation5 + $0x1390] sm:$0xff]
    %v830 = vld [vmem:[#allocation5 + $0x1398] sm:$0xff]
    %v831 = vld [vmem:[#allocation5 + $0x13a0] sm:$0xff]
    %v832 = vld [vmem:[#allocation5 + $0x13a8] sm:$0xff]
    %v833 = vld [vmem:[#allocation5 + $0x13b0] sm:$0xff]
    %v834 = vld [vmem:[#allocation5 + $0x13b8] sm:$0xff]
    %v835 = vld [vmem:[#allocation5 + $0x13c0] sm:$0xff]
    %v836 = vld [vmem:[#allocation5 + $0x13c8] sm:$0xff]
    %v837 = vld [vmem:[#allocation5 + $0x13d0] sm:$0xff]
    %v838 = vld [vmem:[#allocation5 + $0x13d8] sm:$0xff]
    %v839 = vld [vmem:[#allocation5 + $0x13e0] sm:$0xff]
    %v840 = vld [vmem:[#allocation5 + $0x13e8] sm:$0xff]
    %v841 = vld [vmem:[#allocation5 + $0x13f0] sm:$0xff]
    %v842 = vld [vmem:[#allocation5 + $0x13f8] sm:$0xff]
    %v843 = vld [vmem:[#allocation5 + $0x1400] sm:$0xff]
    %v844 = vld [vmem:[#allocation5 + $0x1408] sm:$0xff]
    %v845 = vld [vmem:[#allocation5 + $0x1410] sm:$0xff]
    %v846 = vld [vmem:[#allocation5 + $0x1418] sm:$0xff]
    %v847 = vld [vmem:[#allocation5 + $0x1420] sm:$0xff]
    %v848 = vld [vmem:[#allocation5 + $0x1428] sm:$0xff]
    %v849 = vld [vmem:[#allocation5 + $0x1430] sm:$0xff]
    %v850 = vld [vmem:[#allocation5 + $0x1438] sm:$0xff]
    %v851 = vld [vmem:[#allocation5 + $0x1440] sm:$0xff]
    %v852 = vld [vmem:[#allocation5 + $0x1448] sm:$0xff]
    %v853 = vld [vmem:[#allocation5 + $0x1450] sm:$0xff]
    %v854 = vld [vmem:[#allocation5 + $0x1458] sm:$0xff]
    %v855 = vld [vmem:[#allocation5 + $0x1460] sm:$0xff]
    %v856 = vld [vmem:[#allocation5 + $0x1468] sm:$0xff]
    %v857 = vld [vmem:[#allocation5 + $0x1470] sm:$0xff]
    %v858 = vld [vmem:[#allocation5 + $0x1478] sm:$0xff]
    %v859 = vld [vmem:[#allocation5 + $0x1480] sm:$0xff]
    %v860 = vld [vmem:[#allocation5 + $0x1488] sm:$0xff]
    %v861 = vld [vmem:[#allocation5 + $0x1490] sm:$0xff]
    %v862 = vld [vmem:[#allocation5 + $0x1498] sm:$0xff]
    %v863 = vld [vmem:[#allocation5 + $0x14a0] sm:$0xff]
    %v864 = vld [vmem:[#allocation5 + $0x14a8] sm:$0xff]
    %v865 = vld [vmem:[#allocation5 + $0x14b0] sm:$0xff]
    %v866 = vld [vmem:[#allocation5 + $0x14b8] sm:$0xff]
    %v867 = vld [vmem:[#allocation5 + $0x14c0] sm:$0xff]
    %v868 = vld [vmem:[#allocation5 + $0x14c8] sm:$0xff]
    %v869 = vld [vmem:[#allocation5 + $0x14d0] sm:$0xff]
    %v870 = vld [vmem:[#allocation5 + $0x14d8] sm:$0xff]
    %v871 = vld [vmem:[#allocation5 + $0x14e0] sm:$0xff]
    %v872 = vld [vmem:[#allocation5 + $0x14e8] sm:$0xff]
    %v873 = vld [vmem:[#allocation5 + $0x14f0] sm:$0xff]
    %v874 = vld [vmem:[#allocation5 + $0x14f8] sm:$0xff]
    %v875 = vld [vmem:[#allocation5 + $0x1500] sm:$0xff]
    %v876 = vld [vmem:[#allocation5 + $0x1508] sm:$0xff]
    %v877 = vld [vmem:[#allocation5 + $0x1510] sm:$0xff]
    %v878 = vld [vmem:[#allocation5 + $0x1518] sm:$0xff]
    %v879 = vld [vmem:[#allocation5 + $0x1520] sm:$0xff]
    %v880 = vld [vmem:[#allocation5 + $0x1528] sm:$0xff]
    %v881 = vld [vmem:[#allocation5 + $0x1530] sm:$0xff]
    %v882 = vld [vmem:[#allocation5 + $0x1538] sm:$0xff]
    %v883 = vld [vmem:[#allocation5 + $0x1540] sm:$0xff]
    %v884 = vld [vmem:[#allocation5 + $0x1548] sm:$0xff]
    %v885 = vld [vmem:[#allocation5 + $0x1550] sm:$0xff]
    %v886 = vld [vmem:[#allocation5 + $0x1558] sm:$0xff]
    %v887 = vld [vmem:[#allocation5 + $0x1560] sm:$0xff]
    %v888 = vld [vmem:[#allocation5 + $0x1568] sm:$0xff]
    %v889 = vld [vmem:[#allocation5 + $0x1570] sm:$0xff]
    %v890 = vld [vmem:[#allocation5 + $0x1578] sm:$0xff]
    %v891 = vld [vmem:[#allocation5 + $0x1580] sm:$0xff]
    %v892 = vld [vmem:[#allocation5 + $0x1588] sm:$0xff]
    %v893 = vld [vmem:[#allocation5 + $0x1590] sm:$0xff]
    %v894 = vld [vmem:[#allocation5 + $0x1598] sm:$0xff]
    %v895 = vld [vmem:[#allocation5 + $0x15a0] sm:$0xff]
    %v896 = vld [vmem:[#allocation5 + $0x15a8] sm:$0xff]
    %v897 = vld [vmem:[#allocation5 + $0x15b0] sm:$0xff]
    %v898 = vld [vmem:[#allocation5 + $0x15b8] sm:$0xff]
    %v899 = vld [vmem:[#allocation5 + $0x15c0] sm:$0xff]
    %v900 = vld [vmem:[#allocation5 + $0x15c8] sm:$0xff]
    %v901 = vld [vmem:[#allocation5 + $0x15d0] sm:$0xff]
    %v902 = vld [vmem:[#allocation5 + $0x15d8] sm:$0xff]
    %v903 = vld [vmem:[#allocation5 + $0x15e0] sm:$0xff]
    %v904 = vld [vmem:[#allocation5 + $0x15e8] sm:$0xff]
    %v905 = vld [vmem:[#allocation5 + $0x15f0] sm:$0xff]
    %v906 = vld [vmem:[#allocation5 + $0x15f8] sm:$0xff]
    %v907 = vld [vmem:[#allocation5 + $0x1600] sm:$0xff]
    %v908 = vld [vmem:[#allocation5 + $0x1608] sm:$0xff]
    %v909 = vld [vmem:[#allocation5 + $0x1610] sm:$0xff]
    %v910 = vld [vmem:[#allocation5 + $0x1618] sm:$0xff]
    %v911 = vld [vmem:[#allocation5 + $0x1620] sm:$0xff]
    %v912 = vld [vmem:[#allocation5 + $0x1628] sm:$0xff]
    %v913 = vld [vmem:[#allocation5 + $0x1630] sm:$0xff]
    %v914 = vld [vmem:[#allocation5 + $0x1638] sm:$0xff]
    %v915 = vld [vmem:[#allocation5 + $0x1640] sm:$0xff]
    %v916 = vld [vmem:[#allocation5 + $0x1648] sm:$0xff]
    %v917 = vld [vmem:[#allocation5 + $0x1650] sm:$0xff]
    %v918 = vld [vmem:[#allocation5 + $0x1658] sm:$0xff]
    %v919 = vld [vmem:[#allocation5 + $0x1660] sm:$0xff]
    %v920 = vld [vmem:[#allocation5 + $0x1668] sm:$0xff]
    %v921 = vld [vmem:[#allocation5 + $0x1670] sm:$0xff]
    %v922 = vld [vmem:[#allocation5 + $0x1678] sm:$0xff]
    %v923 = vld [vmem:[#allocation5 + $0x1680] sm:$0xff]
    %v924 = vld [vmem:[#allocation5 + $0x1688] sm:$0xff]
    %v925 = vld [vmem:[#allocation5 + $0x1690] sm:$0xff]
    %v926 = vld [vmem:[#allocation5 + $0x1698] sm:$0xff]
    %v927 = vld [vmem:[#allocation5 + $0x16a0] sm:$0xff]
    %v928 = vld [vmem:[#allocation5 + $0x16a8] sm:$0xff]
    %v929 = vld [vmem:[#allocation5 + $0x16b0] sm:$0xff]
    %v930 = vld [vmem:[#allocation5 + $0x16b8] sm:$0xff]
    %v931 = vld [vmem:[#allocation5 + $0x16c0] sm:$0xff]
    %v932 = vld [vmem:[#allocation5 + $0x16c8] sm:$0xff]
    %v933 = vld [vmem:[#allocation5 + $0x16d0] sm:$0xff]
    %v934 = vld [vmem:[#allocation5 + $0x16d8] sm:$0xff]
    %v935 = vld [vmem:[#allocation5 + $0x16e0] sm:$0xff]
    %v936 = vld [vmem:[#allocation5 + $0x16e8] sm:$0xff]
    %v937 = vld [vmem:[#allocation5 + $0x16f0] sm:$0xff]
    %v938 = vld [vmem:[#allocation5 + $0x16f8] sm:$0xff]
    %v939 = vld [vmem:[#allocation5 + $0x1700] sm:$0xff]
    %v940 = vld [vmem:[#allocation5 + $0x1708] sm:$0xff]
    %v941 = vld [vmem:[#allocation5 + $0x1710] sm:$0xff]
    %v942 = vld [vmem:[#allocation5 + $0x1718] sm:$0xff]
    %v943 = vld [vmem:[#allocation5 + $0x1720] sm:$0xff]
    %v944 = vld [vmem:[#allocation5 + $0x1728] sm:$0xff]
    %v945 = vld [vmem:[#allocation5 + $0x1730] sm:$0xff]
    %v946 = vld [vmem:[#allocation5 + $0x1738] sm:$0xff]
    %v947 = vld [vmem:[#allocation5 + $0x1740] sm:$0xff]
    %v948 = vld [vmem:[#allocation5 + $0x1748] sm:$0xff]
    %v949 = vld [vmem:[#allocation5 + $0x1750] sm:$0xff]
    %v950 = vld [vmem:[#allocation5 + $0x1758] sm:$0xff]
    %v951 = vld [vmem:[#allocation5 + $0x1760] sm:$0xff]
    %v952 = vld [vmem:[#allocation5 + $0x1768] sm:$0xff]
    %v953 = vld [vmem:[#allocation5 + $0x1770] sm:$0xff]
    %v954 = vld [vmem:[#allocation5 + $0x1778] sm:$0xff]
    %v955 = vld [vmem:[#allocation5 + $0x1780] sm:$0xff]
    %v956 = vld [vmem:[#allocation5 + $0x1788] sm:$0xff]
    %v957 = vld [vmem:[#allocation5 + $0x1790] sm:$0xff]
    %v958 = vld [vmem:[#allocation5 + $0x1798] sm:$0xff]
    %v959 = vld [vmem:[#allocation5 + $0x17a0] sm:$0xff]
    %v960 = vld [vmem:[#allocation5 + $0x17a8] sm:$0xff]
    %v961 = vld [vmem:[#allocation5 + $0x17b0] sm:$0xff]
    %v962 = vld [vmem:[#allocation5 + $0x17b8] sm:$0xff]
    %v963 = vld [vmem:[#allocation5 + $0x17c0] sm:$0xff]
    %v964 = vld [vmem:[#allocation5 + $0x17c8] sm:$0xff]
    %v965 = vld [vmem:[#allocation5 + $0x17d0] sm:$0xff]
    %v966 = vld [vmem:[#allocation5 + $0x17d8] sm:$0xff]
    %v967 = vld [vmem:[#allocation5 + $0x17e0] sm:$0xff]
    %v968 = vld [vmem:[#allocation5 + $0x17e8] sm:$0xff]
    %v969 = vld [vmem:[#allocation5 + $0x17f0] sm:$0xff]
    %v970 = vld [vmem:[#allocation5 + $0x17f8] sm:$0xff]
    %v971 = vld [vmem:[#allocation5 + $0x1800] sm:$0xff]
    %v972 = vld [vmem:[#allocation5 + $0x1808] sm:$0xff]
    %v973 = vld [vmem:[#allocation5 + $0x1810] sm:$0xff]
    %v974 = vld [vmem:[#allocation5 + $0x1818] sm:$0xff]
    %v975 = vld [vmem:[#allocation5 + $0x1820] sm:$0xff]
    %v976 = vld [vmem:[#allocation5 + $0x1828] sm:$0xff]
    %v977 = vld [vmem:[#allocation5 + $0x1830] sm:$0xff]
    %v978 = vld [vmem:[#allocation5 + $0x1838] sm:$0xff]
    %v979 = vld [vmem:[#allocation5 + $0x1840] sm:$0xff]
    %v980 = vld [vmem:[#allocation5 + $0x1848] sm:$0xff]
    %v981 = vld [vmem:[#allocation5 + $0x1850] sm:$0xff]
    %v982 = vld [vmem:[#allocation5 + $0x1858] sm:$0xff]
    %v983 = vld [vmem:[#allocation5 + $0x1860] sm:$0xff]
    %v984 = vld [vmem:[#allocation5 + $0x1868] sm:$0xff]
    %v985 = vld [vmem:[#allocation5 + $0x1870] sm:$0xff]
    %v986 = vld [vmem:[#allocation5 + $0x1878] sm:$0xff]
    %v987 = vld [vmem:[#allocation5 + $0x1880] sm:$0xff]
    %v988 = vld [vmem:[#allocation5 + $0x1888] sm:$0xff]
    %v989 = vld [vmem:[#allocation5 + $0x1890] sm:$0xff]
    %v990 = vld [vmem:[#allocation5 + $0x1898] sm:$0xff]
    %v991 = vld [vmem:[#allocation5 + $0x18a0] sm:$0xff]
    %v992 = vld [vmem:[#allocation5 + $0x18a8] sm:$0xff]
    %v993 = vld [vmem:[#allocation5 + $0x18b0] sm:$0xff]
    %v994 = vld [vmem:[#allocation5 + $0x18b8] sm:$0xff]
    %v995 = vld [vmem:[#allocation5 + $0x18c0] sm:$0xff]
    %v996 = vld [vmem:[#allocation5 + $0x18c8] sm:$0xff]
    %v997 = vld [vmem:[#allocation5 + $0x18d0] sm:$0xff]
    %v998 = vld [vmem:[#allocation5 + $0x18d8] sm:$0xff]
    %v999 = vld [vmem:[#allocation5 + $0x18e0] sm:$0xff]
    %v1000 = vld [vmem:[#allocation5 + $0x18e8] sm:$0xff]
    %v1001 = vld [vmem:[#allocation5 + $0x18f0] sm:$0xff]
    %v1002 = vld [vmem:[#allocation5 + $0x18f8] sm:$0xff]
    %v1003 = vld [vmem:[#allocation5 + $0x1900] sm:$0xff]
    %v1004 = vld [vmem:[#allocation5 + $0x1908] sm:$0xff]
    %v1005 = vld [vmem:[#allocation5 + $0x1910] sm:$0xff]
    %v1006 = vld [vmem:[#allocation5 + $0x1918] sm:$0xff]
    %v1007 = vld [vmem:[#allocation5 + $0x1920] sm:$0xff]
    %v1008 = vld [vmem:[#allocation5 + $0x1928] sm:$0xff]
    %v1009 = vld [vmem:[#allocation5 + $0x1930] sm:$0xff]
    %v1010 = vld [vmem:[#allocation5 + $0x1938] sm:$0xff]
    %v1011 = vld [vmem:[#allocation5 + $0x1940] sm:$0xff]
    %v1012 = vld [vmem:[#allocation5 + $0x1948] sm:$0xff]
    %v1013 = vld [vmem:[#allocation5 + $0x1950] sm:$0xff]
    %v1014 = vld [vmem:[#allocation5 + $0x1958] sm:$0xff]
    %v1015 = vld [vmem:[#allocation5 + $0x1960] sm:$0xff]
    %v1016 = vld [vmem:[#allocation5 + $0x1968] sm:$0xff]
    %v1017 = vld [vmem:[#allocation5 + $0x1970] sm:$0xff]
    %v1018 = vld [vmem:[#allocation5 + $0x1978] sm:$0xff]
    %v1019 = vld [vmem:[#allocation5 + $0x1980] sm:$0xff]
    %v1020 = vld [vmem:[#allocation5 + $0x1988] sm:$0xff]
    %v1021 = vld [vmem:[#allocation5 + $0x1990] sm:$0xff]
    %v1022 = vld [vmem:[#allocation5 + $0x1998] sm:$0xff]
    %v1023 = vld [vmem:[#allocation5 + $0x19a0] sm:$0xff]
    %v1024 = vld [vmem:[#allocation5 + $0x19a8] sm:$0xff]
    %v1025 = vld [vmem:[#allocation5 + $0x19b0] sm:$0xff]
    %v1026 = vld [vmem:[#allocation5 + $0x19b8] sm:$0xff]
    %v1027 = vld [vmem:[#allocation5 + $0x19c0] sm:$0xff]
    %v1028 = vld [vmem:[#allocation5 + $0x19c8] sm:$0xff]
    %v1029 = vld [vmem:[#allocation5 + $0x19d0] sm:$0xff]
    %v1030 = vld [vmem:[#allocation5 + $0x19d8] sm:$0xff]
    %v1031 = vld [vmem:[#allocation5 + $0x19e0] sm:$0xff]
    %v1032 = vld [vmem:[#allocation5 + $0x19e8] sm:$0xff]
    %v1033 = vld [vmem:[#allocation5 + $0x19f0] sm:$0xff]
    %v1034 = vld [vmem:[#allocation5 + $0x19f8] sm:$0xff]
    %v1035 = vld [vmem:[#allocation5 + $0x1a00] sm:$0xff]
    %v1036 = vld [vmem:[#allocation5 + $0x1a08] sm:$0xff]
    %v1037 = vld [vmem:[#allocation5 + $0x1a10] sm:$0xff]
    %v1038 = vld [vmem:[#allocation5 + $0x1a18] sm:$0xff]
    %v1039 = vld [vmem:[#allocation5 + $0x1a20] sm:$0xff]
    %v1040 = vld [vmem:[#allocation5 + $0x1a28] sm:$0xff]
    %v1041 = vld [vmem:[#allocation5 + $0x1a30] sm:$0xff]
    %v1042 = vld [vmem:[#allocation5 + $0x1a38] sm:$0xff]
    %v1043 = vld [vmem:[#allocation5 + $0x1a40] sm:$0xff]
    %v1044 = vld [vmem:[#allocation5 + $0x1a48] sm:$0xff]
    %v1045 = vld [vmem:[#allocation5 + $0x1a50] sm:$0xff]
    %v1046 = vld [vmem:[#allocation5 + $0x1a58] sm:$0xff]
    %v1047 = vld [vmem:[#allocation5 + $0x1a60] sm:$0xff]
    %v1048 = vld [vmem:[#allocation5 + $0x1a68] sm:$0xff]
    %v1049 = vld [vmem:[#allocation5 + $0x1a70] sm:$0xff]
    %v1050 = vld [vmem:[#allocation5 + $0x1a78] sm:$0xff]
    %v1051 = vld [vmem:[#allocation5 + $0x1a80] sm:$0xff]
    %v1052 = vld [vmem:[#allocation5 + $0x1a88] sm:$0xff]
    %v1053 = vld [vmem:[#allocation5 + $0x1a90] sm:$0xff]
    %v1054 = vld [vmem:[#allocation5 + $0x1a98] sm:$0xff]
    %v1055 = vld [vmem:[#allocation5 + $0x1aa0] sm:$0xff]
    %v1056 = vld [vmem:[#allocation5 + $0x1aa8] sm:$0xff]
    %v1057 = vld [vmem:[#allocation5 + $0x1ab0] sm:$0xff]
    %v1058 = vld [vmem:[#allocation5 + $0x1ab8] sm:$0xff]
    %v1059 = vld [vmem:[#allocation5 + $0x1ac0] sm:$0xff]
    %v1060 = vld [vmem:[#allocation5 + $0x1ac8] sm:$0xff]
    %v1061 = vld [vmem:[#allocation5 + $0x1ad0] sm:$0xff]
    %v1062 = vld [vmem:[#allocation5 + $0x1ad8] sm:$0xff]
    %v1063 = vld [vmem:[#allocation5 + $0x1ae0] sm:$0xff]
    %v1064 = vld [vmem:[#allocation5 + $0x1ae8] sm:$0xff]
    %v1065 = vld [vmem:[#allocation5 + $0x1af0] sm:$0xff]
    %v1066 = vld [vmem:[#allocation5 + $0x1af8] sm:$0xff]
    %v1067 = vld [vmem:[#allocation5 + $0x1b00] sm:$0xff]
    %v1068 = vld [vmem:[#allocation5 + $0x1b08] sm:$0xff]
    %v1069 = vld [vmem:[#allocation5 + $0x1b10] sm:$0xff]
    %v1070 = vld [vmem:[#allocation5 + $0x1b18] sm:$0xff]
    %v1071 = vld [vmem:[#allocation5 + $0x1b20] sm:$0xff]
    %v1072 = vld [vmem:[#allocation5 + $0x1b28] sm:$0xff]
    %v1073 = vld [vmem:[#allocation5 + $0x1b30] sm:$0xff]
    %v1074 = vld [vmem:[#allocation5 + $0x1b38] sm:$0xff]
    %v1075 = vld [vmem:[#allocation5 + $0x1b40] sm:$0xff]
    %v1076 = vld [vmem:[#allocation5 + $0x1b48] sm:$0xff]
    %v1077 = vld [vmem:[#allocation5 + $0x1b50] sm:$0xff]
    %v1078 = vld [vmem:[#allocation5 + $0x1b58] sm:$0xff]
    %v1079 = vld [vmem:[#allocation5 + $0x1b60] sm:$0xff]
    %v1080 = vld [vmem:[#allocation5 + $0x1b68] sm:$0xff]
    %v1081 = vld [vmem:[#allocation5 + $0x1b70] sm:$0xff]
    %v1082 = vld [vmem:[#allocation5 + $0x1b78] sm:$0xff]
    %v1193 = vperm.slane %v93, 0
    %v1194 = vperm.slane %v93, 2
    %v1195 = vperm.slane %v93, 4
    %v1196 = vperm.slane %v93, 6
    %v1197 = vperm.slane %v94, 0
    %v1198 = vperm.slane %v94, 2
    %v1199 = vperm.slane %v94, 4
    %v1200 = vperm.slane %v94, 6
    %v1201 = vperm.slane %v95, 0
    %v1202 = vperm.slane %v95, 2
    %v1203 = vperm.slane %v95, 4
    %v1204 = vperm.slane %v95, 6
    %v1205 = vperm.slane %v96, 0
    %v1206 = vperm.slane %v96, 2
    %v1207 = vperm.slane %v96, 4
    %v1208 = vperm.slane %v96, 6
    %v1209 = vperm.slane %v97, 0
    %v1210 = vperm.slane %v97, 2
    %v1211 = vperm.slane %v97, 4
    %v1212 = vperm.slane %v97, 6
    %v1213 = vperm.slane %v98, 0
    %v1214 = vperm.slane %v98, 2
    %v1215 = vperm.slane %v98, 4
    %v1216 = vperm.slane %v98, 6
    %v1217 = vperm.slane %v99, 0
    %v1218 = vperm.slane %v99, 2
    %v1219 = vperm.slane %v99, 4
    %v1220 = vperm.slane %v99, 6
    %v1221 = vperm.slane %v100, 0
    %v1222 = vperm.slane %v100, 2
    %v1223 = vperm.slane %v100, 4
    %v1224 = vperm.slane %v100, 6
    %v1225 = vperm.slane %v101, 0
    %v1226 = vperm.slane %v101, 2
    %v1227 = vperm.slane %v101, 4
    %v1228 = vperm.slane %v101, 6
    %v1229 = vperm.slane %v102, 0
    %v1230 = vperm.slane %v102, 2
    %v1231 = vperm.slane %v102, 4
    %v1232 = vperm.slane %v102, 6
    %v1233 = vperm.slane %v103, 0
    %v1234 = vperm.slane %v103, 2
    %v1235 = vperm.slane %v103, 4
    %v1236 = vperm.slane %v103, 6
    %v1237 = vperm.slane %v104, 0
    %v1238 = vperm.slane %v104, 2
    %v1239 = vperm.slane %v104, 4
    %v1240 = vperm.slane %v104, 6
    %v1241 = vperm.slane %v105, 0
    %v1242 = vperm.slane %v105, 2
    %v1243 = vperm.slane %v105, 4
    %v1244 = vperm.slane %v105, 6
    %v1245 = vperm.slane %v106, 0
    %v1246 = vperm.slane %v106, 2
    %v1247 = vperm.slane %v106, 4
    %v1248 = vperm.slane %v106, 6
    %v1249 = vperm.slane %v107, 0
    %v1250 = vperm.slane %v107, 2
    %v1251 = vperm.slane %v107, 4
    %v1252 = vperm.slane %v107, 6
    %v1253 = vperm.slane %v108, 0
    %v1254 = vperm.slane %v108, 2
    %v1255 = vperm.slane %v108, 4
    %v1256 = vperm.slane %v108, 6
    %v1257 = vperm.slane %v109, 0
    %v1258 = vperm.slane %v109, 2
    %v1259 = vperm.slane %v109, 4
    %v1260 = vperm.slane %v109, 6
    %v1261 = vperm.slane %v110, 0
    %v1262 = vperm.slane %v110, 2
    %v1263 = vperm.slane %v110, 4
    %v1264 = vperm.slane %v110, 6
    %v1265 = vperm.slane %v111, 0
    %v1266 = vperm.slane %v111, 2
    %v1267 = vperm.slane %v111, 4
    %v1268 = vperm.slane %v111, 6
    %v1269 = vperm.slane %v112, 0
    %v1270 = vperm.slane %v112, 2
    %v1271 = vperm.slane %v112, 4
    %v1272 = vperm.slane %v112, 6
    %v1273 = vperm.slane %v113, 0
    %v1274 = vperm.slane %v113, 2
    %v1275 = vperm.slane %v113, 4
    %v1276 = vperm.slane %v113, 6
    %v1277 = vperm.slane %v114, 0
    %v1278 = vperm.slane %v114, 2
    %v1279 = vperm.slane %v114, 4
    %v1280 = vperm.slane %v114, 6
    %v1281 = vperm.slane %v115, 0
    %v1282 = vperm.slane %v115, 2
    %v1283 = vperm.slane %v115, 4
    %v1284 = vperm.slane %v115, 6
    %v1285 = vperm.slane %v116, 0
    %v1286 = vperm.slane %v116, 2
    %v1287 = vperm.slane %v116, 4
    %v1288 = vperm.slane %v116, 6
    %v1289 = vperm.slane %v117, 0
    %v1290 = vperm.slane %v117, 2
    %v1291 = vperm.slane %v117, 4
    %v1292 = vperm.slane %v117, 6
    %v1293 = vperm.slane %v118, 0
    %v1294 = vperm.slane %v118, 2
    %v1295 = vperm.slane %v118, 4
    %v1296 = vperm.slane %v118, 6
    %v1297 = vperm.slane %v119, 0
    %v1298 = vperm.slane %v119, 2
    %v1299 = vperm.slane %v119, 4
    %v1300 = vperm.slane %v119, 6
    %v1301 = vperm.slane %v120, 0
    %v1302 = vperm.slane %v120, 2
    %v1303 = vperm.slane %v120, 4
    %v1304 = vperm.slane %v120, 6
    %v1305 = vperm.slane %v121, 0
    %v1306 = vperm.slane %v121, 2
    %v1307 = vperm.slane %v121, 4
    %v1308 = vperm.slane %v121, 6
    %v1309 = vperm.slane %v122, 0
    %v1310 = vperm.slane %v122, 2
    %v1311 = vperm.slane %v122, 4
    %v1312 = vperm.slane %v122, 6
    %v1313 = vperm.slane %v123, 0
    %v1314 = vperm.slane %v123, 2
    %v1315 = vperm.slane %v123, 4
    %v1316 = vperm.slane %v123, 6
    %v1317 = vperm.slane %v124, 0
    %v1318 = vperm.slane %v124, 2
    %v1319 = vperm.slane %v124, 4
    %v1320 = vperm.slane %v124, 6
    %v1321 = vperm.slane %v125, 0
    %v1322 = vperm.slane %v125, 2
    %v1323 = vperm.slane %v125, 4
    %v1324 = vperm.slane %v125, 6
    %v1325 = vperm.slane %v126, 0
    %v1326 = vperm.slane %v126, 2
    %v1327 = vperm.slane %v126, 4
    %v1328 = vperm.slane %v126, 6
    %v1329 = vperm.slane %v127, 0
    %v1330 = vperm.slane %v127, 2
    %v1331 = vperm.slane %v127, 4
    %v1332 = vperm.slane %v127, 6
    %v1333 = vperm.slane %v128, 0
    %v1334 = vperm.slane %v128, 2
    %v1335 = vperm.slane %v128, 4
    %v1336 = vperm.slane %v128, 6
    %v1337 = vperm.slane %v129, 0
    %v1338 = vperm.slane %v129, 2
    %v1339 = vperm.slane %v129, 4
    %v1340 = vperm.slane %v129, 6
    %v1341 = vperm.slane %v130, 0
    %v1342 = vperm.slane %v130, 2
    %v1343 = vperm.slane %v130, 4
    %v1344 = vperm.slane %v130, 6
    %v1345 = vperm.slane %v131, 0
    %v1346 = vperm.slane %v131, 2
    %v1347 = vperm.slane %v131, 4
    %v1348 = vperm.slane %v131, 6
    %v1349 = vperm.slane %v132, 0
    %v1350 = vperm.slane %v132, 2
    %v1351 = vperm.slane %v132, 4
    %v1352 = vperm.slane %v132, 6
    %v1353 = vperm.slane %v133, 0
    %v1354 = vperm.slane %v133, 2
    %v1355 = vperm.slane %v133, 4
    %v1356 = vperm.slane %v133, 6
    %v1357 = vperm.slane %v134, 0
    %v1358 = vperm.slane %v134, 2
    %v1359 = vperm.slane %v134, 4
    %v1360 = vperm.slane %v134, 6
    %v1361 = vperm.slane %v135, 0
    %v1362 = vperm.slane %v135, 2
    %v1363 = vperm.slane %v135, 4
    %v1364 = vperm.slane %v135, 6
    %v1365 = vperm.slane %v136, 0
    %v1366 = vperm.slane %v136, 2
    %v1367 = vperm.slane %v136, 4
    %v1368 = vperm.slane %v136, 6
    %v1369 = vperm.slane %v137, 0
    %v1370 = vperm.slane %v137, 2
    %v1371 = vperm.slane %v137, 4
    %v1372 = vperm.slane %v137, 6
    %v1373 = vperm.slane %v138, 0
    %v1374 = vperm.slane %v138, 2
    %v1375 = vperm.slane %v138, 4
    %v1376 = vperm.slane %v138, 6
    %v1377 = vperm.slane %v139, 0
    %v1378 = vperm.slane %v139, 2
    %v1379 = vperm.slane %v139, 4
    %v1380 = vperm.slane %v139, 6
    %v1381 = vperm.slane %v140, 0
    %v1382 = vperm.slane %v140, 2
    %v1383 = vperm.slane %v140, 4
    %v1384 = vperm.slane %v140, 6
    %v1385 = vperm.slane %v141, 0
    %v1386 = vperm.slane %v141, 2
    %v1387 = vperm.slane %v141, 4
    %v1388 = vperm.slane %v141, 6
    %v1389 = vperm.slane %v142, 0
    %v1390 = vperm.slane %v142, 2
    %v1391 = vperm.slane %v142, 4
    %v1392 = vperm.slane %v142, 6
    %v1393 = vperm.slane %v143, 0
    %v1394 = vperm.slane %v143, 2
    %v1395 = vperm.slane %v143, 4
    %v1396 = vperm.slane %v143, 6
    %v1397 = vperm.slane %v144, 0
    %v1398 = vperm.slane %v144, 2
    %v1399 = vperm.slane %v144, 4
    %v1400 = vperm.slane %v144, 6
    %v1401 = vperm.slane %v145, 0
    %v1402 = vperm.slane %v145, 2
    %v1403 = vperm.slane %v145, 4
    %v1404 = vperm.slane %v145, 6
    %v1405 = vperm.slane %v146, 0
    %v1406 = vperm.slane %v146, 2
    %v1407 = vperm.slane %v146, 4
    %v1408 = vperm.slane %v146, 6
    %v1409 = vperm.slane %v147, 0
    %v1410 = vperm.slane %v147, 2
    %v1411 = vperm.slane %v147, 4
    %v1412 = vperm.slane %v147, 6
    %v1413 = vperm.slane %v148, 0
    %v1414 = vperm.slane %v148, 2
    %v1415 = vperm.slane %v148, 4
    %v1416 = vperm.slane %v148, 6
    %v1417 = vperm.slane %v149, 0
    %v1418 = vperm.slane %v149, 2
    %v1419 = vperm.slane %v149, 4
    %v1420 = vperm.slane %v149, 6
    %v1421 = vperm.slane %v150, 0
    %v1422 = vperm.slane %v150, 2
    %v1423 = vperm.slane %v150, 4
    %v1424 = vperm.slane %v150, 6
    %v1425 = vperm.slane %v151, 0
    %v1426 = vperm.slane %v151, 2
    %v1427 = vperm.slane %v151, 4
    %v1428 = vperm.slane %v151, 6
    %v1429 = vperm.slane %v152, 0
    %v1430 = vperm.slane %v152, 2
    %v1431 = vperm.slane %v152, 4
    %v1432 = vperm.slane %v152, 6
    %v1433 = vperm.slane %v153, 0
    %v1434 = vperm.slane %v153, 2
    %v1435 = vperm.slane %v153, 4
    %v1436 = vperm.slane %v153, 6
    %v1437 = vperm.slane %v154, 0
    %v1438 = vperm.slane %v154, 2
    %v1439 = vperm.slane %v154, 4
    %v1440 = vperm.slane %v154, 6
    %v1441 = vperm.slane %v155, 0
    %v1442 = vperm.slane %v155, 2
    %v1443 = vperm.slane %v155, 4
    %v1444 = vperm.slane %v155, 6
    %v1445 = vperm.slane %v156, 0
    %v1446 = vperm.slane %v156, 2
    %v1447 = vperm.slane %v156, 4
    %v1448 = vperm.slane %v156, 6
    %v1449 = vperm.slane %v157, 0
    %v1450 = vperm.slane %v157, 2
    %v1451 = vperm.slane %v157, 4
    %v1452 = vperm.slane %v157, 6
    %v1453 = vperm.slane %v158, 0
    %v1454 = vperm.slane %v158, 2
    %v1455 = vperm.slane %v158, 4
    %v1456 = vperm.slane %v158, 6
    %v1457 = vperm.slane %v159, 0
    %v1458 = vperm.slane %v159, 2
    %v1459 = vperm.slane %v159, 4
    %v1460 = vperm.slane %v159, 6
    %v1461 = vperm.slane %v160, 0
    %v1462 = vperm.slane %v160, 2
    %v1463 = vperm.slane %v160, 4
    %v1464 = vperm.slane %v160, 6
    %v1465 = vperm.slane %v161, 0
    %v1466 = vperm.slane %v161, 2
    %v1467 = vperm.slane %v161, 4
    %v1468 = vperm.slane %v161, 6
    %v1469 = vperm.slane %v162, 0
    %v1470 = vperm.slane %v162, 2
    %v1471 = vperm.slane %v162, 4
    %v1472 = vperm.slane %v162, 6
    %v1473 = vperm.slane %v163, 0
    %v1474 = vperm.slane %v163, 2
    %v1475 = vperm.slane %v163, 4
    %v1476 = vperm.slane %v163, 6
    %v1477 = vperm.slane %v164, 0
    %v1478 = vperm.slane %v164, 2
    %v1479 = vperm.slane %v164, 4
    %v1480 = vperm.slane %v164, 6
    %v1481 = vperm.slane %v165, 0
    %v1482 = vperm.slane %v165, 2
    %v1483 = vperm.slane %v165, 4
    %v1484 = vperm.slane %v165, 6
    %v1485 = vperm.slane %v166, 0
    %v1486 = vperm.slane %v166, 2
    %v1487 = vperm.slane %v166, 4
    %v1488 = vperm.slane %v166, 6
    %v1489 = vperm.slane %v167, 0
    %v1490 = vperm.slane %v167, 2
    %v1491 = vperm.slane %v167, 4
    %v1492 = vperm.slane %v167, 6
    %v1493 = vperm.slane %v168, 0
    %v1494 = vperm.slane %v168, 2
    %v1495 = vperm.slane %v168, 4
    %v1496 = vperm.slane %v168, 6
    %v1497 = vperm.slane %v169, 0
    %v1498 = vperm.slane %v169, 2
    %v1499 = vperm.slane %v169, 4
    %v1500 = vperm.slane %v169, 6
    %v1501 = vperm.slane %v170, 0
    %v1502 = vperm.slane %v170, 2
    %v1503 = vperm.slane %v170, 4
    %v1504 = vperm.slane %v170, 6
    %v1505 = vperm.slane %v171, 0
    %v1506 = vperm.slane %v171, 2
    %v1507 = vperm.slane %v171, 4
    %v1508 = vperm.slane %v171, 6
    %v1509 = vperm.slane %v172, 0
    %v1510 = vperm.slane %v172, 2
    %v1511 = vperm.slane %v172, 4
    %v1512 = vperm.slane %v172, 6
    %v1513 = vperm.slane %v173, 0
    %v1514 = vperm.slane %v173, 2
    %v1515 = vperm.slane %v173, 4
    %v1516 = vperm.slane %v173, 6
    %v1517 = vperm.slane %v174, 0
    %v1518 = vperm.slane %v174, 2
    %v1519 = vperm.slane %v174, 4
    %v1520 = vperm.slane %v174, 6
    %v1521 = vperm.slane %v175, 0
    %v1522 = vperm.slane %v175, 2
    %v1523 = vperm.slane %v175, 4
    %v1524 = vperm.slane %v175, 6
    %v1525 = vperm.slane %v176, 0
    %v1526 = vperm.slane %v176, 2
    %v1527 = vperm.slane %v176, 4
    %v1528 = vperm.slane %v176, 6
    %v1529 = vperm.slane %v177, 0
    %v1530 = vperm.slane %v177, 2
    %v1531 = vperm.slane %v177, 4
    %v1532 = vperm.slane %v177, 6
    %v1533 = vperm.slane %v178, 0
    %v1534 = vperm.slane %v178, 2
    %v1535 = vperm.slane %v178, 4
    %v1536 = vperm.slane %v178, 6
    %v1537 = vperm.slane %v179, 0
    %v1538 = vperm.slane %v179, 2
    %v1539 = vperm.slane %v179, 4
    %v1540 = vperm.slane %v179, 6
    %v1541 = vperm.slane %v180, 0
    %v1542 = vperm.slane %v180, 2
    %v1543 = vperm.slane %v180, 4
    %v1544 = vperm.slane %v180, 6
    %v1545 = vperm.slane %v181, 0
    %v1546 = vperm.slane %v181, 2
    %v1547 = vperm.slane %v181, 4
    %v1548 = vperm.slane %v181, 6
    %v1549 = vperm.slane %v182, 0
    %v1550 = vperm.slane %v182, 2
    %v1551 = vperm.slane %v182, 4
    %v1552 = vperm.slane %v182, 6
    %v1553 = vperm.slane %v183, 0
    %v1554 = vperm.slane %v183, 2
    %v1555 = vperm.slane %v183, 4
    %v1556 = vperm.slane %v183, 6
    %v1557 = vperm.slane %v184, 0
    %v1558 = vperm.slane %v184, 2
    %v1559 = vperm.slane %v184, 4
    %v1560 = vperm.slane %v184, 6
    %v1561 = vperm.slane %v185, 0
    %v1562 = vperm.slane %v185, 2
    %v1563 = vperm.slane %v185, 4
    %v1564 = vperm.slane %v185, 6
    %v1565 = vperm.slane %v186, 0
    %v1566 = vperm.slane %v186, 2
    %v1567 = vperm.slane %v186, 4
    %v1568 = vperm.slane %v186, 6
    %v1569 = vperm.slane %v187, 0
    %v1570 = vperm.slane %v187, 2
    %v1571 = vperm.slane %v187, 4
    %v1572 = vperm.slane %v187, 6
    %v1573 = vperm.slane %v188, 0
    %v1574 = vperm.slane %v188, 2
    %v1575 = vperm.slane %v188, 4
    %v1576 = vperm.slane %v188, 6
    %v1577 = vperm.slane %v189, 0
    %v1578 = vperm.slane %v189, 2
    %v1579 = vperm.slane %v189, 4
    %v1580 = vperm.slane %v189, 6
    %v1581 = vperm.slane %v190, 0
    %v1582 = vperm.slane %v190, 2
    %v1583 = vperm.slane %v190, 4
    %v1584 = vperm.slane %v190, 6
    %v1585 = vperm.slane %v191, 0
    %v1586 = vperm.slane %v191, 2
    %v1587 = vperm.slane %v191, 4
    %v1588 = vperm.slane %v191, 6
    %v1589 = vperm.slane %v192, 0
    %v1590 = vperm.slane %v192, 2
    %v1591 = vperm.slane %v192, 4
    %v1592 = vperm.slane %v192, 6
    %v1593 = vperm.slane %v193, 0
    %v1594 = vperm.slane %v193, 2
    %v1595 = vperm.slane %v193, 4
    %v1596 = vperm.slane %v193, 6
    %v1597 = vperm.slane %v194, 0
    %v1598 = vperm.slane %v194, 2
    %v1599 = vperm.slane %v194, 4
    %v1600 = vperm.slane %v194, 6
    %v1601 = vperm.slane %v195, 0
    %v1602 = vperm.slane %v195, 2
    %v1603 = vperm.slane %v195, 4
    %v1604 = vperm.slane %v195, 6
    %v1605 = vperm.slane %v196, 0
    %v1606 = vperm.slane %v196, 2
    %v1607 = vperm.slane %v196, 4
    %v1608 = vperm.slane %v196, 6
    %v1609 = vperm.slane %v197, 0
    %v1610 = vperm.slane %v197, 2
    %v1611 = vperm.slane %v197, 4
    %v1612 = vperm.slane %v197, 6
    %v1613 = vperm.slane %v198, 0
    %v1614 = vperm.slane %v198, 2
    %v1615 = vperm.slane %v198, 4
    %v1616 = vperm.slane %v198, 6
    %v1617 = vperm.slane %v199, 0
    %v1618 = vperm.slane %v199, 2
    %v1619 = vperm.slane %v199, 4
    %v1620 = vperm.slane %v199, 6
    %v1621 = vperm.slane %v200, 0
    %v1622 = vperm.slane %v200, 2
    %v1623 = vperm.slane %v200, 4
    %v1624 = vperm.slane %v200, 6
    %v1625 = vperm.slane %v201, 0
    %v1626 = vperm.slane %v201, 2
    %v1627 = vperm.slane %v201, 4
    %v1628 = vperm.slane %v201, 6
    %v1629 = vperm.slane %v202, 0
    %v1630 = vperm.slane %v202, 2
    %v1631 = vperm.slane %v202, 4
    %v1632 = vperm.slane %v202, 6
    %v2073 = vperm.slane %v1193, 0
    %v2074 = vperm.slane %v1194, 0
    %v2075 = vperm.slane %v1195, 0
    %v2076 = vperm.slane %v1196, 0
    %v2077 = vperm.slane %v1197, 0
    %v2078 = vperm.slane %v1198, 0
    %v2079 = vperm.slane %v1199, 0
    %v2080 = vperm.slane %v1200, 0
    %v2081 = vperm.slane %v1201, 0
    %v2082 = vperm.slane %v1202, 0
    %v2083 = vperm.slane %v1203, 0
    %v2084 = vperm.slane %v1204, 0
    %v2085 = vperm.slane %v1205, 0
    %v2086 = vperm.slane %v1206, 0
    %v2087 = vperm.slane %v1207, 0
    %v2088 = vperm.slane %v1208, 0
    %v2089 = vperm.slane %v1209, 0
    %v2090 = vperm.slane %v1210, 0
    %v2091 = vperm.slane %v1211, 0
    %v2092 = vperm.slane %v1212, 0
    %v2093 = vperm.slane %v1213, 0
    %v2094 = vperm.slane %v1214, 0
    %v2095 = vperm.slane %v1215, 0
    %v2096 = vperm.slane %v1216, 0
    %v2097 = vperm.slane %v1217, 0
    %v2098 = vperm.slane %v1218, 0
    %v2099 = vperm.slane %v1219, 0
    %v2100 = vperm.slane %v1220, 0
    %v2101 = vperm.slane %v1221, 0
    %v2102 = vperm.slane %v1222, 0
    %v2103 = vperm.slane %v1223, 0
    %v2104 = vperm.slane %v1224, 0
    %v2105 = vperm.slane %v1225, 0
    %v2106 = vperm.slane %v1226, 0
    %v2107 = vperm.slane %v1227, 0
    %v2108 = vperm.slane %v1228, 0
    %v2109 = vperm.slane %v1229, 0
    %v2110 = vperm.slane %v1230, 0
    %v2111 = vperm.slane %v1231, 0
    %v2112 = vperm.slane %v1232, 0
    %v2113 = vperm.slane %v1233, 0
    %v2114 = vperm.slane %v1234, 0
    %v2115 = vperm.slane %v1235, 0
    %v2116 = vperm.slane %v1236, 0
    %v2117 = vperm.slane %v1237, 0
    %v2118 = vperm.slane %v1238, 0
    %v2119 = vperm.slane %v1239, 0
    %v2120 = vperm.slane %v1240, 0
    %v2121 = vperm.slane %v1241, 0
    %v2122 = vperm.slane %v1242, 0
    %v2123 = vperm.slane %v1243, 0
    %v2124 = vperm.slane %v1244, 0
    %v2125 = vperm.slane %v1245, 0
    %v2126 = vperm.slane %v1246, 0
    %v2127 = vperm.slane %v1247, 0
    %v2128 = vperm.slane %v1248, 0
    %v2129 = vperm.slane %v1249, 0
    %v2130 = vperm.slane %v1250, 0
    %v2131 = vperm.slane %v1251, 0
    %v2132 = vperm.slane %v1252, 0
    %v2133 = vperm.slane %v1253, 0
    %v2134 = vperm.slane %v1254, 0
    %v2135 = vperm.slane %v1255, 0
    %v2136 = vperm.slane %v1256, 0
    %v2137 = vperm.slane %v1257, 0
    %v2138 = vperm.slane %v1258, 0
    %v2139 = vperm.slane %v1259, 0
    %v2140 = vperm.slane %v1260, 0
    %v2141 = vperm.slane %v1261, 0
    %v2142 = vperm.slane %v1262, 0
    %v2143 = vperm.slane %v1263, 0
    %v2144 = vperm.slane %v1264, 0
    %v2145 = vperm.slane %v1265, 0
    %v2146 = vperm.slane %v1266, 0
    %v2147 = vperm.slane %v1267, 0
    %v2148 = vperm.slane %v1268, 0
    %v2149 = vperm.slane %v1269, 0
    %v2150 = vperm.slane %v1270, 0
    %v2151 = vperm.slane %v1271, 0
    %v2152 = vperm.slane %v1272, 0
    %v2153 = vperm.slane %v1273, 0
    %v2154 = vperm.slane %v1274, 0
    %v2155 = vperm.slane %v1275, 0
    %v2156 = vperm.slane %v1276, 0
    %v2157 = vperm.slane %v1277, 0
    %v2158 = vperm.slane %v1278, 0
    %v2159 = vperm.slane %v1279, 0
    %v2160 = vperm.slane %v1280, 0
    %v2161 = vperm.slane %v1281, 0
    %v2162 = vperm.slane %v1282, 0
    %v2163 = vperm.slane %v1283, 0
    %v2164 = vperm.slane %v1284, 0
    %v2165 = vperm.slane %v1285, 0
    %v2166 = vperm.slane %v1286, 0
    %v2167 = vperm.slane %v1287, 0
    %v2168 = vperm.slane %v1288, 0
    %v2169 = vperm.slane %v1289, 0
    %v2170 = vperm.slane %v1290, 0
    %v2171 = vperm.slane %v1291, 0
    %v2172 = vperm.slane %v1292, 0
    %v2173 = vperm.slane %v1293, 0
    %v2174 = vperm.slane %v1294, 0
    %v2175 = vperm.slane %v1295, 0
    %v2176 = vperm.slane %v1296, 0
    %v2177 = vperm.slane %v1297, 0
    %v2178 = vperm.slane %v1298, 0
    %v2179 = vperm.slane %v1299, 0
    %v2180 = vperm.slane %v1300, 0
    %v2181 = vperm.slane %v1301, 0
    %v2182 = vperm.slane %v1302, 0
    %v2183 = vperm.slane %v1303, 0
    %v2184 = vperm.slane %v1304, 0
    %v2185 = vperm.slane %v1305, 0
    %v2186 = vperm.slane %v1306, 0
    %v2187 = vperm.slane %v1307, 0
    %v2188 = vperm.slane %v1308, 0
    %v2189 = vperm.slane %v1309, 0
    %v2190 = vperm.slane %v1310, 0
    %v2191 = vperm.slane %v1311, 0
    %v2192 = vperm.slane %v1312, 0
    %v2193 = vperm.slane %v1313, 0
    %v2194 = vperm.slane %v1314, 0
    %v2195 = vperm.slane %v1315, 0
    %v2196 = vperm.slane %v1316, 0
    %v2197 = vperm.slane %v1317, 0
    %v2198 = vperm.slane %v1318, 0
    %v2199 = vperm.slane %v1319, 0
    %v2200 = vperm.slane %v1320, 0
    %v2201 = vperm.slane %v1321, 0
    %v2202 = vperm.slane %v1322, 0
    %v2203 = vperm.slane %v1323, 0
    %v2204 = vperm.slane %v1324, 0
    %v2205 = vperm.slane %v1325, 0
    %v2206 = vperm.slane %v1326, 0
    %v2207 = vperm.slane %v1327, 0
    %v2208 = vperm.slane %v1328, 0
    %v2209 = vperm.slane %v1329, 0
    %v2210 = vperm.slane %v1330, 0
    %v2211 = vperm.slane %v1331, 0
    %v2212 = vperm.slane %v1332, 0
    %v2213 = vperm.slane %v1333, 0
    %v2214 = vperm.slane %v1334, 0
    %v2215 = vperm.slane %v1335, 0
    %v2216 = vperm.slane %v1336, 0
    %v2217 = vperm.slane %v1337, 0
    %v2218 = vperm.slane %v1338, 0
    %v2219 = vperm.slane %v1339, 0
    %v2220 = vperm.slane %v1340, 0
    %v2221 = vperm.slane %v1341, 0
    %v2222 = vperm.slane %v1342, 0
    %v2223 = vperm.slane %v1343, 0
    %v2224 = vperm.slane %v1344, 0
    %v2225 = vperm.slane %v1345, 0
    %v2226 = vperm.slane %v1346, 0
    %v2227 = vperm.slane %v1347, 0
    %v2228 = vperm.slane %v1348, 0
    %v2229 = vperm.slane %v1349, 0
    %v2230 = vperm.slane %v1350, 0
    %v2231 = vperm.slane %v1351, 0
    %v2232 = vperm.slane %v1352, 0
    %v2233 = vperm.slane %v1353, 0
    %v2234 = vperm.slane %v1354, 0
    %v2235 = vperm.slane %v1355, 0
    %v2236 = vperm.slane %v1356, 0
    %v2237 = vperm.slane %v1357, 0
    %v2238 = vperm.slane %v1358, 0
    %v2239 = vperm.slane %v1359, 0
    %v2240 = vperm.slane %v1360, 0
    %v2241 = vperm.slane %v1361, 0
    %v2242 = vperm.slane %v1362, 0
    %v2243 = vperm.slane %v1363, 0
    %v2244 = vperm.slane %v1364, 0
    %v2245 = vperm.slane %v1365, 0
    %v2246 = vperm.slane %v1366, 0
    %v2247 = vperm.slane %v1367, 0
    %v2248 = vperm.slane %v1368, 0
    %v2249 = vperm.slane %v1369, 0
    %v2250 = vperm.slane %v1370, 0
    %v2251 = vperm.slane %v1371, 0
    %v2252 = vperm.slane %v1372, 0
    %v2253 = vperm.slane %v1373, 0
    %v2254 = vperm.slane %v1374, 0
    %v2255 = vperm.slane %v1375, 0
    %v2256 = vperm.slane %v1376, 0
    %v2257 = vperm.slane %v1377, 0
    %v2258 = vperm.slane %v1378, 0
    %v2259 = vperm.slane %v1379, 0
    %v2260 = vperm.slane %v1380, 0
    %v2261 = vperm.slane %v1381, 0
    %v2262 = vperm.slane %v1382, 0
    %v2263 = vperm.slane %v1383, 0
    %v2264 = vperm.slane %v1384, 0
    %v2265 = vperm.slane %v1385, 0
    %v2266 = vperm.slane %v1386, 0
    %v2267 = vperm.slane %v1387, 0
    %v2268 = vperm.slane %v1388, 0
    %v2269 = vperm.slane %v1389, 0
    %v2270 = vperm.slane %v1390, 0
    %v2271 = vperm.slane %v1391, 0
    %v2272 = vperm.slane %v1392, 0
    %v2273 = vperm.slane %v1393, 0
    %v2274 = vperm.slane %v1394, 0
    %v2275 = vperm.slane %v1395, 0
    %v2276 = vperm.slane %v1396, 0
    %v2277 = vperm.slane %v1397, 0
    %v2278 = vperm.slane %v1398, 0
    %v2279 = vperm.slane %v1399, 0
    %v2280 = vperm.slane %v1400, 0
    %v2281 = vperm.slane %v1401, 0
    %v2282 = vperm.slane %v1402, 0
    %v2283 = vperm.slane %v1403, 0
    %v2284 = vperm.slane %v1404, 0
    %v2285 = vperm.slane %v1405, 0
    %v2286 = vperm.slane %v1406, 0
    %v2287 = vperm.slane %v1407, 0
    %v2288 = vperm.slane %v1408, 0
    %v2289 = vperm.slane %v1409, 0
    %v2290 = vperm.slane %v1410, 0
    %v2291 = vperm.slane %v1411, 0
    %v2292 = vperm.slane %v1412, 0
    %v2293 = vperm.slane %v1413, 0
    %v2294 = vperm.slane %v1414, 0
    %v2295 = vperm.slane %v1415, 0
    %v2296 = vperm.slane %v1416, 0
    %v2297 = vperm.slane %v1417, 0
    %v2298 = vperm.slane %v1418, 0
    %v2299 = vperm.slane %v1419, 0
    %v2300 = vperm.slane %v1420, 0
    %v2301 = vperm.slane %v1421, 0
    %v2302 = vperm.slane %v1422, 0
    %v2303 = vperm.slane %v1423, 0
    %v2304 = vperm.slane %v1424, 0
    %v2305 = vperm.slane %v1425, 0
    %v2306 = vperm.slane %v1426, 0
    %v2307 = vperm.slane %v1427, 0
    %v2308 = vperm.slane %v1428, 0
    %v2309 = vperm.slane %v1429, 0
    %v2310 = vperm.slane %v1430, 0
    %v2311 = vperm.slane %v1431, 0
    %v2312 = vperm.slane %v1432, 0
    %v2313 = vperm.slane %v1433, 0
    %v2314 = vperm.slane %v1434, 0
    %v2315 = vperm.slane %v1435, 0
    %v2316 = vperm.slane %v1436, 0
    %v2317 = vperm.slane %v1437, 0
    %v2318 = vperm.slane %v1438, 0
    %v2319 = vperm.slane %v1439, 0
    %v2320 = vperm.slane %v1440, 0
    %v2321 = vperm.slane %v1441, 0
    %v2322 = vperm.slane %v1442, 0
    %v2323 = vperm.slane %v1443, 0
    %v2324 = vperm.slane %v1444, 0
    %v2325 = vperm.slane %v1445, 0
    %v2326 = vperm.slane %v1446, 0
    %v2327 = vperm.slane %v1447, 0
    %v2328 = vperm.slane %v1448, 0
    %v2329 = vperm.slane %v1449, 0
    %v2330 = vperm.slane %v1450, 0
    %v2331 = vperm.slane %v1451, 0
    %v2332 = vperm.slane %v1452, 0
    %v2333 = vperm.slane %v1453, 0
    %v2334 = vperm.slane %v1454, 0
    %v2335 = vperm.slane %v1455, 0
    %v2336 = vperm.slane %v1456, 0
    %v2337 = vperm.slane %v1457, 0
    %v2338 = vperm.slane %v1458, 0
    %v2339 = vperm.slane %v1459, 0
    %v2340 = vperm.slane %v1460, 0
    %v2341 = vperm.slane %v1461, 0
    %v2342 = vperm.slane %v1462, 0
    %v2343 = vperm.slane %v1463, 0
    %v2344 = vperm.slane %v1464, 0
    %v2345 = vperm.slane %v1465, 0
    %v2346 = vperm.slane %v1466, 0
    %v2347 = vperm.slane %v1467, 0
    %v2348 = vperm.slane %v1468, 0
    %v2349 = vperm.slane %v1469, 0
    %v2350 = vperm.slane %v1470, 0
    %v2351 = vperm.slane %v1471, 0
    %v2352 = vperm.slane %v1472, 0
    %v2353 = vperm.slane %v1473, 0
    %v2354 = vperm.slane %v1474, 0
    %v2355 = vperm.slane %v1475, 0
    %v2356 = vperm.slane %v1476, 0
    %v2357 = vperm.slane %v1477, 0
    %v2358 = vperm.slane %v1478, 0
    %v2359 = vperm.slane %v1479, 0
    %v2360 = vperm.slane %v1480, 0
    %v2361 = vperm.slane %v1481, 0
    %v2362 = vperm.slane %v1482, 0
    %v2363 = vperm.slane %v1483, 0
    %v2364 = vperm.slane %v1484, 0
    %v2365 = vperm.slane %v1485, 0
    %v2366 = vperm.slane %v1486, 0
    %v2367 = vperm.slane %v1487, 0
    %v2368 = vperm.slane %v1488, 0
    %v2369 = vperm.slane %v1489, 0
    %v2370 = vperm.slane %v1490, 0
    %v2371 = vperm.slane %v1491, 0
    %v2372 = vperm.slane %v1492, 0
    %v2373 = vperm.slane %v1493, 0
    %v2374 = vperm.slane %v1494, 0
    %v2375 = vperm.slane %v1495, 0
    %v2376 = vperm.slane %v1496, 0
    %v2377 = vperm.slane %v1497, 0
    %v2378 = vperm.slane %v1498, 0
    %v2379 = vperm.slane %v1499, 0
    %v2380 = vperm.slane %v1500, 0
    %v2381 = vperm.slane %v1501, 0
    %v2382 = vperm.slane %v1502, 0
    %v2383 = vperm.slane %v1503, 0
    %v2384 = vperm.slane %v1504, 0
    %v2385 = vperm.slane %v1505, 0
    %v2386 = vperm.slane %v1506, 0
    %v2387 = vperm.slane %v1507, 0
    %v2388 = vperm.slane %v1508, 0
    %v2389 = vperm.slane %v1509, 0
    %v2390 = vperm.slane %v1510, 0
    %v2391 = vperm.slane %v1511, 0
    %v2392 = vperm.slane %v1512, 0
    %v2393 = vperm.slane %v1513, 0
    %v2394 = vperm.slane %v1514, 0
    %v2395 = vperm.slane %v1515, 0
    %v2396 = vperm.slane %v1516, 0
    %v2397 = vperm.slane %v1517, 0
    %v2398 = vperm.slane %v1518, 0
    %v2399 = vperm.slane %v1519, 0
    %v2400 = vperm.slane %v1520, 0
    %v2401 = vperm.slane %v1521, 0
    %v2402 = vperm.slane %v1522, 0
    %v2403 = vperm.slane %v1523, 0
    %v2404 = vperm.slane %v1524, 0
    %v2405 = vperm.slane %v1525, 0
    %v2406 = vperm.slane %v1526, 0
    %v2407 = vperm.slane %v1527, 0
    %v2408 = vperm.slane %v1528, 0
    %v2409 = vperm.slane %v1529, 0
    %v2410 = vperm.slane %v1530, 0
    %v2411 = vperm.slane %v1531, 0
    %v2412 = vperm.slane %v1532, 0
    %v2413 = vperm.slane %v1533, 0
    %v2414 = vperm.slane %v1534, 0
    %v2415 = vperm.slane %v1535, 0
    %v2416 = vperm.slane %v1536, 0
    %v2417 = vperm.slane %v1537, 0
    %v2418 = vperm.slane %v1538, 0
    %v2419 = vperm.slane %v1539, 0
    %v2420 = vperm.slane %v1540, 0
    %v2421 = vperm.slane %v1541, 0
    %v2422 = vperm.slane %v1542, 0
    %v2423 = vperm.slane %v1543, 0
    %v2424 = vperm.slane %v1544, 0
    %v2425 = vperm.slane %v1545, 0
    %v2426 = vperm.slane %v1546, 0
    %v2427 = vperm.slane %v1547, 0
    %v2428 = vperm.slane %v1548, 0
    %v2429 = vperm.slane %v1549, 0
    %v2430 = vperm.slane %v1550, 0
    %v2431 = vperm.slane %v1551, 0
    %v2432 = vperm.slane %v1552, 0
    %v2433 = vperm.slane %v1553, 0
    %v2434 = vperm.slane %v1554, 0
    %v2435 = vperm.slane %v1555, 0
    %v2436 = vperm.slane %v1556, 0
    %v2437 = vperm.slane %v1557, 0
    %v2438 = vperm.slane %v1558, 0
    %v2439 = vperm.slane %v1559, 0
    %v2440 = vperm.slane %v1560, 0
    %v2441 = vperm.slane %v1561, 0
    %v2442 = vperm.slane %v1562, 0
    %v2443 = vperm.slane %v1563, 0
    %v2444 = vperm.slane %v1564, 0
    %v2445 = vperm.slane %v1565, 0
    %v2446 = vperm.slane %v1566, 0
    %v2447 = vperm.slane %v1567, 0
    %v2448 = vperm.slane %v1568, 0
    %v2449 = vperm.slane %v1569, 0
    %v2450 = vperm.slane %v1570, 0
    %v2451 = vperm.slane %v1571, 0
    %v2452 = vperm.slane %v1572, 0
    %v2453 = vperm.slane %v1573, 0
    %v2454 = vperm.slane %v1574, 0
    %v2455 = vperm.slane %v1575, 0
    %v2456 = vperm.slane %v1576, 0
    %v2457 = vperm.slane %v1577, 0
    %v2458 = vperm.slane %v1578, 0
    %v2459 = vperm.slane %v1579, 0
    %v2460 = vperm.slane %v1580, 0
    %v2461 = vperm.slane %v1581, 0
    %v2462 = vperm.slane %v1582, 0
    %v2463 = vperm.slane %v1583, 0
    %v2464 = vperm.slane %v1584, 0
    %v2465 = vperm.slane %v1585, 0
    %v2466 = vperm.slane %v1586, 0
    %v2467 = vperm.slane %v1587, 0
    %v2468 = vperm.slane %v1588, 0
    %v2469 = vperm.slane %v1589, 0
    %v2470 = vperm.slane %v1590, 0
    %v2471 = vperm.slane %v1591, 0
    %v2472 = vperm.slane %v1592, 0
    %v2473 = vperm.slane %v1593, 0
    %v2474 = vperm.slane %v1594, 0
    %v2475 = vperm.slane %v1595, 0
    %v2476 = vperm.slane %v1596, 0
    %v2477 = vperm.slane %v1597, 0
    %v2478 = vperm.slane %v1598, 0
    %v2479 = vperm.slane %v1599, 0
    %v2480 = vperm.slane %v1600, 0
    %v2481 = vperm.slane %v1601, 0
    %v2482 = vperm.slane %v1602, 0
    %v2483 = vperm.slane %v1603, 0
    %v2484 = vperm.slane %v1604, 0
    %v2485 = vperm.slane %v1605, 0
    %v2486 = vperm.slane %v1606, 0
    %v2487 = vperm.slane %v1607, 0
    %v2488 = vperm.slane %v1608, 0
    %v2489 = vperm.slane %v1609, 0
    %v2490 = vperm.slane %v1610, 0
    %v2491 = vperm.slane %v1611, 0
    %v2492 = vperm.slane %v1612, 0
    %v2493 = vperm.slane %v1613, 0
    %v2494 = vperm.slane %v1614, 0
    %v2495 = vperm.slane %v1615, 0
    %v2496 = vperm.slane %v1616, 0
    %v2497 = vperm.slane %v1617, 0
    %v2498 = vperm.slane %v1618, 0
    %v2499 = vperm.slane %v1619, 0
    %v2500 = vperm.slane %v1620, 0
    %v2501 = vperm.slane %v1621, 0
    %v2502 = vperm.slane %v1622, 0
    %v2503 = vperm.slane %v1623, 0
    %v2504 = vperm.slane %v1624, 0
    %v2505 = vperm.slane %v1625, 0
    %v2506 = vperm.slane %v1626, 0
    %v2507 = vperm.slane %v1627, 0
    %v2508 = vperm.slane %v1628, 0
    %v2509 = vperm.slane %v1629, 0
    %v2510 = vperm.slane %v1630, 0
    %v2511 = vperm.slane %v1631, 0
    %v2512 = vperm.slane %v1632, 0
    %v2513 = vmul.f32 %v203, %v2073
    %v2514 = vmul.f32 %v204, %v2074
    %v2515 = vmul.f32 %v205, %v2075
    %v2516 = vmul.f32 %v206, %v2076
    %v2517 = vmul.f32 %v207, %v2077
    %v2518 = vmul.f32 %v208, %v2078
    %v2519 = vmul.f32 %v209, %v2079
    %v2520 = vmul.f32 %v210, %v2080
    %v2521 = vmul.f32 %v211, %v2081
    %v2522 = vmul.f32 %v212, %v2082
    %v2523 = vmul.f32 %v213, %v2083
    %v2524 = vmul.f32 %v214, %v2084
    %v2525 = vmul.f32 %v215, %v2085
    %v2526 = vmul.f32 %v216, %v2086
    %v2527 = vmul.f32 %v217, %v2087
    %v2528 = vmul.f32 %v218, %v2088
    %v2529 = vmul.f32 %v219, %v2089
    %v2530 = vmul.f32 %v220, %v2090
    %v2531 = vmul.f32 %v221, %v2091
    %v2532 = vmul.f32 %v222, %v2092
    %v2533 = vmul.f32 %v223, %v2093
    %v2534 = vmul.f32 %v224, %v2094
    %v2535 = vmul.f32 %v225, %v2095
    %v2536 = vmul.f32 %v226, %v2096
    %v2537 = vmul.f32 %v227, %v2097
    %v2538 = vmul.f32 %v228, %v2098
    %v2539 = vmul.f32 %v229, %v2099
    %v2540 = vmul.f32 %v230, %v2100
    %v2541 = vmul.f32 %v231, %v2101
    %v2542 = vmul.f32 %v232, %v2102
    %v2543 = vmul.f32 %v233, %v2103
    %v2544 = vmul.f32 %v234, %v2104
    %v2545 = vmul.f32 %v235, %v2105
    %v2546 = vmul.f32 %v236, %v2106
    %v2547 = vmul.f32 %v237, %v2107
    %v2548 = vmul.f32 %v238, %v2108
    %v2549 = vmul.f32 %v239, %v2109
    %v2550 = vmul.f32 %v240, %v2110
    %v2551 = vmul.f32 %v241, %v2111
    %v2552 = vmul.f32 %v242, %v2112
    %v2553 = vmul.f32 %v243, %v2113
    %v2554 = vmul.f32 %v244, %v2114
    %v2555 = vmul.f32 %v245, %v2115
    %v2556 = vmul.f32 %v246, %v2116
    %v2557 = vmul.f32 %v247, %v2117
    %v2558 = vmul.f32 %v248, %v2118
    %v2559 = vmul.f32 %v249, %v2119
    %v2560 = vmul.f32 %v250, %v2120
    %v2561 = vmul.f32 %v251, %v2121
    %v2562 = vmul.f32 %v252, %v2122
    %v2563 = vmul.f32 %v253, %v2123
    %v2564 = vmul.f32 %v254, %v2124
    %v2565 = vmul.f32 %v255, %v2125
    %v2566 = vmul.f32 %v256, %v2126
    %v2567 = vmul.f32 %v257, %v2127
    %v2568 = vmul.f32 %v258, %v2128
    %v2569 = vmul.f32 %v259, %v2129
    %v2570 = vmul.f32 %v260, %v2130
    %v2571 = vmul.f32 %v261, %v2131
    %v2572 = vmul.f32 %v262, %v2132
    %v2573 = vmul.f32 %v263, %v2133
    %v2574 = vmul.f32 %v264, %v2134
    %v2575 = vmul.f32 %v265, %v2135
    %v2576 = vmul.f32 %v266, %v2136
    %v2577 = vmul.f32 %v267, %v2137
    %v2578 = vmul.f32 %v268, %v2138
    %v2579 = vmul.f32 %v269, %v2139
    %v2580 = vmul.f32 %v270, %v2140
    %v2581 = vmul.f32 %v271, %v2141
    %v2582 = vmul.f32 %v272, %v2142
    %v2583 = vmul.f32 %v273, %v2143
    %v2584 = vmul.f32 %v274, %v2144
    %v2585 = vmul.f32 %v275, %v2145
    %v2586 = vmul.f32 %v276, %v2146
    %v2587 = vmul.f32 %v277, %v2147
    %v2588 = vmul.f32 %v278, %v2148
    %v2589 = vmul.f32 %v279, %v2149
    %v2590 = vmul.f32 %v280, %v2150
    %v2591 = vmul.f32 %v281, %v2151
    %v2592 = vmul.f32 %v282, %v2152
    %v2593 = vmul.f32 %v283, %v2153
    %v2594 = vmul.f32 %v284, %v2154
    %v2595 = vmul.f32 %v285, %v2155
    %v2596 = vmul.f32 %v286, %v2156
    %v2597 = vmul.f32 %v287, %v2157
    %v2598 = vmul.f32 %v288, %v2158
    %v2599 = vmul.f32 %v289, %v2159
    %v2600 = vmul.f32 %v290, %v2160
    %v2601 = vmul.f32 %v291, %v2161
    %v2602 = vmul.f32 %v292, %v2162
    %v2603 = vmul.f32 %v293, %v2163
    %v2604 = vmul.f32 %v294, %v2164
    %v2605 = vmul.f32 %v295, %v2165
    %v2606 = vmul.f32 %v296, %v2166
    %v2607 = vmul.f32 %v297, %v2167
    %v2608 = vmul.f32 %v298, %v2168
    %v2609 = vmul.f32 %v299, %v2169
    %v2610 = vmul.f32 %v300, %v2170
    %v2611 = vmul.f32 %v301, %v2171
    %v2612 = vmul.f32 %v302, %v2172
    %v2613 = vmul.f32 %v303, %v2173
    %v2614 = vmul.f32 %v304, %v2174
    %v2615 = vmul.f32 %v305, %v2175
    %v2616 = vmul.f32 %v306, %v2176
    %v2617 = vmul.f32 %v307, %v2177
    %v2618 = vmul.f32 %v308, %v2178
    %v2619 = vmul.f32 %v309, %v2179
    %v2620 = vmul.f32 %v310, %v2180
    %v2621 = vmul.f32 %v311, %v2181
    %v2622 = vmul.f32 %v312, %v2182
    %v2623 = vmul.f32 %v313, %v2183
    %v2624 = vmul.f32 %v314, %v2184
    %v2625 = vmul.f32 %v315, %v2185
    %v2626 = vmul.f32 %v316, %v2186
    %v2627 = vmul.f32 %v317, %v2187
    %v2628 = vmul.f32 %v318, %v2188
    %v2629 = vmul.f32 %v319, %v2189
    %v2630 = vmul.f32 %v320, %v2190
    %v2631 = vmul.f32 %v321, %v2191
    %v2632 = vmul.f32 %v322, %v2192
    %v2633 = vmul.f32 %v323, %v2193
    %v2634 = vmul.f32 %v324, %v2194
    %v2635 = vmul.f32 %v325, %v2195
    %v2636 = vmul.f32 %v326, %v2196
    %v2637 = vmul.f32 %v327, %v2197
    %v2638 = vmul.f32 %v328, %v2198
    %v2639 = vmul.f32 %v329, %v2199
    %v2640 = vmul.f32 %v330, %v2200
    %v2641 = vmul.f32 %v331, %v2201
    %v2642 = vmul.f32 %v332, %v2202
    %v2643 = vmul.f32 %v333, %v2203
    %v2644 = vmul.f32 %v334, %v2204
    %v2645 = vmul.f32 %v335, %v2205
    %v2646 = vmul.f32 %v336, %v2206
    %v2647 = vmul.f32 %v337, %v2207
    %v2648 = vmul.f32 %v338, %v2208
    %v2649 = vmul.f32 %v339, %v2209
    %v2650 = vmul.f32 %v340, %v2210
    %v2651 = vmul.f32 %v341, %v2211
    %v2652 = vmul.f32 %v342, %v2212
    %v2653 = vmul.f32 %v343, %v2213
    %v2654 = vmul.f32 %v344, %v2214
    %v2655 = vmul.f32 %v345, %v2215
    %v2656 = vmul.f32 %v346, %v2216
    %v2657 = vmul.f32 %v347, %v2217
    %v2658 = vmul.f32 %v348, %v2218
    %v2659 = vmul.f32 %v349, %v2219
    %v2660 = vmul.f32 %v350, %v2220
    %v2661 = vmul.f32 %v351, %v2221
    %v2662 = vmul.f32 %v352, %v2222
    %v2663 = vmul.f32 %v353, %v2223
    %v2664 = vmul.f32 %v354, %v2224
    %v2665 = vmul.f32 %v355, %v2225
    %v2666 = vmul.f32 %v356, %v2226
    %v2667 = vmul.f32 %v357, %v2227
    %v2668 = vmul.f32 %v358, %v2228
    %v2669 = vmul.f32 %v359, %v2229
    %v2670 = vmul.f32 %v360, %v2230
    %v2671 = vmul.f32 %v361, %v2231
    %v2672 = vmul.f32 %v362, %v2232
    %v2673 = vmul.f32 %v363, %v2233
    %v2674 = vmul.f32 %v364, %v2234
    %v2675 = vmul.f32 %v365, %v2235
    %v2676 = vmul.f32 %v366, %v2236
    %v2677 = vmul.f32 %v367, %v2237
    %v2678 = vmul.f32 %v368, %v2238
    %v2679 = vmul.f32 %v369, %v2239
    %v2680 = vmul.f32 %v370, %v2240
    %v2681 = vmul.f32 %v371, %v2241
    %v2682 = vmul.f32 %v372, %v2242
    %v2683 = vmul.f32 %v373, %v2243
    %v2684 = vmul.f32 %v374, %v2244
    %v2685 = vmul.f32 %v375, %v2245
    %v2686 = vmul.f32 %v376, %v2246
    %v2687 = vmul.f32 %v377, %v2247
    %v2688 = vmul.f32 %v378, %v2248
    %v2689 = vmul.f32 %v379, %v2249
    %v2690 = vmul.f32 %v380, %v2250
    %v2691 = vmul.f32 %v381, %v2251
    %v2692 = vmul.f32 %v382, %v2252
    %v2693 = vmul.f32 %v383, %v2253
    %v2694 = vmul.f32 %v384, %v2254
    %v2695 = vmul.f32 %v385, %v2255
    %v2696 = vmul.f32 %v386, %v2256
    %v2697 = vmul.f32 %v387, %v2257
    %v2698 = vmul.f32 %v388, %v2258
    %v2699 = vmul.f32 %v389, %v2259
    %v2700 = vmul.f32 %v390, %v2260
    %v2701 = vmul.f32 %v391, %v2261
    %v2702 = vmul.f32 %v392, %v2262
    %v2703 = vmul.f32 %v393, %v2263
    %v2704 = vmul.f32 %v394, %v2264
    %v2705 = vmul.f32 %v395, %v2265
    %v2706 = vmul.f32 %v396, %v2266
    %v2707 = vmul.f32 %v397, %v2267
    %v2708 = vmul.f32 %v398, %v2268
    %v2709 = vmul.f32 %v399, %v2269
    %v2710 = vmul.f32 %v400, %v2270
    %v2711 = vmul.f32 %v401, %v2271
    %v2712 = vmul.f32 %v402, %v2272
    %v2713 = vmul.f32 %v403, %v2273
    %v2714 = vmul.f32 %v404, %v2274
    %v2715 = vmul.f32 %v405, %v2275
    %v2716 = vmul.f32 %v406, %v2276
    %v2717 = vmul.f32 %v407, %v2277
    %v2718 = vmul.f32 %v408, %v2278
    %v2719 = vmul.f32 %v409, %v2279
    %v2720 = vmul.f32 %v410, %v2280
    %v2721 = vmul.f32 %v411, %v2281
    %v2722 = vmul.f32 %v412, %v2282
    %v2723 = vmul.f32 %v413, %v2283
    %v2724 = vmul.f32 %v414, %v2284
    %v2725 = vmul.f32 %v415, %v2285
    %v2726 = vmul.f32 %v416, %v2286
    %v2727 = vmul.f32 %v417, %v2287
    %v2728 = vmul.f32 %v418, %v2288
    %v2729 = vmul.f32 %v419, %v2289
    %v2730 = vmul.f32 %v420, %v2290
    %v2731 = vmul.f32 %v421, %v2291
    %v2732 = vmul.f32 %v422, %v2292
    %v2733 = vmul.f32 %v423, %v2293
    %v2734 = vmul.f32 %v424, %v2294
    %v2735 = vmul.f32 %v425, %v2295
    %v2736 = vmul.f32 %v426, %v2296
    %v2737 = vmul.f32 %v427, %v2297
    %v2738 = vmul.f32 %v428, %v2298
    %v2739 = vmul.f32 %v429, %v2299
    %v2740 = vmul.f32 %v430, %v2300
    %v2741 = vmul.f32 %v431, %v2301
    %v2742 = vmul.f32 %v432, %v2302
    %v2743 = vmul.f32 %v433, %v2303
    %v2744 = vmul.f32 %v434, %v2304
    %v2745 = vmul.f32 %v435, %v2305
    %v2746 = vmul.f32 %v436, %v2306
    %v2747 = vmul.f32 %v437, %v2307
    %v2748 = vmul.f32 %v438, %v2308
    %v2749 = vmul.f32 %v439, %v2309
    %v2750 = vmul.f32 %v440, %v2310
    %v2751 = vmul.f32 %v441, %v2311
    %v2752 = vmul.f32 %v442, %v2312
    %v2753 = vmul.f32 %v443, %v2313
    %v2754 = vmul.f32 %v444, %v2314
    %v2755 = vmul.f32 %v445, %v2315
    %v2756 = vmul.f32 %v446, %v2316
    %v2757 = vmul.f32 %v447, %v2317
    %v2758 = vmul.f32 %v448, %v2318
    %v2759 = vmul.f32 %v449, %v2319
    %v2760 = vmul.f32 %v450, %v2320
    %v2761 = vmul.f32 %v451, %v2321
    %v2762 = vmul.f32 %v452, %v2322
    %v2763 = vmul.f32 %v453, %v2323
    %v2764 = vmul.f32 %v454, %v2324
    %v2765 = vmul.f32 %v455, %v2325
    %v2766 = vmul.f32 %v456, %v2326
    %v2767 = vmul.f32 %v457, %v2327
    %v2768 = vmul.f32 %v458, %v2328
    %v2769 = vmul.f32 %v459, %v2329
    %v2770 = vmul.f32 %v460, %v2330
    %v2771 = vmul.f32 %v461, %v2331
    %v2772 = vmul.f32 %v462, %v2332
    %v2773 = vmul.f32 %v463, %v2333
    %v2774 = vmul.f32 %v464, %v2334
    %v2775 = vmul.f32 %v465, %v2335
    %v2776 = vmul.f32 %v466, %v2336
    %v2777 = vmul.f32 %v467, %v2337
    %v2778 = vmul.f32 %v468, %v2338
    %v2779 = vmul.f32 %v469, %v2339
    %v2780 = vmul.f32 %v470, %v2340
    %v2781 = vmul.f32 %v471, %v2341
    %v2782 = vmul.f32 %v472, %v2342
    %v2783 = vmul.f32 %v473, %v2343
    %v2784 = vmul.f32 %v474, %v2344
    %v2785 = vmul.f32 %v475, %v2345
    %v2786 = vmul.f32 %v476, %v2346
    %v2787 = vmul.f32 %v477, %v2347
    %v2788 = vmul.f32 %v478, %v2348
    %v2789 = vmul.f32 %v479, %v2349
    %v2790 = vmul.f32 %v480, %v2350
    %v2791 = vmul.f32 %v481, %v2351
    %v2792 = vmul.f32 %v482, %v2352
    %v2793 = vmul.f32 %v483, %v2353
    %v2794 = vmul.f32 %v484, %v2354
    %v2795 = vmul.f32 %v485, %v2355
    %v2796 = vmul.f32 %v486, %v2356
    %v2797 = vmul.f32 %v487, %v2357
    %v2798 = vmul.f32 %v488, %v2358
    %v2799 = vmul.f32 %v489, %v2359
    %v2800 = vmul.f32 %v490, %v2360
    %v2801 = vmul.f32 %v491, %v2361
    %v2802 = vmul.f32 %v492, %v2362
    %v2803 = vmul.f32 %v493, %v2363
    %v2804 = vmul.f32 %v494, %v2364
    %v2805 = vmul.f32 %v495, %v2365
    %v2806 = vmul.f32 %v496, %v2366
    %v2807 = vmul.f32 %v497, %v2367
    %v2808 = vmul.f32 %v498, %v2368
    %v2809 = vmul.f32 %v499, %v2369
    %v2810 = vmul.f32 %v500, %v2370
    %v2811 = vmul.f32 %v501, %v2371
    %v2812 = vmul.f32 %v502, %v2372
    %v2813 = vmul.f32 %v503, %v2373
    %v2814 = vmul.f32 %v504, %v2374
    %v2815 = vmul.f32 %v505, %v2375
    %v2816 = vmul.f32 %v506, %v2376
    %v2817 = vmul.f32 %v507, %v2377
    %v2818 = vmul.f32 %v508, %v2378
    %v2819 = vmul.f32 %v509, %v2379
    %v2820 = vmul.f32 %v510, %v2380
    %v2821 = vmul.f32 %v511, %v2381
    %v2822 = vmul.f32 %v512, %v2382
    %v2823 = vmul.f32 %v513, %v2383
    %v2824 = vmul.f32 %v514, %v2384
    %v2825 = vmul.f32 %v515, %v2385
    %v2826 = vmul.f32 %v516, %v2386
    %v2827 = vmul.f32 %v517, %v2387
    %v2828 = vmul.f32 %v518, %v2388
    %v2829 = vmul.f32 %v519, %v2389
    %v2830 = vmul.f32 %v520, %v2390
    %v2831 = vmul.f32 %v521, %v2391
    %v2832 = vmul.f32 %v522, %v2392
    %v2833 = vmul.f32 %v523, %v2393
    %v2834 = vmul.f32 %v524, %v2394
    %v2835 = vmul.f32 %v525, %v2395
    %v2836 = vmul.f32 %v526, %v2396
    %v2837 = vmul.f32 %v527, %v2397
    %v2838 = vmul.f32 %v528, %v2398
    %v2839 = vmul.f32 %v529, %v2399
    %v2840 = vmul.f32 %v530, %v2400
    %v2841 = vmul.f32 %v531, %v2401
    %v2842 = vmul.f32 %v532, %v2402
    %v2843 = vmul.f32 %v533, %v2403
    %v2844 = vmul.f32 %v534, %v2404
    %v2845 = vmul.f32 %v535, %v2405
    %v2846 = vmul.f32 %v536, %v2406
    %v2847 = vmul.f32 %v537, %v2407
    %v2848 = vmul.f32 %v538, %v2408
    %v2849 = vmul.f32 %v539, %v2409
    %v2850 = vmul.f32 %v540, %v2410
    %v2851 = vmul.f32 %v541, %v2411
    %v2852 = vmul.f32 %v542, %v2412
    %v2853 = vmul.f32 %v543, %v2413
    %v2854 = vmul.f32 %v544, %v2414
    %v2855 = vmul.f32 %v545, %v2415
    %v2856 = vmul.f32 %v546, %v2416
    %v2857 = vmul.f32 %v547, %v2417
    %v2858 = vmul.f32 %v548, %v2418
    %v2859 = vmul.f32 %v549, %v2419
    %v2860 = vmul.f32 %v550, %v2420
    %v2861 = vmul.f32 %v551, %v2421
    %v2862 = vmul.f32 %v552, %v2422
    %v2863 = vmul.f32 %v553, %v2423
    %v2864 = vmul.f32 %v554, %v2424
    %v2865 = vmul.f32 %v555, %v2425
    %v2866 = vmul.f32 %v556, %v2426
    %v2867 = vmul.f32 %v557, %v2427
    %v2868 = vmul.f32 %v558, %v2428
    %v2869 = vmul.f32 %v559, %v2429
    %v2870 = vmul.f32 %v560, %v2430
    %v2871 = vmul.f32 %v561, %v2431
    %v2872 = vmul.f32 %v562, %v2432
    %v2873 = vmul.f32 %v563, %v2433
    %v2874 = vmul.f32 %v564, %v2434
    %v2875 = vmul.f32 %v565, %v2435
    %v2876 = vmul.f32 %v566, %v2436
    %v2877 = vmul.f32 %v567, %v2437
    %v2878 = vmul.f32 %v568, %v2438
    %v2879 = vmul.f32 %v569, %v2439
    %v2880 = vmul.f32 %v570, %v2440
    %v2881 = vmul.f32 %v571, %v2441
    %v2882 = vmul.f32 %v572, %v2442
    %v2883 = vmul.f32 %v573, %v2443
    %v2884 = vmul.f32 %v574, %v2444
    %v2885 = vmul.f32 %v575, %v2445
    %v2886 = vmul.f32 %v576, %v2446
    %v2887 = vmul.f32 %v577, %v2447
    %v2888 = vmul.f32 %v578, %v2448
    %v2889 = vmul.f32 %v579, %v2449
    %v2890 = vmul.f32 %v580, %v2450
    %v2891 = vmul.f32 %v581, %v2451
    %v2892 = vmul.f32 %v582, %v2452
    %v2893 = vmul.f32 %v583, %v2453
    %v2894 = vmul.f32 %v584, %v2454
    %v2895 = vmul.f32 %v585, %v2455
    %v2896 = vmul.f32 %v586, %v2456
    %v2897 = vmul.f32 %v587, %v2457
    %v2898 = vmul.f32 %v588, %v2458
    %v2899 = vmul.f32 %v589, %v2459
    %v2900 = vmul.f32 %v590, %v2460
    %v2901 = vmul.f32 %v591, %v2461
    %v2902 = vmul.f32 %v592, %v2462
    %v2903 = vmul.f32 %v593, %v2463
    %v2904 = vmul.f32 %v594, %v2464
    %v2905 = vmul.f32 %v595, %v2465
    %v2906 = vmul.f32 %v596, %v2466
    %v2907 = vmul.f32 %v597, %v2467
    %v2908 = vmul.f32 %v598, %v2468
    %v2909 = vmul.f32 %v599, %v2469
    %v2910 = vmul.f32 %v600, %v2470
    %v2911 = vmul.f32 %v601, %v2471
    %v2912 = vmul.f32 %v602, %v2472
    %v2913 = vmul.f32 %v603, %v2473
    %v2914 = vmul.f32 %v604, %v2474
    %v2915 = vmul.f32 %v605, %v2475
    %v2916 = vmul.f32 %v606, %v2476
    %v2917 = vmul.f32 %v607, %v2477
    %v2918 = vmul.f32 %v608, %v2478
    %v2919 = vmul.f32 %v609, %v2479
    %v2920 = vmul.f32 %v610, %v2480
    %v2921 = vmul.f32 %v611, %v2481
    %v2922 = vmul.f32 %v612, %v2482
    %v2923 = vmul.f32 %v613, %v2483
    %v2924 = vmul.f32 %v614, %v2484
    %v2925 = vmul.f32 %v615, %v2485
    %v2926 = vmul.f32 %v616, %v2486
    %v2927 = vmul.f32 %v617, %v2487
    %v2928 = vmul.f32 %v618, %v2488
    %v2929 = vmul.f32 %v619, %v2489
    %v2930 = vmul.f32 %v620, %v2490
    %v2931 = vmul.f32 %v621, %v2491
    %v2932 = vmul.f32 %v622, %v2492
    %v2933 = vmul.f32 %v623, %v2493
    %v2934 = vmul.f32 %v624, %v2494
    %v2935 = vmul.f32 %v625, %v2495
    %v2936 = vmul.f32 %v626, %v2496
    %v2937 = vmul.f32 %v627, %v2497
    %v2938 = vmul.f32 %v628, %v2498
    %v2939 = vmul.f32 %v629, %v2499
    %v2940 = vmul.f32 %v630, %v2500
    %v2941 = vmul.f32 %v631, %v2501
    %v2942 = vmul.f32 %v632, %v2502
    %v2943 = vmul.f32 %v633, %v2503
    %v2944 = vmul.f32 %v634, %v2504
    %v2945 = vmul.f32 %v635, %v2505
    %v2946 = vmul.f32 %v636, %v2506
    %v2947 = vmul.f32 %v637, %v2507
    %v2948 = vmul.f32 %v638, %v2508
    %v2949 = vmul.f32 %v639, %v2509
    %v2950 = vmul.f32 %v640, %v2510
    %v2951 = vmul.f32 %v641, %v2511
    %v2952 = vmul.f32 %v642, %v2512
    %v2953 = vmul.f32 %v643, %v2073
    %v2954 = vmul.f32 %v644, %v2074
    %v2955 = vmul.f32 %v645, %v2075
    %v2956 = vmul.f32 %v646, %v2076
    %v2957 = vmul.f32 %v647, %v2077
    %v2958 = vmul.f32 %v648, %v2078
    %v2959 = vmul.f32 %v649, %v2079
    %v2960 = vmul.f32 %v650, %v2080
    %v2961 = vmul.f32 %v651, %v2081
    %v2962 = vmul.f32 %v652, %v2082
    %v2963 = vmul.f32 %v653, %v2083
    %v2964 = vmul.f32 %v654, %v2084
    %v2965 = vmul.f32 %v655, %v2085
    %v2966 = vmul.f32 %v656, %v2086
    %v2967 = vmul.f32 %v657, %v2087
    %v2968 = vmul.f32 %v658, %v2088
    %v2969 = vmul.f32 %v659, %v2089
    %v2970 = vmul.f32 %v660, %v2090
    %v2971 = vmul.f32 %v661, %v2091
    %v2972 = vmul.f32 %v662, %v2092
    %v2973 = vmul.f32 %v663, %v2093
    %v2974 = vmul.f32 %v664, %v2094
    %v2975 = vmul.f32 %v665, %v2095
    %v2976 = vmul.f32 %v666, %v2096
    %v2977 = vmul.f32 %v667, %v2097
    %v2978 = vmul.f32 %v668, %v2098
    %v2979 = vmul.f32 %v669, %v2099
    %v2980 = vmul.f32 %v670, %v2100
    %v2981 = vmul.f32 %v671, %v2101
    %v2982 = vmul.f32 %v672, %v2102
    %v2983 = vmul.f32 %v673, %v2103
    %v2984 = vmul.f32 %v674, %v2104
    %v2985 = vmul.f32 %v675, %v2105
    %v2986 = vmul.f32 %v676, %v2106
    %v2987 = vmul.f32 %v677, %v2107
    %v2988 = vmul.f32 %v678, %v2108
    %v2989 = vmul.f32 %v679, %v2109
    %v2990 = vmul.f32 %v680, %v2110
    %v2991 = vmul.f32 %v681, %v2111
    %v2992 = vmul.f32 %v682, %v2112
    %v2993 = vmul.f32 %v683, %v2113
    %v2994 = vmul.f32 %v684, %v2114
    %v2995 = vmul.f32 %v685, %v2115
    %v2996 = vmul.f32 %v686, %v2116
    %v2997 = vmul.f32 %v687, %v2117
    %v2998 = vmul.f32 %v688, %v2118
    %v2999 = vmul.f32 %v689, %v2119
    %v3000 = vmul.f32 %v690, %v2120
    %v3001 = vmul.f32 %v691, %v2121
    %v3002 = vmul.f32 %v692, %v2122
    %v3003 = vmul.f32 %v693, %v2123
    %v3004 = vmul.f32 %v694, %v2124
    %v3005 = vmul.f32 %v695, %v2125
    %v3006 = vmul.f32 %v696, %v2126
    %v3007 = vmul.f32 %v697, %v2127
    %v3008 = vmul.f32 %v698, %v2128
    %v3009 = vmul.f32 %v699, %v2129
    %v3010 = vmul.f32 %v700, %v2130
    %v3011 = vmul.f32 %v701, %v2131
    %v3012 = vmul.f32 %v702, %v2132
    %v3013 = vmul.f32 %v703, %v2133
    %v3014 = vmul.f32 %v704, %v2134
    %v3015 = vmul.f32 %v705, %v2135
    %v3016 = vmul.f32 %v706, %v2136
    %v3017 = vmul.f32 %v707, %v2137
    %v3018 = vmul.f32 %v708, %v2138
    %v3019 = vmul.f32 %v709, %v2139
    %v3020 = vmul.f32 %v710, %v2140
    %v3021 = vmul.f32 %v711, %v2141
    %v3022 = vmul.f32 %v712, %v2142
    %v3023 = vmul.f32 %v713, %v2143
    %v3024 = vmul.f32 %v714, %v2144
    %v3025 = vmul.f32 %v715, %v2145
    %v3026 = vmul.f32 %v716, %v2146
    %v3027 = vmul.f32 %v717, %v2147
    %v3028 = vmul.f32 %v718, %v2148
    %v3029 = vmul.f32 %v719, %v2149
    %v3030 = vmul.f32 %v720, %v2150
    %v3031 = vmul.f32 %v721, %v2151
    %v3032 = vmul.f32 %v722, %v2152
    %v3033 = vmul.f32 %v723, %v2153
    %v3034 = vmul.f32 %v724, %v2154
    %v3035 = vmul.f32 %v725, %v2155
    %v3036 = vmul.f32 %v726, %v2156
    %v3037 = vmul.f32 %v727, %v2157
    %v3038 = vmul.f32 %v728, %v2158
    %v3039 = vmul.f32 %v729, %v2159
    %v3040 = vmul.f32 %v730, %v2160
    %v3041 = vmul.f32 %v731, %v2161
    %v3042 = vmul.f32 %v732, %v2162
    %v3043 = vmul.f32 %v733, %v2163
    %v3044 = vmul.f32 %v734, %v2164
    %v3045 = vmul.f32 %v735, %v2165
    %v3046 = vmul.f32 %v736, %v2166
    %v3047 = vmul.f32 %v737, %v2167
    %v3048 = vmul.f32 %v738, %v2168
    %v3049 = vmul.f32 %v739, %v2169
    %v3050 = vmul.f32 %v740, %v2170
    %v3051 = vmul.f32 %v741, %v2171
    %v3052 = vmul.f32 %v742, %v2172
    %v3053 = vmul.f32 %v743, %v2173
    %v3054 = vmul.f32 %v744, %v2174
    %v3055 = vmul.f32 %v745, %v2175
    %v3056 = vmul.f32 %v746, %v2176
    %v3057 = vmul.f32 %v747, %v2177
    %v3058 = vmul.f32 %v748, %v2178
    %v3059 = vmul.f32 %v749, %v2179
    %v3060 = vmul.f32 %v750, %v2180
    %v3061 = vmul.f32 %v751, %v2181
    %v3062 = vmul.f32 %v752, %v2182
    %v3063 = vmul.f32 %v753, %v2183
    %v3064 = vmul.f32 %v754, %v2184
    %v3065 = vmul.f32 %v755, %v2185
    %v3066 = vmul.f32 %v756, %v2186
    %v3067 = vmul.f32 %v757, %v2187
    %v3068 = vmul.f32 %v758, %v2188
    %v3069 = vmul.f32 %v759, %v2189
    %v3070 = vmul.f32 %v760, %v2190
    %v3071 = vmul.f32 %v761, %v2191
    %v3072 = vmul.f32 %v762, %v2192
    %v3073 = vmul.f32 %v763, %v2193
    %v3074 = vmul.f32 %v764, %v2194
    %v3075 = vmul.f32 %v765, %v2195
    %v3076 = vmul.f32 %v766, %v2196
    %v3077 = vmul.f32 %v767, %v2197
    %v3078 = vmul.f32 %v768, %v2198
    %v3079 = vmul.f32 %v769, %v2199
    %v3080 = vmul.f32 %v770, %v2200
    %v3081 = vmul.f32 %v771, %v2201
    %v3082 = vmul.f32 %v772, %v2202
    %v3083 = vmul.f32 %v773, %v2203
    %v3084 = vmul.f32 %v774, %v2204
    %v3085 = vmul.f32 %v775, %v2205
    %v3086 = vmul.f32 %v776, %v2206
    %v3087 = vmul.f32 %v777, %v2207
    %v3088 = vmul.f32 %v778, %v2208
    %v3089 = vmul.f32 %v779, %v2209
    %v3090 = vmul.f32 %v780, %v2210
    %v3091 = vmul.f32 %v781, %v2211
    %v3092 = vmul.f32 %v782, %v2212
    %v3093 = vmul.f32 %v783, %v2213
    %v3094 = vmul.f32 %v784, %v2214
    %v3095 = vmul.f32 %v785, %v2215
    %v3096 = vmul.f32 %v786, %v2216
    %v3097 = vmul.f32 %v787, %v2217
    %v3098 = vmul.f32 %v788, %v2218
    %v3099 = vmul.f32 %v789, %v2219
    %v3100 = vmul.f32 %v790, %v2220
    %v3101 = vmul.f32 %v791, %v2221
    %v3102 = vmul.f32 %v792, %v2222
    %v3103 = vmul.f32 %v793, %v2223
    %v3104 = vmul.f32 %v794, %v2224
    %v3105 = vmul.f32 %v795, %v2225
    %v3106 = vmul.f32 %v796, %v2226
    %v3107 = vmul.f32 %v797, %v2227
    %v3108 = vmul.f32 %v798, %v2228
    %v3109 = vmul.f32 %v799, %v2229
    %v3110 = vmul.f32 %v800, %v2230
    %v3111 = vmul.f32 %v801, %v2231
    %v3112 = vmul.f32 %v802, %v2232
    %v3113 = vmul.f32 %v803, %v2233
    %v3114 = vmul.f32 %v804, %v2234
    %v3115 = vmul.f32 %v805, %v2235
    %v3116 = vmul.f32 %v806, %v2236
    %v3117 = vmul.f32 %v807, %v2237
    %v3118 = vmul.f32 %v808, %v2238
    %v3119 = vmul.f32 %v809, %v2239
    %v3120 = vmul.f32 %v810, %v2240
    %v3121 = vmul.f32 %v811, %v2241
    %v3122 = vmul.f32 %v812, %v2242
    %v3123 = vmul.f32 %v813, %v2243
    %v3124 = vmul.f32 %v814, %v2244
    %v3125 = vmul.f32 %v815, %v2245
    %v3126 = vmul.f32 %v816, %v2246
    %v3127 = vmul.f32 %v817, %v2247
    %v3128 = vmul.f32 %v818, %v2248
    %v3129 = vmul.f32 %v819, %v2249
    %v3130 = vmul.f32 %v820, %v2250
    %v3131 = vmul.f32 %v821, %v2251
    %v3132 = vmul.f32 %v822, %v2252
    %v3133 = vmul.f32 %v823, %v2253
    %v3134 = vmul.f32 %v824, %v2254
    %v3135 = vmul.f32 %v825, %v2255
    %v3136 = vmul.f32 %v826, %v2256
    %v3137 = vmul.f32 %v827, %v2257
    %v3138 = vmul.f32 %v828, %v2258
    %v3139 = vmul.f32 %v829, %v2259
    %v3140 = vmul.f32 %v830, %v2260
    %v3141 = vmul.f32 %v831, %v2261
    %v3142 = vmul.f32 %v832, %v2262
    %v3143 = vmul.f32 %v833, %v2263
    %v3144 = vmul.f32 %v834, %v2264
    %v3145 = vmul.f32 %v835, %v2265
    %v3146 = vmul.f32 %v836, %v2266
    %v3147 = vmul.f32 %v837, %v2267
    %v3148 = vmul.f32 %v838, %v2268
    %v3149 = vmul.f32 %v839, %v2269
    %v3150 = vmul.f32 %v840, %v2270
    %v3151 = vmul.f32 %v841, %v2271
    %v3152 = vmul.f32 %v842, %v2272
    %v3153 = vmul.f32 %v843, %v2273
    %v3154 = vmul.f32 %v844, %v2274
    %v3155 = vmul.f32 %v845, %v2275
    %v3156 = vmul.f32 %v846, %v2276
    %v3157 = vmul.f32 %v847, %v2277
    %v3158 = vmul.f32 %v848, %v2278
    %v3159 = vmul.f32 %v849, %v2279
    %v3160 = vmul.f32 %v850, %v2280
    %v3161 = vmul.f32 %v851, %v2281
    %v3162 = vmul.f32 %v852, %v2282
    %v3163 = vmul.f32 %v853, %v2283
    %v3164 = vmul.f32 %v854, %v2284
    %v3165 = vmul.f32 %v855, %v2285
    %v3166 = vmul.f32 %v856, %v2286
    %v3167 = vmul.f32 %v857, %v2287
    %v3168 = vmul.f32 %v858, %v2288
    %v3169 = vmul.f32 %v859, %v2289
    %v3170 = vmul.f32 %v860, %v2290
    %v3171 = vmul.f32 %v861, %v2291
    %v3172 = vmul.f32 %v862, %v2292
    %v3173 = vmul.f32 %v863, %v2293
    %v3174 = vmul.f32 %v864, %v2294
    %v3175 = vmul.f32 %v865, %v2295
    %v3176 = vmul.f32 %v866, %v2296
    %v3177 = vmul.f32 %v867, %v2297
    %v3178 = vmul.f32 %v868, %v2298
    %v3179 = vmul.f32 %v869, %v2299
    %v3180 = vmul.f32 %v870, %v2300
    %v3181 = vmul.f32 %v871, %v2301
    %v3182 = vmul.f32 %v872, %v2302
    %v3183 = vmul.f32 %v873, %v2303
    %v3184 = vmul.f32 %v874, %v2304
    %v3185 = vmul.f32 %v875, %v2305
    %v3186 = vmul.f32 %v876, %v2306
    %v3187 = vmul.f32 %v877, %v2307
    %v3188 = vmul.f32 %v878, %v2308
    %v3189 = vmul.f32 %v879, %v2309
    %v3190 = vmul.f32 %v880, %v2310
    %v3191 = vmul.f32 %v881, %v2311
    %v3192 = vmul.f32 %v882, %v2312
    %v3193 = vmul.f32 %v883, %v2313
    %v3194 = vmul.f32 %v884, %v2314
    %v3195 = vmul.f32 %v885, %v2315
    %v3196 = vmul.f32 %v886, %v2316
    %v3197 = vmul.f32 %v887, %v2317
    %v3198 = vmul.f32 %v888, %v2318
    %v3199 = vmul.f32 %v889, %v2319
    %v3200 = vmul.f32 %v890, %v2320
    %v3201 = vmul.f32 %v891, %v2321
    %v3202 = vmul.f32 %v892, %v2322
    %v3203 = vmul.f32 %v893, %v2323
    %v3204 = vmul.f32 %v894, %v2324
    %v3205 = vmul.f32 %v895, %v2325
    %v3206 = vmul.f32 %v896, %v2326
    %v3207 = vmul.f32 %v897, %v2327
    %v3208 = vmul.f32 %v898, %v2328
    %v3209 = vmul.f32 %v899, %v2329
    %v3210 = vmul.f32 %v900, %v2330
    %v3211 = vmul.f32 %v901, %v2331
    %v3212 = vmul.f32 %v902, %v2332
    %v3213 = vmul.f32 %v903, %v2333
    %v3214 = vmul.f32 %v904, %v2334
    %v3215 = vmul.f32 %v905, %v2335
    %v3216 = vmul.f32 %v906, %v2336
    %v3217 = vmul.f32 %v907, %v2337
    %v3218 = vmul.f32 %v908, %v2338
    %v3219 = vmul.f32 %v909, %v2339
    %v3220 = vmul.f32 %v910, %v2340
    %v3221 = vmul.f32 %v911, %v2341
    %v3222 = vmul.f32 %v912, %v2342
    %v3223 = vmul.f32 %v913, %v2343
    %v3224 = vmul.f32 %v914, %v2344
    %v3225 = vmul.f32 %v915, %v2345
    %v3226 = vmul.f32 %v916, %v2346
    %v3227 = vmul.f32 %v917, %v2347
    %v3228 = vmul.f32 %v918, %v2348
    %v3229 = vmul.f32 %v919, %v2349
    %v3230 = vmul.f32 %v920, %v2350
    %v3231 = vmul.f32 %v921, %v2351
    %v3232 = vmul.f32 %v922, %v2352
    %v3233 = vmul.f32 %v923, %v2353
    %v3234 = vmul.f32 %v924, %v2354
    %v3235 = vmul.f32 %v925, %v2355
    %v3236 = vmul.f32 %v926, %v2356
    %v3237 = vmul.f32 %v927, %v2357
    %v3238 = vmul.f32 %v928, %v2358
    %v3239 = vmul.f32 %v929, %v2359
    %v3240 = vmul.f32 %v930, %v2360
    %v3241 = vmul.f32 %v931, %v2361
    %v3242 = vmul.f32 %v932, %v2362
    %v3243 = vmul.f32 %v933, %v2363
    %v3244 = vmul.f32 %v934, %v2364
    %v3245 = vmul.f32 %v935, %v2365
    %v3246 = vmul.f32 %v936, %v2366
    %v3247 = vmul.f32 %v937, %v2367
    %v3248 = vmul.f32 %v938, %v2368
    %v3249 = vmul.f32 %v939, %v2369
    %v3250 = vmul.f32 %v940, %v2370
    %v3251 = vmul.f32 %v941, %v2371
    %v3252 = vmul.f32 %v942, %v2372
    %v3253 = vmul.f32 %v943, %v2373
    %v3254 = vmul.f32 %v944, %v2374
    %v3255 = vmul.f32 %v945, %v2375
    %v3256 = vmul.f32 %v946, %v2376
    %v3257 = vmul.f32 %v947, %v2377
    %v3258 = vmul.f32 %v948, %v2378
    %v3259 = vmul.f32 %v949, %v2379
    %v3260 = vmul.f32 %v950, %v2380
    %v3261 = vmul.f32 %v951, %v2381
    %v3262 = vmul.f32 %v952, %v2382
    %v3263 = vmul.f32 %v953, %v2383
    %v3264 = vmul.f32 %v954, %v2384
    %v3265 = vmul.f32 %v955, %v2385
    %v3266 = vmul.f32 %v956, %v2386
    %v3267 = vmul.f32 %v957, %v2387
    %v3268 = vmul.f32 %v958, %v2388
    %v3269 = vmul.f32 %v959, %v2389
    %v3270 = vmul.f32 %v960, %v2390
    %v3271 = vmul.f32 %v961, %v2391
    %v3272 = vmul.f32 %v962, %v2392
    %v3273 = vmul.f32 %v963, %v2393
    %v3274 = vmul.f32 %v964, %v2394
    %v3275 = vmul.f32 %v965, %v2395
    %v3276 = vmul.f32 %v966, %v2396
    %v3277 = vmul.f32 %v967, %v2397
    %v3278 = vmul.f32 %v968, %v2398
    %v3279 = vmul.f32 %v969, %v2399
    %v3280 = vmul.f32 %v970, %v2400
    %v3281 = vmul.f32 %v971, %v2401
    %v3282 = vmul.f32 %v972, %v2402
    %v3283 = vmul.f32 %v973, %v2403
    %v3284 = vmul.f32 %v974, %v2404
    %v3285 = vmul.f32 %v975, %v2405
    %v3286 = vmul.f32 %v976, %v2406
    %v3287 = vmul.f32 %v977, %v2407
    %v3288 = vmul.f32 %v978, %v2408
    %v3289 = vmul.f32 %v979, %v2409
    %v3290 = vmul.f32 %v980, %v2410
    %v3291 = vmul.f32 %v981, %v2411
    %v3292 = vmul.f32 %v982, %v2412
    %v3293 = vmul.f32 %v983, %v2413
    %v3294 = vmul.f32 %v984, %v2414
    %v3295 = vmul.f32 %v985, %v2415
    %v3296 = vmul.f32 %v986, %v2416
    %v3297 = vmul.f32 %v987, %v2417
    %v3298 = vmul.f32 %v988, %v2418
    %v3299 = vmul.f32 %v989, %v2419
    %v3300 = vmul.f32 %v990, %v2420
    %v3301 = vmul.f32 %v991, %v2421
    %v3302 = vmul.f32 %v992, %v2422
    %v3303 = vmul.f32 %v993, %v2423
    %v3304 = vmul.f32 %v994, %v2424
    %v3305 = vmul.f32 %v995, %v2425
    %v3306 = vmul.f32 %v996, %v2426
    %v3307 = vmul.f32 %v997, %v2427
    %v3308 = vmul.f32 %v998, %v2428
    %v3309 = vmul.f32 %v999, %v2429
    %v3310 = vmul.f32 %v1000, %v2430
    %v3311 = vmul.f32 %v1001, %v2431
    %v3312 = vmul.f32 %v1002, %v2432
    %v3313 = vmul.f32 %v1003, %v2433
    %v3314 = vmul.f32 %v1004, %v2434
    %v3315 = vmul.f32 %v1005, %v2435
    %v3316 = vmul.f32 %v1006, %v2436
    %v3317 = vmul.f32 %v1007, %v2437
    %v3318 = vmul.f32 %v1008, %v2438
    %v3319 = vmul.f32 %v1009, %v2439
    %v3320 = vmul.f32 %v1010, %v2440
    %v3321 = vmul.f32 %v1011, %v2441
    %v3322 = vmul.f32 %v1012, %v2442
    %v3323 = vmul.f32 %v1013, %v2443
    %v3324 = vmul.f32 %v1014, %v2444
    %v3325 = vmul.f32 %v1015, %v2445
    %v3326 = vmul.f32 %v1016, %v2446
    %v3327 = vmul.f32 %v1017, %v2447
    %v3328 = vmul.f32 %v1018, %v2448
    %v3329 = vmul.f32 %v1019, %v2449
    %v3330 = vmul.f32 %v1020, %v2450
    %v3331 = vmul.f32 %v1021, %v2451
    %v3332 = vmul.f32 %v1022, %v2452
    %v3333 = vmul.f32 %v1023, %v2453
    %v3334 = vmul.f32 %v1024, %v2454
    %v3335 = vmul.f32 %v1025, %v2455
    %v3336 = vmul.f32 %v1026, %v2456
    %v3337 = vmul.f32 %v1027, %v2457
    %v3338 = vmul.f32 %v1028, %v2458
    %v3339 = vmul.f32 %v1029, %v2459
    %v3340 = vmul.f32 %v1030, %v2460
    %v3341 = vmul.f32 %v1031, %v2461
    %v3342 = vmul.f32 %v1032, %v2462
    %v3343 = vmul.f32 %v1033, %v2463
    %v3344 = vmul.f32 %v1034, %v2464
    %v3345 = vmul.f32 %v1035, %v2465
    %v3346 = vmul.f32 %v1036, %v2466
    %v3347 = vmul.f32 %v1037, %v2467
    %v3348 = vmul.f32 %v1038, %v2468
    %v3349 = vmul.f32 %v1039, %v2469
    %v3350 = vmul.f32 %v1040, %v2470
    %v3351 = vmul.f32 %v1041, %v2471
    %v3352 = vmul.f32 %v1042, %v2472
    %v3353 = vmul.f32 %v1043, %v2473
    %v3354 = vmul.f32 %v1044, %v2474
    %v3355 = vmul.f32 %v1045, %v2475
    %v3356 = vmul.f32 %v1046, %v2476
    %v3357 = vmul.f32 %v1047, %v2477
    %v3358 = vmul.f32 %v1048, %v2478
    %v3359 = vmul.f32 %v1049, %v2479
    %v3360 = vmul.f32 %v1050, %v2480
    %v3361 = vmul.f32 %v1051, %v2481
    %v3362 = vmul.f32 %v1052, %v2482
    %v3363 = vmul.f32 %v1053, %v2483
    %v3364 = vmul.f32 %v1054, %v2484
    %v3365 = vmul.f32 %v1055, %v2485
    %v3366 = vmul.f32 %v1056, %v2486
    %v3367 = vmul.f32 %v1057, %v2487
    %v3368 = vmul.f32 %v1058, %v2488
    %v3369 = vmul.f32 %v1059, %v2489
    %v3370 = vmul.f32 %v1060, %v2490
    %v3371 = vmul.f32 %v1061, %v2491
    %v3372 = vmul.f32 %v1062, %v2492
    %v3373 = vmul.f32 %v1063, %v2493
    %v3374 = vmul.f32 %v1064, %v2494
    %v3375 = vmul.f32 %v1065, %v2495
    %v3376 = vmul.f32 %v1066, %v2496
    %v3377 = vmul.f32 %v1067, %v2497
    %v3378 = vmul.f32 %v1068, %v2498
    %v3379 = vmul.f32 %v1069, %v2499
    %v3380 = vmul.f32 %v1070, %v2500
    %v3381 = vmul.f32 %v1071, %v2501
    %v3382 = vmul.f32 %v1072, %v2502
    %v3383 = vmul.f32 %v1073, %v2503
    %v3384 = vmul.f32 %v1074, %v2504
    %v3385 = vmul.f32 %v1075, %v2505
    %v3386 = vmul.f32 %v1076, %v2506
    %v3387 = vmul.f32 %v1077, %v2507
    %v3388 = vmul.f32 %v1078, %v2508
    %v3389 = vmul.f32 %v1079, %v2509
    %v3390 = vmul.f32 %v1080, %v2510
    %v3391 = vmul.f32 %v1081, %v2511
    %v3392 = vmul.f32 %v1082, %v2512
    %v3393 = vadd.f32 %v2513, %v2514
    %v3394 = vadd.f32 %v3393, %v2515
    %v3395 = vadd.f32 %v3394, %v2516
    %v3396 = vadd.f32 %v3395, %v2517
    %v3397 = vadd.f32 %v3396, %v2518
    %v3398 = vadd.f32 %v3397, %v2519
    %v3399 = vadd.f32 %v3398, %v2520
    %v3400 = vadd.f32 %v3399, %v2521
    %v3401 = vadd.f32 %v3400, %v2522
    %v3402 = vadd.f32 %v3401, %v2523
    %v3403 = vadd.f32 %v3402, %v2524
    %v3404 = vadd.f32 %v3403, %v2525
    %v3405 = vadd.f32 %v3404, %v2526
    %v3406 = vadd.f32 %v3405, %v2527
    %v3407 = vadd.f32 %v3406, %v2528
    %v3408 = vadd.f32 %v3407, %v2529
    %v3409 = vadd.f32 %v3408, %v2530
    %v3410 = vadd.f32 %v3409, %v2531
    %v3411 = vadd.f32 %v3410, %v2532
    %v3412 = vadd.f32 %v3411, %v2533
    %v3413 = vadd.f32 %v3412, %v2534
    %v3414 = vadd.f32 %v3413, %v2535
    %v3415 = vadd.f32 %v3414, %v2536
    %v3416 = vadd.f32 %v3415, %v2537
    %v3417 = vadd.f32 %v3416, %v2538
    %v3418 = vadd.f32 %v3417, %v2539
    %v3419 = vadd.f32 %v3418, %v2540
    %v3420 = vadd.f32 %v3419, %v2541
    %v3421 = vadd.f32 %v3420, %v2542
    %v3422 = vadd.f32 %v3421, %v2543
    %v3423 = vadd.f32 %v3422, %v2544
    %v3424 = vadd.f32 %v3423, %v2545
    %v3425 = vadd.f32 %v3424, %v2546
    %v3426 = vadd.f32 %v3425, %v2547
    %v3427 = vadd.f32 %v3426, %v2548
    %v3428 = vadd.f32 %v3427, %v2549
    %v3429 = vadd.f32 %v3428, %v2550
    %v3430 = vadd.f32 %v3429, %v2551
    %v3431 = vadd.f32 %v3430, %v2552
    %v3432 = vadd.f32 %v3431, %v2553
    %v3433 = vadd.f32 %v3432, %v2554
    %v3434 = vadd.f32 %v3433, %v2555
    %v3435 = vadd.f32 %v3434, %v2556
    %v3436 = vadd.f32 %v3435, %v2557
    %v3437 = vadd.f32 %v3436, %v2558
    %v3438 = vadd.f32 %v3437, %v2559
    %v3439 = vadd.f32 %v3438, %v2560
    %v3440 = vadd.f32 %v3439, %v2561
    %v3441 = vadd.f32 %v3440, %v2562
    %v3442 = vadd.f32 %v3441, %v2563
    %v3443 = vadd.f32 %v3442, %v2564
    %v3444 = vadd.f32 %v3443, %v2565
    %v3445 = vadd.f32 %v3444, %v2566
    %v3446 = vadd.f32 %v3445, %v2567
    %v3447 = vadd.f32 %v3446, %v2568
    %v3448 = vadd.f32 %v3447, %v2569
    %v3449 = vadd.f32 %v3448, %v2570
    %v3450 = vadd.f32 %v3449, %v2571
    %v3451 = vadd.f32 %v3450, %v2572
    %v3452 = vadd.f32 %v3451, %v2573
    %v3453 = vadd.f32 %v3452, %v2574
    %v3454 = vadd.f32 %v3453, %v2575
    %v3455 = vadd.f32 %v3454, %v2576
    %v3456 = vadd.f32 %v3455, %v2577
    %v3457 = vadd.f32 %v3456, %v2578
    %v3458 = vadd.f32 %v3457, %v2579
    %v3459 = vadd.f32 %v3458, %v2580
    %v3460 = vadd.f32 %v3459, %v2581
    %v3461 = vadd.f32 %v3460, %v2582
    %v3462 = vadd.f32 %v3461, %v2583
    %v3463 = vadd.f32 %v3462, %v2584
    %v3464 = vadd.f32 %v3463, %v2585
    %v3465 = vadd.f32 %v3464, %v2586
    %v3466 = vadd.f32 %v3465, %v2587
    %v3467 = vadd.f32 %v3466, %v2588
    %v3468 = vadd.f32 %v3467, %v2589
    %v3469 = vadd.f32 %v3468, %v2590
    %v3470 = vadd.f32 %v3469, %v2591
    %v3471 = vadd.f32 %v3470, %v2592
    %v3472 = vadd.f32 %v3471, %v2593
    %v3473 = vadd.f32 %v3472, %v2594
    %v3474 = vadd.f32 %v3473, %v2595
    %v3475 = vadd.f32 %v3474, %v2596
    %v3476 = vadd.f32 %v3475, %v2597
    %v3477 = vadd.f32 %v3476, %v2598
    %v3478 = vadd.f32 %v3477, %v2599
    %v3479 = vadd.f32 %v3478, %v2600
    %v3480 = vadd.f32 %v3479, %v2601
    %v3481 = vadd.f32 %v3480, %v2602
    %v3482 = vadd.f32 %v3481, %v2603
    %v3483 = vadd.f32 %v3482, %v2604
    %v3484 = vadd.f32 %v3483, %v2605
    %v3485 = vadd.f32 %v3484, %v2606
    %v3486 = vadd.f32 %v3485, %v2607
    %v3487 = vadd.f32 %v3486, %v2608
    %v3488 = vadd.f32 %v3487, %v2609
    %v3489 = vadd.f32 %v3488, %v2610
    %v3490 = vadd.f32 %v3489, %v2611
    %v3491 = vadd.f32 %v3490, %v2612
    %v3492 = vadd.f32 %v3491, %v2613
    %v3493 = vadd.f32 %v3492, %v2614
    %v3494 = vadd.f32 %v3493, %v2615
    %v3495 = vadd.f32 %v3494, %v2616
    %v3496 = vadd.f32 %v3495, %v2617
    %v3497 = vadd.f32 %v3496, %v2618
    %v3498 = vadd.f32 %v3497, %v2619
    %v3499 = vadd.f32 %v3498, %v2620
    %v3500 = vadd.f32 %v3499, %v2621
    %v3501 = vadd.f32 %v3500, %v2622
    %v3502 = vadd.f32 %v3501, %v2623
    %v3503 = vadd.f32 %v3502, %v2624
    %v3504 = vadd.f32 %v3503, %v2625
    %v3505 = vadd.f32 %v3504, %v2626
    %v3506 = vadd.f32 %v3505, %v2627
    %v3507 = vadd.f32 %v3506, %v2628
    %v3508 = vadd.f32 %v3507, %v2629
    %v3509 = vadd.f32 %v3508, %v2630
    %v3510 = vadd.f32 %v3509, %v2631
    %v3511 = vadd.f32 %v3510, %v2632
    %v3512 = vadd.f32 %v3511, %v2633
    %v3513 = vadd.f32 %v3512, %v2634
    %v3514 = vadd.f32 %v3513, %v2635
    %v3515 = vadd.f32 %v3514, %v2636
    %v3516 = vadd.f32 %v3515, %v2637
    %v3517 = vadd.f32 %v3516, %v2638
    %v3518 = vadd.f32 %v3517, %v2639
    %v3519 = vadd.f32 %v3518, %v2640
    %v3520 = vadd.f32 %v3519, %v2641
    %v3521 = vadd.f32 %v3520, %v2642
    %v3522 = vadd.f32 %v3521, %v2643
    %v3523 = vadd.f32 %v3522, %v2644
    %v3524 = vadd.f32 %v3523, %v2645
    %v3525 = vadd.f32 %v3524, %v2646
    %v3526 = vadd.f32 %v3525, %v2647
    %v3527 = vadd.f32 %v3526, %v2648
    %v3528 = vadd.f32 %v3527, %v2649
    %v3529 = vadd.f32 %v3528, %v2650
    %v3530 = vadd.f32 %v3529, %v2651
    %v3531 = vadd.f32 %v3530, %v2652
    %v3532 = vadd.f32 %v3531, %v2653
    %v3533 = vadd.f32 %v3532, %v2654
    %v3534 = vadd.f32 %v3533, %v2655
    %v3535 = vadd.f32 %v3534, %v2656
    %v3536 = vadd.f32 %v3535, %v2657
    %v3537 = vadd.f32 %v3536, %v2658
    %v3538 = vadd.f32 %v3537, %v2659
    %v3539 = vadd.f32 %v3538, %v2660
    %v3540 = vadd.f32 %v3539, %v2661
    %v3541 = vadd.f32 %v3540, %v2662
    %v3542 = vadd.f32 %v3541, %v2663
    %v3543 = vadd.f32 %v3542, %v2664
    %v3544 = vadd.f32 %v3543, %v2665
    %v3545 = vadd.f32 %v3544, %v2666
    %v3546 = vadd.f32 %v3545, %v2667
    %v3547 = vadd.f32 %v3546, %v2668
    %v3548 = vadd.f32 %v3547, %v2669
    %v3549 = vadd.f32 %v3548, %v2670
    %v3550 = vadd.f32 %v3549, %v2671
    %v3551 = vadd.f32 %v3550, %v2672
    %v3552 = vadd.f32 %v3551, %v2673
    %v3553 = vadd.f32 %v3552, %v2674
    %v3554 = vadd.f32 %v3553, %v2675
    %v3555 = vadd.f32 %v3554, %v2676
    %v3556 = vadd.f32 %v3555, %v2677
    %v3557 = vadd.f32 %v3556, %v2678
    %v3558 = vadd.f32 %v3557, %v2679
    %v3559 = vadd.f32 %v3558, %v2680
    %v3560 = vadd.f32 %v3559, %v2681
    %v3561 = vadd.f32 %v3560, %v2682
    %v3562 = vadd.f32 %v3561, %v2683
    %v3563 = vadd.f32 %v3562, %v2684
    %v3564 = vadd.f32 %v3563, %v2685
    %v3565 = vadd.f32 %v3564, %v2686
    %v3566 = vadd.f32 %v3565, %v2687
    %v3567 = vadd.f32 %v3566, %v2688
    %v3568 = vadd.f32 %v3567, %v2689
    %v3569 = vadd.f32 %v3568, %v2690
    %v3570 = vadd.f32 %v3569, %v2691
    %v3571 = vadd.f32 %v3570, %v2692
    %v3572 = vadd.f32 %v3571, %v2693
    %v3573 = vadd.f32 %v3572, %v2694
    %v3574 = vadd.f32 %v3573, %v2695
    %v3575 = vadd.f32 %v3574, %v2696
    %v3576 = vadd.f32 %v3575, %v2697
    %v3577 = vadd.f32 %v3576, %v2698
    %v3578 = vadd.f32 %v3577, %v2699
    %v3579 = vadd.f32 %v3578, %v2700
    %v3580 = vadd.f32 %v3579, %v2701
    %v3581 = vadd.f32 %v3580, %v2702
    %v3582 = vadd.f32 %v3581, %v2703
    %v3583 = vadd.f32 %v3582, %v2704
    %v3584 = vadd.f32 %v3583, %v2705
    %v3585 = vadd.f32 %v3584, %v2706
    %v3586 = vadd.f32 %v3585, %v2707
    %v3587 = vadd.f32 %v3586, %v2708
    %v3588 = vadd.f32 %v3587, %v2709
    %v3589 = vadd.f32 %v3588, %v2710
    %v3590 = vadd.f32 %v3589, %v2711
    %v3591 = vadd.f32 %v3590, %v2712
    %v3592 = vadd.f32 %v3591, %v2713
    %v3593 = vadd.f32 %v3592, %v2714
    %v3594 = vadd.f32 %v3593, %v2715
    %v3595 = vadd.f32 %v3594, %v2716
    %v3596 = vadd.f32 %v3595, %v2717
    %v3597 = vadd.f32 %v3596, %v2718
    %v3598 = vadd.f32 %v3597, %v2719
    %v3599 = vadd.f32 %v3598, %v2720
    %v3600 = vadd.f32 %v3599, %v2721
    %v3601 = vadd.f32 %v3600, %v2722
    %v3602 = vadd.f32 %v3601, %v2723
    %v3603 = vadd.f32 %v3602, %v2724
    %v3604 = vadd.f32 %v3603, %v2725
    %v3605 = vadd.f32 %v3604, %v2726
    %v3606 = vadd.f32 %v3605, %v2727
    %v3607 = vadd.f32 %v3606, %v2728
    %v3608 = vadd.f32 %v3607, %v2729
    %v3609 = vadd.f32 %v3608, %v2730
    %v3610 = vadd.f32 %v3609, %v2731
    %v3611 = vadd.f32 %v3610, %v2732
    %v3612 = vadd.f32 %v3611, %v2733
    %v3613 = vadd.f32 %v3612, %v2734
    %v3614 = vadd.f32 %v3613, %v2735
    %v3615 = vadd.f32 %v3614, %v2736
    %v3616 = vadd.f32 %v3615, %v2737
    %v3617 = vadd.f32 %v3616, %v2738
    %v3618 = vadd.f32 %v3617, %v2739
    %v3619 = vadd.f32 %v3618, %v2740
    %v3620 = vadd.f32 %v3619, %v2741
    %v3621 = vadd.f32 %v3620, %v2742
    %v3622 = vadd.f32 %v3621, %v2743
    %v3623 = vadd.f32 %v3622, %v2744
    %v3624 = vadd.f32 %v3623, %v2745
    %v3625 = vadd.f32 %v3624, %v2746
    %v3626 = vadd.f32 %v3625, %v2747
    %v3627 = vadd.f32 %v3626, %v2748
    %v3628 = vadd.f32 %v3627, %v2749
    %v3629 = vadd.f32 %v3628, %v2750
    %v3630 = vadd.f32 %v3629, %v2751
    %v3631 = vadd.f32 %v3630, %v2752
    %v3632 = vadd.f32 %v3631, %v2753
    %v3633 = vadd.f32 %v3632, %v2754
    %v3634 = vadd.f32 %v3633, %v2755
    %v3635 = vadd.f32 %v3634, %v2756
    %v3636 = vadd.f32 %v3635, %v2757
    %v3637 = vadd.f32 %v3636, %v2758
    %v3638 = vadd.f32 %v3637, %v2759
    %v3639 = vadd.f32 %v3638, %v2760
    %v3640 = vadd.f32 %v3639, %v2761
    %v3641 = vadd.f32 %v3640, %v2762
    %v3642 = vadd.f32 %v3641, %v2763
    %v3643 = vadd.f32 %v3642, %v2764
    %v3644 = vadd.f32 %v3643, %v2765
    %v3645 = vadd.f32 %v3644, %v2766
    %v3646 = vadd.f32 %v3645, %v2767
    %v3647 = vadd.f32 %v3646, %v2768
    %v3648 = vadd.f32 %v3647, %v2769
    %v3649 = vadd.f32 %v3648, %v2770
    %v3650 = vadd.f32 %v3649, %v2771
    %v3651 = vadd.f32 %v3650, %v2772
    %v3652 = vadd.f32 %v3651, %v2773
    %v3653 = vadd.f32 %v3652, %v2774
    %v3654 = vadd.f32 %v3653, %v2775
    %v3655 = vadd.f32 %v3654, %v2776
    %v3656 = vadd.f32 %v3655, %v2777
    %v3657 = vadd.f32 %v3656, %v2778
    %v3658 = vadd.f32 %v3657, %v2779
    %v3659 = vadd.f32 %v3658, %v2780
    %v3660 = vadd.f32 %v3659, %v2781
    %v3661 = vadd.f32 %v3660, %v2782
    %v3662 = vadd.f32 %v3661, %v2783
    %v3663 = vadd.f32 %v3662, %v2784
    %v3664 = vadd.f32 %v3663, %v2785
    %v3665 = vadd.f32 %v3664, %v2786
    %v3666 = vadd.f32 %v3665, %v2787
    %v3667 = vadd.f32 %v3666, %v2788
    %v3668 = vadd.f32 %v3667, %v2789
    %v3669 = vadd.f32 %v3668, %v2790
    %v3670 = vadd.f32 %v3669, %v2791
    %v3671 = vadd.f32 %v3670, %v2792
    %v3672 = vadd.f32 %v3671, %v2793
    %v3673 = vadd.f32 %v3672, %v2794
    %v3674 = vadd.f32 %v3673, %v2795
    %v3675 = vadd.f32 %v3674, %v2796
    %v3676 = vadd.f32 %v3675, %v2797
    %v3677 = vadd.f32 %v3676, %v2798
    %v3678 = vadd.f32 %v3677, %v2799
    %v3679 = vadd.f32 %v3678, %v2800
    %v3680 = vadd.f32 %v3679, %v2801
    %v3681 = vadd.f32 %v3680, %v2802
    %v3682 = vadd.f32 %v3681, %v2803
    %v3683 = vadd.f32 %v3682, %v2804
    %v3684 = vadd.f32 %v3683, %v2805
    %v3685 = vadd.f32 %v3684, %v2806
    %v3686 = vadd.f32 %v3685, %v2807
    %v3687 = vadd.f32 %v3686, %v2808
    %v3688 = vadd.f32 %v3687, %v2809
    %v3689 = vadd.f32 %v3688, %v2810
    %v3690 = vadd.f32 %v3689, %v2811
    %v3691 = vadd.f32 %v3690, %v2812
    %v3692 = vadd.f32 %v3691, %v2813
    %v3693 = vadd.f32 %v3692, %v2814
    %v3694 = vadd.f32 %v3693, %v2815
    %v3695 = vadd.f32 %v3694, %v2816
    %v3696 = vadd.f32 %v3695, %v2817
    %v3697 = vadd.f32 %v3696, %v2818
    %v3698 = vadd.f32 %v3697, %v2819
    %v3699 = vadd.f32 %v3698, %v2820
    %v3700 = vadd.f32 %v3699, %v2821
    %v3701 = vadd.f32 %v3700, %v2822
    %v3702 = vadd.f32 %v3701, %v2823
    %v3703 = vadd.f32 %v3702, %v2824
    %v3704 = vadd.f32 %v3703, %v2825
    %v3705 = vadd.f32 %v3704, %v2826
    %v3706 = vadd.f32 %v3705, %v2827
    %v3707 = vadd.f32 %v3706, %v2828
    %v3708 = vadd.f32 %v3707, %v2829
    %v3709 = vadd.f32 %v3708, %v2830
    %v3710 = vadd.f32 %v3709, %v2831
    %v3711 = vadd.f32 %v3710, %v2832
    %v3712 = vadd.f32 %v3711, %v2833
    %v3713 = vadd.f32 %v3712, %v2834
    %v3714 = vadd.f32 %v3713, %v2835
    %v3715 = vadd.f32 %v3714, %v2836
    %v3716 = vadd.f32 %v3715, %v2837
    %v3717 = vadd.f32 %v3716, %v2838
    %v3718 = vadd.f32 %v3717, %v2839
    %v3719 = vadd.f32 %v3718, %v2840
    %v3720 = vadd.f32 %v3719, %v2841
    %v3721 = vadd.f32 %v3720, %v2842
    %v3722 = vadd.f32 %v3721, %v2843
    %v3723 = vadd.f32 %v3722, %v2844
    %v3724 = vadd.f32 %v3723, %v2845
    %v3725 = vadd.f32 %v3724, %v2846
    %v3726 = vadd.f32 %v3725, %v2847
    %v3727 = vadd.f32 %v3726, %v2848
    %v3728 = vadd.f32 %v3727, %v2849
    %v3729 = vadd.f32 %v3728, %v2850
    %v3730 = vadd.f32 %v3729, %v2851
    %v3731 = vadd.f32 %v3730, %v2852
    %v3732 = vadd.f32 %v3731, %v2853
    %v3733 = vadd.f32 %v3732, %v2854
    %v3734 = vadd.f32 %v3733, %v2855
    %v3735 = vadd.f32 %v3734, %v2856
    %v3736 = vadd.f32 %v3735, %v2857
    %v3737 = vadd.f32 %v3736, %v2858
    %v3738 = vadd.f32 %v3737, %v2859
    %v3739 = vadd.f32 %v3738, %v2860
    %v3740 = vadd.f32 %v3739, %v2861
    %v3741 = vadd.f32 %v3740, %v2862
    %v3742 = vadd.f32 %v3741, %v2863
    %v3743 = vadd.f32 %v3742, %v2864
    %v3744 = vadd.f32 %v3743, %v2865
    %v3745 = vadd.f32 %v3744, %v2866
    %v3746 = vadd.f32 %v3745, %v2867
    %v3747 = vadd.f32 %v3746, %v2868
    %v3748 = vadd.f32 %v3747, %v2869
    %v3749 = vadd.f32 %v3748, %v2870
    %v3750 = vadd.f32 %v3749, %v2871
    %v3751 = vadd.f32 %v3750, %v2872
    %v3752 = vadd.f32 %v3751, %v2873
    %v3753 = vadd.f32 %v3752, %v2874
    %v3754 = vadd.f32 %v3753, %v2875
    %v3755 = vadd.f32 %v3754, %v2876
    %v3756 = vadd.f32 %v3755, %v2877
    %v3757 = vadd.f32 %v3756, %v2878
    %v3758 = vadd.f32 %v3757, %v2879
    %v3759 = vadd.f32 %v3758, %v2880
    %v3760 = vadd.f32 %v3759, %v2881
    %v3761 = vadd.f32 %v3760, %v2882
    %v3762 = vadd.f32 %v3761, %v2883
    %v3763 = vadd.f32 %v3762, %v2884
    %v3764 = vadd.f32 %v3763, %v2885
    %v3765 = vadd.f32 %v3764, %v2886
    %v3766 = vadd.f32 %v3765, %v2887
    %v3767 = vadd.f32 %v3766, %v2888
    %v3768 = vadd.f32 %v3767, %v2889
    %v3769 = vadd.f32 %v3768, %v2890
    %v3770 = vadd.f32 %v3769, %v2891
    %v3771 = vadd.f32 %v3770, %v2892
    %v3772 = vadd.f32 %v3771, %v2893
    %v3773 = vadd.f32 %v3772, %v2894
    %v3774 = vadd.f32 %v3773, %v2895
    %v3775 = vadd.f32 %v3774, %v2896
    %v3776 = vadd.f32 %v3775, %v2897
    %v3777 = vadd.f32 %v3776, %v2898
    %v3778 = vadd.f32 %v3777, %v2899
    %v3779 = vadd.f32 %v3778, %v2900
    %v3780 = vadd.f32 %v3779, %v2901
    %v3781 = vadd.f32 %v3780, %v2902
    %v3782 = vadd.f32 %v3781, %v2903
    %v3783 = vadd.f32 %v3782, %v2904
    %v3784 = vadd.f32 %v3783, %v2905
    %v3785 = vadd.f32 %v3784, %v2906
    %v3786 = vadd.f32 %v3785, %v2907
    %v3787 = vadd.f32 %v3786, %v2908
    %v3788 = vadd.f32 %v3787, %v2909
    %v3789 = vadd.f32 %v3788, %v2910
    %v3790 = vadd.f32 %v3789, %v2911
    %v3791 = vadd.f32 %v3790, %v2912
    %v3792 = vadd.f32 %v3791, %v2913
    %v3793 = vadd.f32 %v3792, %v2914
    %v3794 = vadd.f32 %v3793, %v2915
    %v3795 = vadd.f32 %v3794, %v2916
    %v3796 = vadd.f32 %v3795, %v2917
    %v3797 = vadd.f32 %v3796, %v2918
    %v3798 = vadd.f32 %v3797, %v2919
    %v3799 = vadd.f32 %v3798, %v2920
    %v3800 = vadd.f32 %v3799, %v2921
    %v3801 = vadd.f32 %v3800, %v2922
    %v3802 = vadd.f32 %v3801, %v2923
    %v3803 = vadd.f32 %v3802, %v2924
    %v3804 = vadd.f32 %v3803, %v2925
    %v3805 = vadd.f32 %v3804, %v2926
    %v3806 = vadd.f32 %v3805, %v2927
    %v3807 = vadd.f32 %v3806, %v2928
    %v3808 = vadd.f32 %v3807, %v2929
    %v3809 = vadd.f32 %v3808, %v2930
    %v3810 = vadd.f32 %v3809, %v2931
    %v3811 = vadd.f32 %v3810, %v2932
    %v3812 = vadd.f32 %v3811, %v2933
    %v3813 = vadd.f32 %v3812, %v2934
    %v3814 = vadd.f32 %v3813, %v2935
    %v3815 = vadd.f32 %v3814, %v2936
    %v3816 = vadd.f32 %v3815, %v2937
    %v3817 = vadd.f32 %v3816, %v2938
    %v3818 = vadd.f32 %v3817, %v2939
    %v3819 = vadd.f32 %v3818, %v2940
    %v3820 = vadd.f32 %v3819, %v2941
    %v3821 = vadd.f32 %v3820, %v2942
    %v3822 = vadd.f32 %v3821, %v2943
    %v3823 = vadd.f32 %v3822, %v2944
    %v3824 = vadd.f32 %v3823, %v2945
    %v3825 = vadd.f32 %v3824, %v2946
    %v3826 = vadd.f32 %v3825, %v2947
    %v3827 = vadd.f32 %v3826, %v2948
    %v3828 = vadd.f32 %v3827, %v2949
    %v3829 = vadd.f32 %v3828, %v2950
    %v3830 = vadd.f32 %v3829, %v2951
    %v3831 = vadd.f32 %v3830, %v2952
    %3832 = vadd.xlane.f32.xlu0 %v3831
    %v3833 = vpop.xlane.xlu0 %3832
    %v3834 = vadd.f32 %v2953, %v2954
    %v3835 = vadd.f32 %v3834, %v2955
    %v3836 = vadd.f32 %v3835, %v2956
    %v3837 = vadd.f32 %v3836, %v2957
    %v3838 = vadd.f32 %v3837, %v2958
    %v3839 = vadd.f32 %v3838, %v2959
    %v3840 = vadd.f32 %v3839, %v2960
    %v3841 = vadd.f32 %v3840, %v2961
    %v3842 = vadd.f32 %v3841, %v2962
    %v3843 = vadd.f32 %v3842, %v2963
    %v3844 = vadd.f32 %v3843, %v2964
    %v3845 = vadd.f32 %v3844, %v2965
    %v3846 = vadd.f32 %v3845, %v2966
    %v3847 = vadd.f32 %v3846, %v2967
    %v3848 = vadd.f32 %v3847, %v2968
    %v3849 = vadd.f32 %v3848, %v2969
    %v3850 = vadd.f32 %v3849, %v2970
    %v3851 = vadd.f32 %v3850, %v2971
    %v3852 = vadd.f32 %v3851, %v2972
    %v3853 = vadd.f32 %v3852, %v2973
    %v3854 = vadd.f32 %v3853, %v2974
    %v3855 = vadd.f32 %v3854, %v2975
    %v3856 = vadd.f32 %v3855, %v2976
    %v3857 = vadd.f32 %v3856, %v2977
    %v3858 = vadd.f32 %v3857, %v2978
    %v3859 = vadd.f32 %v3858, %v2979
    %v3860 = vadd.f32 %v3859, %v2980
    %v3861 = vadd.f32 %v3860, %v2981
    %v3862 = vadd.f32 %v3861, %v2982
    %v3863 = vadd.f32 %v3862, %v2983
    %v3864 = vadd.f32 %v3863, %v2984
    %v3865 = vadd.f32 %v3864, %v2985
    %v3866 = vadd.f32 %v3865, %v2986
    %v3867 = vadd.f32 %v3866, %v2987
    %v3868 = vadd.f32 %v3867, %v2988
    %v3869 = vadd.f32 %v3868, %v2989
    %v3870 = vadd.f32 %v3869, %v2990
    %v3871 = vadd.f32 %v3870, %v2991
    %v3872 = vadd.f32 %v3871, %v2992
    %v3873 = vadd.f32 %v3872, %v2993
    %v3874 = vadd.f32 %v3873, %v2994
    %v3875 = vadd.f32 %v3874, %v2995
    %v3876 = vadd.f32 %v3875, %v2996
    %v3877 = vadd.f32 %v3876, %v2997
    %v3878 = vadd.f32 %v3877, %v2998
    %v3879 = vadd.f32 %v3878, %v2999
    %v3880 = vadd.f32 %v3879, %v3000
    %v3881 = vadd.f32 %v3880, %v3001
    %v3882 = vadd.f32 %v3881, %v3002
    %v3883 = vadd.f32 %v3882, %v3003
    %v3884 = vadd.f32 %v3883, %v3004
    %v3885 = vadd.f32 %v3884, %v3005
    %v3886 = vadd.f32 %v3885, %v3006
    %v3887 = vadd.f32 %v3886, %v3007
    %v3888 = vadd.f32 %v3887, %v3008
    %v3889 = vadd.f32 %v3888, %v3009
    %v3890 = vadd.f32 %v3889, %v3010
    %v3891 = vadd.f32 %v3890, %v3011
    %v3892 = vadd.f32 %v3891, %v3012
    %v3893 = vadd.f32 %v3892, %v3013
    %v3894 = vadd.f32 %v3893, %v3014
    %v3895 = vadd.f32 %v3894, %v3015
    %v3896 = vadd.f32 %v3895, %v3016
    %v3897 = vadd.f32 %v3896, %v3017
    %v3898 = vadd.f32 %v3897, %v3018
    %v3899 = vadd.f32 %v3898, %v3019
    %v3900 = vadd.f32 %v3899, %v3020
    %v3901 = vadd.f32 %v3900, %v3021
    %v3902 = vadd.f32 %v3901, %v3022
    %v3903 = vadd.f32 %v3902, %v3023
    %v3904 = vadd.f32 %v3903, %v3024
    %v3905 = vadd.f32 %v3904, %v3025
    %v3906 = vadd.f32 %v3905, %v3026
    %v3907 = vadd.f32 %v3906, %v3027
    %v3908 = vadd.f32 %v3907, %v3028
    %v3909 = vadd.f32 %v3908, %v3029
    %v3910 = vadd.f32 %v3909, %v3030
    %v3911 = vadd.f32 %v3910, %v3031
    %v3912 = vadd.f32 %v3911, %v3032
    %v3913 = vadd.f32 %v3912, %v3033
    %v3914 = vadd.f32 %v3913, %v3034
    %v3915 = vadd.f32 %v3914, %v3035
    %v3916 = vadd.f32 %v3915, %v3036
    %v3917 = vadd.f32 %v3916, %v3037
    %v3918 = vadd.f32 %v3917, %v3038
    %v3919 = vadd.f32 %v3918, %v3039
    %v3920 = vadd.f32 %v3919, %v3040
    %v3921 = vadd.f32 %v3920, %v3041
    %v3922 = vadd.f32 %v3921, %v3042
    %v3923 = vadd.f32 %v3922, %v3043
    %v3924 = vadd.f32 %v3923, %v3044
    %v3925 = vadd.f32 %v3924, %v3045
    %v3926 = vadd.f32 %v3925, %v3046
    %v3927 = vadd.f32 %v3926, %v3047
    %v3928 = vadd.f32 %v3927, %v3048
    %v3929 = vadd.f32 %v3928, %v3049
    %v3930 = vadd.f32 %v3929, %v3050
    %v3931 = vadd.f32 %v3930, %v3051
    %v3932 = vadd.f32 %v3931, %v3052
    %v3933 = vadd.f32 %v3932, %v3053
    %v3934 = vadd.f32 %v3933, %v3054
    %v3935 = vadd.f32 %v3934, %v3055
    %v3936 = vadd.f32 %v3935, %v3056
    %v3937 = vadd.f32 %v3936, %v3057
    %v3938 = vadd.f32 %v3937, %v3058
    %v3939 = vadd.f32 %v3938, %v3059
    %v3940 = vadd.f32 %v3939, %v3060
    %v3941 = vadd.f32 %v3940, %v3061
    %v3942 = vadd.f32 %v3941, %v3062
    %v3943 = vadd.f32 %v3942, %v3063
    %v3944 = vadd.f32 %v3943, %v3064
    %v3945 = vadd.f32 %v3944, %v3065
    %v3946 = vadd.f32 %v3945, %v3066
    %v3947 = vadd.f32 %v3946, %v3067
    %v3948 = vadd.f32 %v3947, %v3068
    %v3949 = vadd.f32 %v3948, %v3069
    %v3950 = vadd.f32 %v3949, %v3070
    %v3951 = vadd.f32 %v3950, %v3071
    %v3952 = vadd.f32 %v3951, %v3072
    %v3953 = vadd.f32 %v3952, %v3073
    %v3954 = vadd.f32 %v3953, %v3074
    %v3955 = vadd.f32 %v3954, %v3075
    %v3956 = vadd.f32 %v3955, %v3076
    %v3957 = vadd.f32 %v3956, %v3077
    %v3958 = vadd.f32 %v3957, %v3078
    %v3959 = vadd.f32 %v3958, %v3079
    %v3960 = vadd.f32 %v3959, %v3080
    %v3961 = vadd.f32 %v3960, %v3081
    %v3962 = vadd.f32 %v3961, %v3082
    %v3963 = vadd.f32 %v3962, %v3083
    %v3964 = vadd.f32 %v3963, %v3084
    %v3965 = vadd.f32 %v3964, %v3085
    %v3966 = vadd.f32 %v3965, %v3086
    %v3967 = vadd.f32 %v3966, %v3087
    %v3968 = vadd.f32 %v3967, %v3088
    %v3969 = vadd.f32 %v3968, %v3089
    %v3970 = vadd.f32 %v3969, %v3090
    %v3971 = vadd.f32 %v3970, %v3091
    %v3972 = vadd.f32 %v3971, %v3092
    %v3973 = vadd.f32 %v3972, %v3093
    %v3974 = vadd.f32 %v3973, %v3094
    %v3975 = vadd.f32 %v3974, %v3095
    %v3976 = vadd.f32 %v3975, %v3096
    %v3977 = vadd.f32 %v3976, %v3097
    %v3978 = vadd.f32 %v3977, %v3098
    %v3979 = vadd.f32 %v3978, %v3099
    %v3980 = vadd.f32 %v3979, %v3100
    %v3981 = vadd.f32 %v3980, %v3101
    %v3982 = vadd.f32 %v3981, %v3102
    %v3983 = vadd.f32 %v3982, %v3103
    %v3984 = vadd.f32 %v3983, %v3104
    %v3985 = vadd.f32 %v3984, %v3105
    %v3986 = vadd.f32 %v3985, %v3106
    %v3987 = vadd.f32 %v3986, %v3107
    %v3988 = vadd.f32 %v3987, %v3108
    %v3989 = vadd.f32 %v3988, %v3109
    %v3990 = vadd.f32 %v3989, %v3110
    %v3991 = vadd.f32 %v3990, %v3111
    %v3992 = vadd.f32 %v3991, %v3112
    %v3993 = vadd.f32 %v3992, %v3113
    %v3994 = vadd.f32 %v3993, %v3114
    %v3995 = vadd.f32 %v3994, %v3115
    %v3996 = vadd.f32 %v3995, %v3116
    %v3997 = vadd.f32 %v3996, %v3117
    %v3998 = vadd.f32 %v3997, %v3118
    %v3999 = vadd.f32 %v3998, %v3119
    %v4000 = vadd.f32 %v3999, %v3120
    %v4001 = vadd.f32 %v4000, %v3121
    %v4002 = vadd.f32 %v4001, %v3122
    %v4003 = vadd.f32 %v4002, %v3123
    %v4004 = vadd.f32 %v4003, %v3124
    %v4005 = vadd.f32 %v4004, %v3125
    %v4006 = vadd.f32 %v4005, %v3126
    %v4007 = vadd.f32 %v4006, %v3127
    %v4008 = vadd.f32 %v4007, %v3128
    %v4009 = vadd.f32 %v4008, %v3129
    %v4010 = vadd.f32 %v4009, %v3130
    %v4011 = vadd.f32 %v4010, %v3131
    %v4012 = vadd.f32 %v4011, %v3132
    %v4013 = vadd.f32 %v4012, %v3133
    %v4014 = vadd.f32 %v4013, %v3134
    %v4015 = vadd.f32 %v4014, %v3135
    %v4016 = vadd.f32 %v4015, %v3136
    %v4017 = vadd.f32 %v4016, %v3137
    %v4018 = vadd.f32 %v4017, %v3138
    %v4019 = vadd.f32 %v4018, %v3139
    %v4020 = vadd.f32 %v4019, %v3140
    %v4021 = vadd.f32 %v4020, %v3141
    %v4022 = vadd.f32 %v4021, %v3142
    %v4023 = vadd.f32 %v4022, %v3143
    %v4024 = vadd.f32 %v4023, %v3144
    %v4025 = vadd.f32 %v4024, %v3145
    %v4026 = vadd.f32 %v4025, %v3146
    %v4027 = vadd.f32 %v4026, %v3147
    %v4028 = vadd.f32 %v4027, %v3148
    %v4029 = vadd.f32 %v4028, %v3149
    %v4030 = vadd.f32 %v4029, %v3150
    %v4031 = vadd.f32 %v4030, %v3151
    %v4032 = vadd.f32 %v4031, %v3152
    %v4033 = vadd.f32 %v4032, %v3153
    %v4034 = vadd.f32 %v4033, %v3154
    %v4035 = vadd.f32 %v4034, %v3155
    %v4036 = vadd.f32 %v4035, %v3156
    %v4037 = vadd.f32 %v4036, %v3157
    %v4038 = vadd.f32 %v4037, %v3158
    %v4039 = vadd.f32 %v4038, %v3159
    %v4040 = vadd.f32 %v4039, %v3160
    %v4041 = vadd.f32 %v4040, %v3161
    %v4042 = vadd.f32 %v4041, %v3162
    %v4043 = vadd.f32 %v4042, %v3163
    %v4044 = vadd.f32 %v4043, %v3164
    %v4045 = vadd.f32 %v4044, %v3165
    %v4046 = vadd.f32 %v4045, %v3166
    %v4047 = vadd.f32 %v4046, %v3167
    %v4048 = vadd.f32 %v4047, %v3168
    %v4049 = vadd.f32 %v4048, %v3169
    %v4050 = vadd.f32 %v4049, %v3170
    %v4051 = vadd.f32 %v4050, %v3171
    %v4052 = vadd.f32 %v4051, %v3172
    %v4053 = vadd.f32 %v4052, %v3173
    %v4054 = vadd.f32 %v4053, %v3174
    %v4055 = vadd.f32 %v4054, %v3175
    %v4056 = vadd.f32 %v4055, %v3176
    %v4057 = vadd.f32 %v4056, %v3177
    %v4058 = vadd.f32 %v4057, %v3178
    %v4059 = vadd.f32 %v4058, %v3179
    %v4060 = vadd.f32 %v4059, %v3180
    %v4061 = vadd.f32 %v4060, %v3181
    %v4062 = vadd.f32 %v4061, %v3182
    %v4063 = vadd.f32 %v4062, %v3183
    %v4064 = vadd.f32 %v4063, %v3184
    %v4065 = vadd.f32 %v4064, %v3185
    %v4066 = vadd.f32 %v4065, %v3186
    %v4067 = vadd.f32 %v4066, %v3187
    %v4068 = vadd.f32 %v4067, %v3188
    %v4069 = vadd.f32 %v4068, %v3189
    %v4070 = vadd.f32 %v4069, %v3190
    %v4071 = vadd.f32 %v4070, %v3191
    %v4072 = vadd.f32 %v4071, %v3192
    %v4073 = vadd.f32 %v4072, %v3193
    %v4074 = vadd.f32 %v4073, %v3194
    %v4075 = vadd.f32 %v4074, %v3195
    %v4076 = vadd.f32 %v4075, %v3196
    %v4077 = vadd.f32 %v4076, %v3197
    %v4078 = vadd.f32 %v4077, %v3198
    %v4079 = vadd.f32 %v4078, %v3199
    %v4080 = vadd.f32 %v4079, %v3200
    %v4081 = vadd.f32 %v4080, %v3201
    %v4082 = vadd.f32 %v4081, %v3202
    %v4083 = vadd.f32 %v4082, %v3203
    %v4084 = vadd.f32 %v4083, %v3204
    %v4085 = vadd.f32 %v4084, %v3205
    %v4086 = vadd.f32 %v4085, %v3206
    %v4087 = vadd.f32 %v4086, %v3207
    %v4088 = vadd.f32 %v4087, %v3208
    %v4089 = vadd.f32 %v4088, %v3209
    %v4090 = vadd.f32 %v4089, %v3210
    %v4091 = vadd.f32 %v4090, %v3211
    %v4092 = vadd.f32 %v4091, %v3212
    %v4093 = vadd.f32 %v4092, %v3213
    %v4094 = vadd.f32 %v4093, %v3214
    %v4095 = vadd.f32 %v4094, %v3215
    %v4096 = vadd.f32 %v4095, %v3216
    %v4097 = vadd.f32 %v4096, %v3217
    %v4098 = vadd.f32 %v4097, %v3218
    %v4099 = vadd.f32 %v4098, %v3219
    %v4100 = vadd.f32 %v4099, %v3220
    %v4101 = vadd.f32 %v4100, %v3221
    %v4102 = vadd.f32 %v4101, %v3222
    %v4103 = vadd.f32 %v4102, %v3223
    %v4104 = vadd.f32 %v4103, %v3224
    %v4105 = vadd.f32 %v4104, %v3225
    %v4106 = vadd.f32 %v4105, %v3226
    %v4107 = vadd.f32 %v4106, %v3227
    %v4108 = vadd.f32 %v4107, %v3228
    %v4109 = vadd.f32 %v4108, %v3229
    %v4110 = vadd.f32 %v4109, %v3230
    %v4111 = vadd.f32 %v4110, %v3231
    %v4112 = vadd.f32 %v4111, %v3232
    %v4113 = vadd.f32 %v4112, %v3233
    %v4114 = vadd.f32 %v4113, %v3234
    %v4115 = vadd.f32 %v4114, %v3235
    %v4116 = vadd.f32 %v4115, %v3236
    %v4117 = vadd.f32 %v4116, %v3237
    %v4118 = vadd.f32 %v4117, %v3238
    %v4119 = vadd.f32 %v4118, %v3239
    %v4120 = vadd.f32 %v4119, %v3240
    %v4121 = vadd.f32 %v4120, %v3241
    %v4122 = vadd.f32 %v4121, %v3242
    %v4123 = vadd.f32 %v4122, %v3243
    %v4124 = vadd.f32 %v4123, %v3244
    %v4125 = vadd.f32 %v4124, %v3245
    %v4126 = vadd.f32 %v4125, %v3246
    %v4127 = vadd.f32 %v4126, %v3247
    %v4128 = vadd.f32 %v4127, %v3248
    %v4129 = vadd.f32 %v4128, %v3249
    %v4130 = vadd.f32 %v4129, %v3250
    %v4131 = vadd.f32 %v4130, %v3251
    %v4132 = vadd.f32 %v4131, %v3252
    %v4133 = vadd.f32 %v4132, %v3253
    %v4134 = vadd.f32 %v4133, %v3254
    %v4135 = vadd.f32 %v4134, %v3255
    %v4136 = vadd.f32 %v4135, %v3256
    %v4137 = vadd.f32 %v4136, %v3257
    %v4138 = vadd.f32 %v4137, %v3258
    %v4139 = vadd.f32 %v4138, %v3259
    %v4140 = vadd.f32 %v4139, %v3260
    %v4141 = vadd.f32 %v4140, %v3261
    %v4142 = vadd.f32 %v4141, %v3262
    %v4143 = vadd.f32 %v4142, %v3263
    %v4144 = vadd.f32 %v4143, %v3264
    %v4145 = vadd.f32 %v4144, %v3265
    %v4146 = vadd.f32 %v4145, %v3266
    %v4147 = vadd.f32 %v4146, %v3267
    %v4148 = vadd.f32 %v4147, %v3268
    %v4149 = vadd.f32 %v4148, %v3269
    %v4150 = vadd.f32 %v4149, %v3270
    %v4151 = vadd.f32 %v4150, %v3271
    %v4152 = vadd.f32 %v4151, %v3272
    %v4153 = vadd.f32 %v4152, %v3273
    %v4154 = vadd.f32 %v4153, %v3274
    %v4155 = vadd.f32 %v4154, %v3275
    %v4156 = vadd.f32 %v4155, %v3276
    %v4157 = vadd.f32 %v4156, %v3277
    %v4158 = vadd.f32 %v4157, %v3278
    %v4159 = vadd.f32 %v4158, %v3279
    %v4160 = vadd.f32 %v4159, %v3280
    %v4161 = vadd.f32 %v4160, %v3281
    %v4162 = vadd.f32 %v4161, %v3282
    %v4163 = vadd.f32 %v4162, %v3283
    %v4164 = vadd.f32 %v4163, %v3284
    %v4165 = vadd.f32 %v4164, %v3285
    %v4166 = vadd.f32 %v4165, %v3286
    %v4167 = vadd.f32 %v4166, %v3287
    %v4168 = vadd.f32 %v4167, %v3288
    %v4169 = vadd.f32 %v4168, %v3289
    %v4170 = vadd.f32 %v4169, %v3290
    %v4171 = vadd.f32 %v4170, %v3291
    %v4172 = vadd.f32 %v4171, %v3292
    %v4173 = vadd.f32 %v4172, %v3293
    %v4174 = vadd.f32 %v4173, %v3294
    %v4175 = vadd.f32 %v4174, %v3295
    %v4176 = vadd.f32 %v4175, %v3296
    %v4177 = vadd.f32 %v4176, %v3297
    %v4178 = vadd.f32 %v4177, %v3298
    %v4179 = vadd.f32 %v4178, %v3299
    %v4180 = vadd.f32 %v4179, %v3300
    %v4181 = vadd.f32 %v4180, %v3301
    %v4182 = vadd.f32 %v4181, %v3302
    %v4183 = vadd.f32 %v4182, %v3303
    %v4184 = vadd.f32 %v4183, %v3304
    %v4185 = vadd.f32 %v4184, %v3305
    %v4186 = vadd.f32 %v4185, %v3306
    %v4187 = vadd.f32 %v4186, %v3307
    %v4188 = vadd.f32 %v4187, %v3308
    %v4189 = vadd.f32 %v4188, %v3309
    %v4190 = vadd.f32 %v4189, %v3310
    %v4191 = vadd.f32 %v4190, %v3311
    %v4192 = vadd.f32 %v4191, %v3312
    %v4193 = vadd.f32 %v4192, %v3313
    %v4194 = vadd.f32 %v4193, %v3314
    %v4195 = vadd.f32 %v4194, %v3315
    %v4196 = vadd.f32 %v4195, %v3316
    %v4197 = vadd.f32 %v4196, %v3317
    %v4198 = vadd.f32 %v4197, %v3318
    %v4199 = vadd.f32 %v4198, %v3319
    %v4200 = vadd.f32 %v4199, %v3320
    %v4201 = vadd.f32 %v4200, %v3321
    %v4202 = vadd.f32 %v4201, %v3322
    %v4203 = vadd.f32 %v4202, %v3323
    %v4204 = vadd.f32 %v4203, %v3324
    %v4205 = vadd.f32 %v4204, %v3325
    %v4206 = vadd.f32 %v4205, %v3326
    %v4207 = vadd.f32 %v4206, %v3327
    %v4208 = vadd.f32 %v4207, %v3328
    %v4209 = vadd.f32 %v4208, %v3329
    %v4210 = vadd.f32 %v4209, %v3330
    %v4211 = vadd.f32 %v4210, %v3331
    %v4212 = vadd.f32 %v4211, %v3332
    %v4213 = vadd.f32 %v4212, %v3333
    %v4214 = vadd.f32 %v4213, %v3334
    %v4215 = vadd.f32 %v4214, %v3335
    %v4216 = vadd.f32 %v4215, %v3336
    %v4217 = vadd.f32 %v4216, %v3337
    %v4218 = vadd.f32 %v4217, %v3338
    %v4219 = vadd.f32 %v4218, %v3339
    %v4220 = vadd.f32 %v4219, %v3340
    %v4221 = vadd.f32 %v4220, %v3341
    %v4222 = vadd.f32 %v4221, %v3342
    %v4223 = vadd.f32 %v4222, %v3343
    %v4224 = vadd.f32 %v4223, %v3344
    %v4225 = vadd.f32 %v4224, %v3345
    %v4226 = vadd.f32 %v4225, %v3346
    %v4227 = vadd.f32 %v4226, %v3347
    %v4228 = vadd.f32 %v4227, %v3348
    %v4229 = vadd.f32 %v4228, %v3349
    %v4230 = vadd.f32 %v4229, %v3350
    %v4231 = vadd.f32 %v4230, %v3351
    %v4232 = vadd.f32 %v4231, %v3352
    %v4233 = vadd.f32 %v4232, %v3353
    %v4234 = vadd.f32 %v4233, %v3354
    %v4235 = vadd.f32 %v4234, %v3355
    %v4236 = vadd.f32 %v4235, %v3356
    %v4237 = vadd.f32 %v4236, %v3357
    %v4238 = vadd.f32 %v4237, %v3358
    %v4239 = vadd.f32 %v4238, %v3359
    %v4240 = vadd.f32 %v4239, %v3360
    %v4241 = vadd.f32 %v4240, %v3361
    %v4242 = vadd.f32 %v4241, %v3362
    %v4243 = vadd.f32 %v4242, %v3363
    %v4244 = vadd.f32 %v4243, %v3364
    %v4245 = vadd.f32 %v4244, %v3365
    %v4246 = vadd.f32 %v4245, %v3366
    %v4247 = vadd.f32 %v4246, %v3367
    %v4248 = vadd.f32 %v4247, %v3368
    %v4249 = vadd.f32 %v4248, %v3369
    %v4250 = vadd.f32 %v4249, %v3370
    %v4251 = vadd.f32 %v4250, %v3371
    %v4252 = vadd.f32 %v4251, %v3372
    %v4253 = vadd.f32 %v4252, %v3373
    %v4254 = vadd.f32 %v4253, %v3374
    %v4255 = vadd.f32 %v4254, %v3375
    %v4256 = vadd.f32 %v4255, %v3376
    %v4257 = vadd.f32 %v4256, %v3377
    %v4258 = vadd.f32 %v4257, %v3378
    %v4259 = vadd.f32 %v4258, %v3379
    %v4260 = vadd.f32 %v4259, %v3380
    %v4261 = vadd.f32 %v4260, %v3381
    %v4262 = vadd.f32 %v4261, %v3382
    %v4263 = vadd.f32 %v4262, %v3383
    %v4264 = vadd.f32 %v4263, %v3384
    %v4265 = vadd.f32 %v4264, %v3385
    %v4266 = vadd.f32 %v4265, %v3386
    %v4267 = vadd.f32 %v4266, %v3387
    %v4268 = vadd.f32 %v4267, %v3388
    %v4269 = vadd.f32 %v4268, %v3389
    %v4270 = vadd.f32 %v4269, %v3390
    %v4271 = vadd.f32 %v4270, %v3391
    %v4272 = vadd.f32 %v4271, %v3392
    %4273 = vadd.xlane.f32.xlu0 %v4272
    %v4274 = vpop.xlane.xlu0 %4273
    %v4275 = vperm.slane %v93, 1
    %v4276 = vperm.slane %v93, 3
    %v4277 = vperm.slane %v93, 5
    %v4278 = vperm.slane %v93, 7
    %v4279 = vperm.slane %v94, 1
    %v4280 = vperm.slane %v94, 3
    %v4281 = vperm.slane %v94, 5
    %v4282 = vperm.slane %v94, 7
    %v4283 = vperm.slane %v95, 1
    %v4284 = vperm.slane %v95, 3
    %v4285 = vperm.slane %v95, 5
    %v4286 = vperm.slane %v95, 7
    %v4287 = vperm.slane %v96, 1
    %v4288 = vperm.slane %v96, 3
    %v4289 = vperm.slane %v96, 5
    %v4290 = vperm.slane %v96, 7
    %v4291 = vperm.slane %v97, 1
    %v4292 = vperm.slane %v97, 3
    %v4293 = vperm.slane %v97, 5
    %v4294 = vperm.slane %v97, 7
    %v4295 = vperm.slane %v98, 1
    %v4296 = vperm.slane %v98, 3
    %v4297 = vperm.slane %v98, 5
    %v4298 = vperm.slane %v98, 7
    %v4299 = vperm.slane %v99, 1
    %v4300 = vperm.slane %v99, 3
    %v4301 = vperm.slane %v99, 5
    %v4302 = vperm.slane %v99, 7
    %v4303 = vperm.slane %v100, 1
    %v4304 = vperm.slane %v100, 3
    %v4305 = vperm.slane %v100, 5
    %v4306 = vperm.slane %v100, 7
    %v4307 = vperm.slane %v101, 1
    %v4308 = vperm.slane %v101, 3
    %v4309 = vperm.slane %v101, 5
    %v4310 = vperm.slane %v101, 7
    %v4311 = vperm.slane %v102, 1
    %v4312 = vperm.slane %v102, 3
    %v4313 = vperm.slane %v102, 5
    %v4314 = vperm.slane %v102, 7
    %v4315 = vperm.slane %v103, 1
    %v4316 = vperm.slane %v103, 3
    %v4317 = vperm.slane %v103, 5
    %v4318 = vperm.slane %v103, 7
    %v4319 = vperm.slane %v104, 1
    %v4320 = vperm.slane %v104, 3
    %v4321 = vperm.slane %v104, 5
    %v4322 = vperm.slane %v104, 7
    %v4323 = vperm.slane %v105, 1
    %v4324 = vperm.slane %v105, 3
    %v4325 = vperm.slane %v105, 5
    %v4326 = vperm.slane %v105, 7
    %v4327 = vperm.slane %v106, 1
    %v4328 = vperm.slane %v106, 3
    %v4329 = vperm.slane %v106, 5
    %v4330 = vperm.slane %v106, 7
    %v4331 = vperm.slane %v107, 1
    %v4332 = vperm.slane %v107, 3
    %v4333 = vperm.slane %v107, 5
    %v4334 = vperm.slane %v107, 7
    %v4335 = vperm.slane %v108, 1
    %v4336 = vperm.slane %v108, 3
    %v4337 = vperm.slane %v108, 5
    %v4338 = vperm.slane %v108, 7
    %v4339 = vperm.slane %v109, 1
    %v4340 = vperm.slane %v109, 3
    %v4341 = vperm.slane %v109, 5
    %v4342 = vperm.slane %v109, 7
    %v4343 = vperm.slane %v110, 1
    %v4344 = vperm.slane %v110, 3
    %v4345 = vperm.slane %v110, 5
    %v4346 = vperm.slane %v110, 7
    %v4347 = vperm.slane %v111, 1
    %v4348 = vperm.slane %v111, 3
    %v4349 = vperm.slane %v111, 5
    %v4350 = vperm.slane %v111, 7
    %v4351 = vperm.slane %v112, 1
    %v4352 = vperm.slane %v112, 3
    %v4353 = vperm.slane %v112, 5
    %v4354 = vperm.slane %v112, 7
    %v4355 = vperm.slane %v113, 1
    %v4356 = vperm.slane %v113, 3
    %v4357 = vperm.slane %v113, 5
    %v4358 = vperm.slane %v113, 7
    %v4359 = vperm.slane %v114, 1
    %v4360 = vperm.slane %v114, 3
    %v4361 = vperm.slane %v114, 5
    %v4362 = vperm.slane %v114, 7
    %v4363 = vperm.slane %v115, 1
    %v4364 = vperm.slane %v115, 3
    %v4365 = vperm.slane %v115, 5
    %v4366 = vperm.slane %v115, 7
    %v4367 = vperm.slane %v116, 1
    %v4368 = vperm.slane %v116, 3
    %v4369 = vperm.slane %v116, 5
    %v4370 = vperm.slane %v116, 7
    %v4371 = vperm.slane %v117, 1
    %v4372 = vperm.slane %v117, 3
    %v4373 = vperm.slane %v117, 5
    %v4374 = vperm.slane %v117, 7
    %v4375 = vperm.slane %v118, 1
    %v4376 = vperm.slane %v118, 3
    %v4377 = vperm.slane %v118, 5
    %v4378 = vperm.slane %v118, 7
    %v4379 = vperm.slane %v119, 1
    %v4380 = vperm.slane %v119, 3
    %v4381 = vperm.slane %v119, 5
    %v4382 = vperm.slane %v119, 7
    %v4383 = vperm.slane %v120, 1
    %v4384 = vperm.slane %v120, 3
    %v4385 = vperm.slane %v120, 5
    %v4386 = vperm.slane %v120, 7
    %v4387 = vperm.slane %v121, 1
    %v4388 = vperm.slane %v121, 3
    %v4389 = vperm.slane %v121, 5
    %v4390 = vperm.slane %v121, 7
    %v4391 = vperm.slane %v122, 1
    %v4392 = vperm.slane %v122, 3
    %v4393 = vperm.slane %v122, 5
    %v4394 = vperm.slane %v122, 7
    %v4395 = vperm.slane %v123, 1
    %v4396 = vperm.slane %v123, 3
    %v4397 = vperm.slane %v123, 5
    %v4398 = vperm.slane %v123, 7
    %v4399 = vperm.slane %v124, 1
    %v4400 = vperm.slane %v124, 3
    %v4401 = vperm.slane %v124, 5
    %v4402 = vperm.slane %v124, 7
    %v4403 = vperm.slane %v125, 1
    %v4404 = vperm.slane %v125, 3
    %v4405 = vperm.slane %v125, 5
    %v4406 = vperm.slane %v125, 7
    %v4407 = vperm.slane %v126, 1
    %v4408 = vperm.slane %v126, 3
    %v4409 = vperm.slane %v126, 5
    %v4410 = vperm.slane %v126, 7
    %v4411 = vperm.slane %v127, 1
    %v4412 = vperm.slane %v127, 3
    %v4413 = vperm.slane %v127, 5
    %v4414 = vperm.slane %v127, 7
    %v4415 = vperm.slane %v128, 1
    %v4416 = vperm.slane %v128, 3
    %v4417 = vperm.slane %v128, 5
    %v4418 = vperm.slane %v128, 7
    %v4419 = vperm.slane %v129, 1
    %v4420 = vperm.slane %v129, 3
    %v4421 = vperm.slane %v129, 5
    %v4422 = vperm.slane %v129, 7
    %v4423 = vperm.slane %v130, 1
    %v4424 = vperm.slane %v130, 3
    %v4425 = vperm.slane %v130, 5
    %v4426 = vperm.slane %v130, 7
    %v4427 = vperm.slane %v131, 1
    %v4428 = vperm.slane %v131, 3
    %v4429 = vperm.slane %v131, 5
    %v4430 = vperm.slane %v131, 7
    %v4431 = vperm.slane %v132, 1
    %v4432 = vperm.slane %v132, 3
    %v4433 = vperm.slane %v132, 5
    %v4434 = vperm.slane %v132, 7
    %v4435 = vperm.slane %v133, 1
    %v4436 = vperm.slane %v133, 3
    %v4437 = vperm.slane %v133, 5
    %v4438 = vperm.slane %v133, 7
    %v4439 = vperm.slane %v134, 1
    %v4440 = vperm.slane %v134, 3
    %v4441 = vperm.slane %v134, 5
    %v4442 = vperm.slane %v134, 7
    %v4443 = vperm.slane %v135, 1
    %v4444 = vperm.slane %v135, 3
    %v4445 = vperm.slane %v135, 5
    %v4446 = vperm.slane %v135, 7
    %v4447 = vperm.slane %v136, 1
    %v4448 = vperm.slane %v136, 3
    %v4449 = vperm.slane %v136, 5
    %v4450 = vperm.slane %v136, 7
    %v4451 = vperm.slane %v137, 1
    %v4452 = vperm.slane %v137, 3
    %v4453 = vperm.slane %v137, 5
    %v4454 = vperm.slane %v137, 7
    %v4455 = vperm.slane %v138, 1
    %v4456 = vperm.slane %v138, 3
    %v4457 = vperm.slane %v138, 5
    %v4458 = vperm.slane %v138, 7
    %v4459 = vperm.slane %v139, 1
    %v4460 = vperm.slane %v139, 3
    %v4461 = vperm.slane %v139, 5
    %v4462 = vperm.slane %v139, 7
    %v4463 = vperm.slane %v140, 1
    %v4464 = vperm.slane %v140, 3
    %v4465 = vperm.slane %v140, 5
    %v4466 = vperm.slane %v140, 7
    %v4467 = vperm.slane %v141, 1
    %v4468 = vperm.slane %v141, 3
    %v4469 = vperm.slane %v141, 5
    %v4470 = vperm.slane %v141, 7
    %v4471 = vperm.slane %v142, 1
    %v4472 = vperm.slane %v142, 3
    %v4473 = vperm.slane %v142, 5
    %v4474 = vperm.slane %v142, 7
    %v4475 = vperm.slane %v143, 1
    %v4476 = vperm.slane %v143, 3
    %v4477 = vperm.slane %v143, 5
    %v4478 = vperm.slane %v143, 7
    %v4479 = vperm.slane %v144, 1
    %v4480 = vperm.slane %v144, 3
    %v4481 = vperm.slane %v144, 5
    %v4482 = vperm.slane %v144, 7
    %v4483 = vperm.slane %v145, 1
    %v4484 = vperm.slane %v145, 3
    %v4485 = vperm.slane %v145, 5
    %v4486 = vperm.slane %v145, 7
    %v4487 = vperm.slane %v146, 1
    %v4488 = vperm.slane %v146, 3
    %v4489 = vperm.slane %v146, 5
    %v4490 = vperm.slane %v146, 7
    %v4491 = vperm.slane %v147, 1
    %v4492 = vperm.slane %v147, 3
    %v4493 = vperm.slane %v147, 5
    %v4494 = vperm.slane %v147, 7
    %v4495 = vperm.slane %v148, 1
    %v4496 = vperm.slane %v148, 3
    %v4497 = vperm.slane %v148, 5
    %v4498 = vperm.slane %v148, 7
    %v4499 = vperm.slane %v149, 1
    %v4500 = vperm.slane %v149, 3
    %v4501 = vperm.slane %v149, 5
    %v4502 = vperm.slane %v149, 7
    %v4503 = vperm.slane %v150, 1
    %v4504 = vperm.slane %v150, 3
    %v4505 = vperm.slane %v150, 5
    %v4506 = vperm.slane %v150, 7
    %v4507 = vperm.slane %v151, 1
    %v4508 = vperm.slane %v151, 3
    %v4509 = vperm.slane %v151, 5
    %v4510 = vperm.slane %v151, 7
    %v4511 = vperm.slane %v152, 1
    %v4512 = vperm.slane %v152, 3
    %v4513 = vperm.slane %v152, 5
    %v4514 = vperm.slane %v152, 7
    %v4515 = vperm.slane %v153, 1
    %v4516 = vperm.slane %v153, 3
    %v4517 = vperm.slane %v153, 5
    %v4518 = vperm.slane %v153, 7
    %v4519 = vperm.slane %v154, 1
    %v4520 = vperm.slane %v154, 3
    %v4521 = vperm.slane %v154, 5
    %v4522 = vperm.slane %v154, 7
    %v4523 = vperm.slane %v155, 1
    %v4524 = vperm.slane %v155, 3
    %v4525 = vperm.slane %v155, 5
    %v4526 = vperm.slane %v155, 7
    %v4527 = vperm.slane %v156, 1
    %v4528 = vperm.slane %v156, 3
    %v4529 = vperm.slane %v156, 5
    %v4530 = vperm.slane %v156, 7
    %v4531 = vperm.slane %v157, 1
    %v4532 = vperm.slane %v157, 3
    %v4533 = vperm.slane %v157, 5
    %v4534 = vperm.slane %v157, 7
    %v4535 = vperm.slane %v158, 1
    %v4536 = vperm.slane %v158, 3
    %v4537 = vperm.slane %v158, 5
    %v4538 = vperm.slane %v158, 7
    %v4539 = vperm.slane %v159, 1
    %v4540 = vperm.slane %v159, 3
    %v4541 = vperm.slane %v159, 5
    %v4542 = vperm.slane %v159, 7
    %v4543 = vperm.slane %v160, 1
    %v4544 = vperm.slane %v160, 3
    %v4545 = vperm.slane %v160, 5
    %v4546 = vperm.slane %v160, 7
    %v4547 = vperm.slane %v161, 1
    %v4548 = vperm.slane %v161, 3
    %v4549 = vperm.slane %v161, 5
    %v4550 = vperm.slane %v161, 7
    %v4551 = vperm.slane %v162, 1
    %v4552 = vperm.slane %v162, 3
    %v4553 = vperm.slane %v162, 5
    %v4554 = vperm.slane %v162, 7
    %v4555 = vperm.slane %v163, 1
    %v4556 = vperm.slane %v163, 3
    %v4557 = vperm.slane %v163, 5
    %v4558 = vperm.slane %v163, 7
    %v4559 = vperm.slane %v164, 1
    %v4560 = vperm.slane %v164, 3
    %v4561 = vperm.slane %v164, 5
    %v4562 = vperm.slane %v164, 7
    %v4563 = vperm.slane %v165, 1
    %v4564 = vperm.slane %v165, 3
    %v4565 = vperm.slane %v165, 5
    %v4566 = vperm.slane %v165, 7
    %v4567 = vperm.slane %v166, 1
    %v4568 = vperm.slane %v166, 3
    %v4569 = vperm.slane %v166, 5
    %v4570 = vperm.slane %v166, 7
    %v4571 = vperm.slane %v167, 1
    %v4572 = vperm.slane %v167, 3
    %v4573 = vperm.slane %v167, 5
    %v4574 = vperm.slane %v167, 7
    %v4575 = vperm.slane %v168, 1
    %v4576 = vperm.slane %v168, 3
    %v4577 = vperm.slane %v168, 5
    %v4578 = vperm.slane %v168, 7
    %v4579 = vperm.slane %v169, 1
    %v4580 = vperm.slane %v169, 3
    %v4581 = vperm.slane %v169, 5
    %v4582 = vperm.slane %v169, 7
    %v4583 = vperm.slane %v170, 1
    %v4584 = vperm.slane %v170, 3
    %v4585 = vperm.slane %v170, 5
    %v4586 = vperm.slane %v170, 7
    %v4587 = vperm.slane %v171, 1
    %v4588 = vperm.slane %v171, 3
    %v4589 = vperm.slane %v171, 5
    %v4590 = vperm.slane %v171, 7
    %v4591 = vperm.slane %v172, 1
    %v4592 = vperm.slane %v172, 3
    %v4593 = vperm.slane %v172, 5
    %v4594 = vperm.slane %v172, 7
    %v4595 = vperm.slane %v173, 1
    %v4596 = vperm.slane %v173, 3
    %v4597 = vperm.slane %v173, 5
    %v4598 = vperm.slane %v173, 7
    %v4599 = vperm.slane %v174, 1
    %v4600 = vperm.slane %v174, 3
    %v4601 = vperm.slane %v174, 5
    %v4602 = vperm.slane %v174, 7
    %v4603 = vperm.slane %v175, 1
    %v4604 = vperm.slane %v175, 3
    %v4605 = vperm.slane %v175, 5
    %v4606 = vperm.slane %v175, 7
    %v4607 = vperm.slane %v176, 1
    %v4608 = vperm.slane %v176, 3
    %v4609 = vperm.slane %v176, 5
    %v4610 = vperm.slane %v176, 7
    %v4611 = vperm.slane %v177, 1
    %v4612 = vperm.slane %v177, 3
    %v4613 = vperm.slane %v177, 5
    %v4614 = vperm.slane %v177, 7
    %v4615 = vperm.slane %v178, 1
    %v4616 = vperm.slane %v178, 3
    %v4617 = vperm.slane %v178, 5
    %v4618 = vperm.slane %v178, 7
    %v4619 = vperm.slane %v179, 1
    %v4620 = vperm.slane %v179, 3
    %v4621 = vperm.slane %v179, 5
    %v4622 = vperm.slane %v179, 7
    %v4623 = vperm.slane %v180, 1
    %v4624 = vperm.slane %v180, 3
    %v4625 = vperm.slane %v180, 5
    %v4626 = vperm.slane %v180, 7
    %v4627 = vperm.slane %v181, 1
    %v4628 = vperm.slane %v181, 3
    %v4629 = vperm.slane %v181, 5
    %v4630 = vperm.slane %v181, 7
    %v4631 = vperm.slane %v182, 1
    %v4632 = vperm.slane %v182, 3
    %v4633 = vperm.slane %v182, 5
    %v4634 = vperm.slane %v182, 7
    %v4635 = vperm.slane %v183, 1
    %v4636 = vperm.slane %v183, 3
    %v4637 = vperm.slane %v183, 5
    %v4638 = vperm.slane %v183, 7
    %v4639 = vperm.slane %v184, 1
    %v4640 = vperm.slane %v184, 3
    %v4641 = vperm.slane %v184, 5
    %v4642 = vperm.slane %v184, 7
    %v4643 = vperm.slane %v185, 1
    %v4644 = vperm.slane %v185, 3
    %v4645 = vperm.slane %v185, 5
    %v4646 = vperm.slane %v185, 7
    %v4647 = vperm.slane %v186, 1
    %v4648 = vperm.slane %v186, 3
    %v4649 = vperm.slane %v186, 5
    %v4650 = vperm.slane %v186, 7
    %v4651 = vperm.slane %v187, 1
    %v4652 = vperm.slane %v187, 3
    %v4653 = vperm.slane %v187, 5
    %v4654 = vperm.slane %v187, 7
    %v4655 = vperm.slane %v188, 1
    %v4656 = vperm.slane %v188, 3
    %v4657 = vperm.slane %v188, 5
    %v4658 = vperm.slane %v188, 7
    %v4659 = vperm.slane %v189, 1
    %v4660 = vperm.slane %v189, 3
    %v4661 = vperm.slane %v189, 5
    %v4662 = vperm.slane %v189, 7
    %v4663 = vperm.slane %v190, 1
    %v4664 = vperm.slane %v190, 3
    %v4665 = vperm.slane %v190, 5
    %v4666 = vperm.slane %v190, 7
    %v4667 = vperm.slane %v191, 1
    %v4668 = vperm.slane %v191, 3
    %v4669 = vperm.slane %v191, 5
    %v4670 = vperm.slane %v191, 7
    %v4671 = vperm.slane %v192, 1
    %v4672 = vperm.slane %v192, 3
    %v4673 = vperm.slane %v192, 5
    %v4674 = vperm.slane %v192, 7
    %v4675 = vperm.slane %v193, 1
    %v4676 = vperm.slane %v193, 3
    %v4677 = vperm.slane %v193, 5
    %v4678 = vperm.slane %v193, 7
    %v4679 = vperm.slane %v194, 1
    %v4680 = vperm.slane %v194, 3
    %v4681 = vperm.slane %v194, 5
    %v4682 = vperm.slane %v194, 7
    %v4683 = vperm.slane %v195, 1
    %v4684 = vperm.slane %v195, 3
    %v4685 = vperm.slane %v195, 5
    %v4686 = vperm.slane %v195, 7
    %v4687 = vperm.slane %v196, 1
    %v4688 = vperm.slane %v196, 3
    %v4689 = vperm.slane %v196, 5
    %v4690 = vperm.slane %v196, 7
    %v4691 = vperm.slane %v197, 1
    %v4692 = vperm.slane %v197, 3
    %v4693 = vperm.slane %v197, 5
    %v4694 = vperm.slane %v197, 7
    %v4695 = vperm.slane %v198, 1
    %v4696 = vperm.slane %v198, 3
    %v4697 = vperm.slane %v198, 5
    %v4698 = vperm.slane %v198, 7
    %v4699 = vperm.slane %v199, 1
    %v4700 = vperm.slane %v199, 3
    %v4701 = vperm.slane %v199, 5
    %v4702 = vperm.slane %v199, 7
    %v4703 = vperm.slane %v200, 1
    %v4704 = vperm.slane %v200, 3
    %v4705 = vperm.slane %v200, 5
    %v4706 = vperm.slane %v200, 7
    %v4707 = vperm.slane %v201, 1
    %v4708 = vperm.slane %v201, 3
    %v4709 = vperm.slane %v201, 5
    %v4710 = vperm.slane %v201, 7
    %v4711 = vperm.slane %v202, 1
    %v4712 = vperm.slane %v202, 3
    %v4713 = vperm.slane %v202, 5
    %v4714 = vperm.slane %v202, 7
    %v5155 = vperm.slane %v4275, 1
    %v5156 = vperm.slane %v4276, 1
    %v5157 = vperm.slane %v4277, 1
    %v5158 = vperm.slane %v4278, 1
    %v5159 = vperm.slane %v4279, 1
    %v5160 = vperm.slane %v4280, 1
    %v5161 = vperm.slane %v4281, 1
    %v5162 = vperm.slane %v4282, 1
    %v5163 = vperm.slane %v4283, 1
    %v5164 = vperm.slane %v4284, 1
    %v5165 = vperm.slane %v4285, 1
    %v5166 = vperm.slane %v4286, 1
    %v5167 = vperm.slane %v4287, 1
    %v5168 = vperm.slane %v4288, 1
    %v5169 = vperm.slane %v4289, 1
    %v5170 = vperm.slane %v4290, 1
    %v5171 = vperm.slane %v4291, 1
    %v5172 = vperm.slane %v4292, 1
    %v5173 = vperm.slane %v4293, 1
    %v5174 = vperm.slane %v4294, 1
    %v5175 = vperm.slane %v4295, 1
    %v5176 = vperm.slane %v4296, 1
    %v5177 = vperm.slane %v4297, 1
    %v5178 = vperm.slane %v4298, 1
    %v5179 = vperm.slane %v4299, 1
    %v5180 = vperm.slane %v4300, 1
    %v5181 = vperm.slane %v4301, 1
    %v5182 = vperm.slane %v4302, 1
    %v5183 = vperm.slane %v4303, 1
    %v5184 = vperm.slane %v4304, 1
    %v5185 = vperm.slane %v4305, 1
    %v5186 = vperm.slane %v4306, 1
    %v5187 = vperm.slane %v4307, 1
    %v5188 = vperm.slane %v4308, 1
    %v5189 = vperm.slane %v4309, 1
    %v5190 = vperm.slane %v4310, 1
    %v5191 = vperm.slane %v4311, 1
    %v5192 = vperm.slane %v4312, 1
    %v5193 = vperm.slane %v4313, 1
    %v5194 = vperm.slane %v4314, 1
    %v5195 = vperm.slane %v4315, 1
    %v5196 = vperm.slane %v4316, 1
    %v5197 = vperm.slane %v4317, 1
    %v5198 = vperm.slane %v4318, 1
    %v5199 = vperm.slane %v4319, 1
    %v5200 = vperm.slane %v4320, 1
    %v5201 = vperm.slane %v4321, 1
    %v5202 = vperm.slane %v4322, 1
    %v5203 = vperm.slane %v4323, 1
    %v5204 = vperm.slane %v4324, 1
    %v5205 = vperm.slane %v4325, 1
    %v5206 = vperm.slane %v4326, 1
    %v5207 = vperm.slane %v4327, 1
    %v5208 = vperm.slane %v4328, 1
    %v5209 = vperm.slane %v4329, 1
    %v5210 = vperm.slane %v4330, 1
    %v5211 = vperm.slane %v4331, 1
    %v5212 = vperm.slane %v4332, 1
    %v5213 = vperm.slane %v4333, 1
    %v5214 = vperm.slane %v4334, 1
    %v5215 = vperm.slane %v4335, 1
    %v5216 = vperm.slane %v4336, 1
    %v5217 = vperm.slane %v4337, 1
    %v5218 = vperm.slane %v4338, 1
    %v5219 = vperm.slane %v4339, 1
    %v5220 = vperm.slane %v4340, 1
    %v5221 = vperm.slane %v4341, 1
    %v5222 = vperm.slane %v4342, 1
    %v5223 = vperm.slane %v4343, 1
    %v5224 = vperm.slane %v4344, 1
    %v5225 = vperm.slane %v4345, 1
    %v5226 = vperm.slane %v4346, 1
    %v5227 = vperm.slane %v4347, 1
    %v5228 = vperm.slane %v4348, 1
    %v5229 = vperm.slane %v4349, 1
    %v5230 = vperm.slane %v4350, 1
    %v5231 = vperm.slane %v4351, 1
    %v5232 = vperm.slane %v4352, 1
    %v5233 = vperm.slane %v4353, 1
    %v5234 = vperm.slane %v4354, 1
    %v5235 = vperm.slane %v4355, 1
    %v5236 = vperm.slane %v4356, 1
    %v5237 = vperm.slane %v4357, 1
    %v5238 = vperm.slane %v4358, 1
    %v5239 = vperm.slane %v4359, 1
    %v5240 = vperm.slane %v4360, 1
    %v5241 = vperm.slane %v4361, 1
    %v5242 = vperm.slane %v4362, 1
    %v5243 = vperm.slane %v4363, 1
    %v5244 = vperm.slane %v4364, 1
    %v5245 = vperm.slane %v4365, 1
    %v5246 = vperm.slane %v4366, 1
    %v5247 = vperm.slane %v4367, 1
    %v5248 = vperm.slane %v4368, 1
    %v5249 = vperm.slane %v4369, 1
    %v5250 = vperm.slane %v4370, 1
    %v5251 = vperm.slane %v4371, 1
    %v5252 = vperm.slane %v4372, 1
    %v5253 = vperm.slane %v4373, 1
    %v5254 = vperm.slane %v4374, 1
    %v5255 = vperm.slane %v4375, 1
    %v5256 = vperm.slane %v4376, 1
    %v5257 = vperm.slane %v4377, 1
    %v5258 = vperm.slane %v4378, 1
    %v5259 = vperm.slane %v4379, 1
    %v5260 = vperm.slane %v4380, 1
    %v5261 = vperm.slane %v4381, 1
    %v5262 = vperm.slane %v4382, 1
    %v5263 = vperm.slane %v4383, 1
    %v5264 = vperm.slane %v4384, 1
    %v5265 = vperm.slane %v4385, 1
    %v5266 = vperm.slane %v4386, 1
    %v5267 = vperm.slane %v4387, 1
    %v5268 = vperm.slane %v4388, 1
    %v5269 = vperm.slane %v4389, 1
    %v5270 = vperm.slane %v4390, 1
    %v5271 = vperm.slane %v4391, 1
    %v5272 = vperm.slane %v4392, 1
    %v5273 = vperm.slane %v4393, 1
    %v5274 = vperm.slane %v4394, 1
    %v5275 = vperm.slane %v4395, 1
    %v5276 = vperm.slane %v4396, 1
    %v5277 = vperm.slane %v4397, 1
    %v5278 = vperm.slane %v4398, 1
    %v5279 = vperm.slane %v4399, 1
    %v5280 = vperm.slane %v4400, 1
    %v5281 = vperm.slane %v4401, 1
    %v5282 = vperm.slane %v4402, 1
    %v5283 = vperm.slane %v4403, 1
    %v5284 = vperm.slane %v4404, 1
    %v5285 = vperm.slane %v4405, 1
    %v5286 = vperm.slane %v4406, 1
    %v5287 = vperm.slane %v4407, 1
    %v5288 = vperm.slane %v4408, 1
    %v5289 = vperm.slane %v4409, 1
    %v5290 = vperm.slane %v4410, 1
    %v5291 = vperm.slane %v4411, 1
    %v5292 = vperm.slane %v4412, 1
    %v5293 = vperm.slane %v4413, 1
    %v5294 = vperm.slane %v4414, 1
    %v5295 = vperm.slane %v4415, 1
    %v5296 = vperm.slane %v4416, 1
    %v5297 = vperm.slane %v4417, 1
    %v5298 = vperm.slane %v4418, 1
    %v5299 = vperm.slane %v4419, 1
    %v5300 = vperm.slane %v4420, 1
    %v5301 = vperm.slane %v4421, 1
    %v5302 = vperm.slane %v4422, 1
    %v5303 = vperm.slane %v4423, 1
    %v5304 = vperm.slane %v4424, 1
    %v5305 = vperm.slane %v4425, 1
    %v5306 = vperm.slane %v4426, 1
    %v5307 = vperm.slane %v4427, 1
    %v5308 = vperm.slane %v4428, 1
    %v5309 = vperm.slane %v4429, 1
    %v5310 = vperm.slane %v4430, 1
    %v5311 = vperm.slane %v4431, 1
    %v5312 = vperm.slane %v4432, 1
    %v5313 = vperm.slane %v4433, 1
    %v5314 = vperm.slane %v4434, 1
    %v5315 = vperm.slane %v4435, 1
    %v5316 = vperm.slane %v4436, 1
    %v5317 = vperm.slane %v4437, 1
    %v5318 = vperm.slane %v4438, 1
    %v5319 = vperm.slane %v4439, 1
    %v5320 = vperm.slane %v4440, 1
    %v5321 = vperm.slane %v4441, 1
    %v5322 = vperm.slane %v4442, 1
    %v5323 = vperm.slane %v4443, 1
    %v5324 = vperm.slane %v4444, 1
    %v5325 = vperm.slane %v4445, 1
    %v5326 = vperm.slane %v4446, 1
    %v5327 = vperm.slane %v4447, 1
    %v5328 = vperm.slane %v4448, 1
    %v5329 = vperm.slane %v4449, 1
    %v5330 = vperm.slane %v4450, 1
    %v5331 = vperm.slane %v4451, 1
    %v5332 = vperm.slane %v4452, 1
    %v5333 = vperm.slane %v4453, 1
    %v5334 = vperm.slane %v4454, 1
    %v5335 = vperm.slane %v4455, 1
    %v5336 = vperm.slane %v4456, 1
    %v5337 = vperm.slane %v4457, 1
    %v5338 = vperm.slane %v4458, 1
    %v5339 = vperm.slane %v4459, 1
    %v5340 = vperm.slane %v4460, 1
    %v5341 = vperm.slane %v4461, 1
    %v5342 = vperm.slane %v4462, 1
    %v5343 = vperm.slane %v4463, 1
    %v5344 = vperm.slane %v4464, 1
    %v5345 = vperm.slane %v4465, 1
    %v5346 = vperm.slane %v4466, 1
    %v5347 = vperm.slane %v4467, 1
    %v5348 = vperm.slane %v4468, 1
    %v5349 = vperm.slane %v4469, 1
    %v5350 = vperm.slane %v4470, 1
    %v5351 = vperm.slane %v4471, 1
    %v5352 = vperm.slane %v4472, 1
    %v5353 = vperm.slane %v4473, 1
    %v5354 = vperm.slane %v4474, 1
    %v5355 = vperm.slane %v4475, 1
    %v5356 = vperm.slane %v4476, 1
    %v5357 = vperm.slane %v4477, 1
    %v5358 = vperm.slane %v4478, 1
    %v5359 = vperm.slane %v4479, 1
    %v5360 = vperm.slane %v4480, 1
    %v5361 = vperm.slane %v4481, 1
    %v5362 = vperm.slane %v4482, 1
    %v5363 = vperm.slane %v4483, 1
    %v5364 = vperm.slane %v4484, 1
    %v5365 = vperm.slane %v4485, 1
    %v5366 = vperm.slane %v4486, 1
    %v5367 = vperm.slane %v4487, 1
    %v5368 = vperm.slane %v4488, 1
    %v5369 = vperm.slane %v4489, 1
    %v5370 = vperm.slane %v4490, 1
    %v5371 = vperm.slane %v4491, 1
    %v5372 = vperm.slane %v4492, 1
    %v5373 = vperm.slane %v4493, 1
    %v5374 = vperm.slane %v4494, 1
    %v5375 = vperm.slane %v4495, 1
    %v5376 = vperm.slane %v4496, 1
    %v5377 = vperm.slane %v4497, 1
    %v5378 = vperm.slane %v4498, 1
    %v5379 = vperm.slane %v4499, 1
    %v5380 = vperm.slane %v4500, 1
    %v5381 = vperm.slane %v4501, 1
    %v5382 = vperm.slane %v4502, 1
    %v5383 = vperm.slane %v4503, 1
    %v5384 = vperm.slane %v4504, 1
    %v5385 = vperm.slane %v4505, 1
    %v5386 = vperm.slane %v4506, 1
    %v5387 = vperm.slane %v4507, 1
    %v5388 = vperm.slane %v4508, 1
    %v5389 = vperm.slane %v4509, 1
    %v5390 = vperm.slane %v4510, 1
    %v5391 = vperm.slane %v4511, 1
    %v5392 = vperm.slane %v4512, 1
    %v5393 = vperm.slane %v4513, 1
    %v5394 = vperm.slane %v4514, 1
    %v5395 = vperm.slane %v4515, 1
    %v5396 = vperm.slane %v4516, 1
    %v5397 = vperm.slane %v4517, 1
    %v5398 = vperm.slane %v4518, 1
    %v5399 = vperm.slane %v4519, 1
    %v5400 = vperm.slane %v4520, 1
    %v5401 = vperm.slane %v4521, 1
    %v5402 = vperm.slane %v4522, 1
    %v5403 = vperm.slane %v4523, 1
    %v5404 = vperm.slane %v4524, 1
    %v5405 = vperm.slane %v4525, 1
    %v5406 = vperm.slane %v4526, 1
    %v5407 = vperm.slane %v4527, 1
    %v5408 = vperm.slane %v4528, 1
    %v5409 = vperm.slane %v4529, 1
    %v5410 = vperm.slane %v4530, 1
    %v5411 = vperm.slane %v4531, 1
    %v5412 = vperm.slane %v4532, 1
    %v5413 = vperm.slane %v4533, 1
    %v5414 = vperm.slane %v4534, 1
    %v5415 = vperm.slane %v4535, 1
    %v5416 = vperm.slane %v4536, 1
    %v5417 = vperm.slane %v4537, 1
    %v5418 = vperm.slane %v4538, 1
    %v5419 = vperm.slane %v4539, 1
    %v5420 = vperm.slane %v4540, 1
    %v5421 = vperm.slane %v4541, 1
    %v5422 = vperm.slane %v4542, 1
    %v5423 = vperm.slane %v4543, 1
    %v5424 = vperm.slane %v4544, 1
    %v5425 = vperm.slane %v4545, 1
    %v5426 = vperm.slane %v4546, 1
    %v5427 = vperm.slane %v4547, 1
    %v5428 = vperm.slane %v4548, 1
    %v5429 = vperm.slane %v4549, 1
    %v5430 = vperm.slane %v4550, 1
    %v5431 = vperm.slane %v4551, 1
    %v5432 = vperm.slane %v4552, 1
    %v5433 = vperm.slane %v4553, 1
    %v5434 = vperm.slane %v4554, 1
    %v5435 = vperm.slane %v4555, 1
    %v5436 = vperm.slane %v4556, 1
    %v5437 = vperm.slane %v4557, 1
    %v5438 = vperm.slane %v4558, 1
    %v5439 = vperm.slane %v4559, 1
    %v5440 = vperm.slane %v4560, 1
    %v5441 = vperm.slane %v4561, 1
    %v5442 = vperm.slane %v4562, 1
    %v5443 = vperm.slane %v4563, 1
    %v5444 = vperm.slane %v4564, 1
    %v5445 = vperm.slane %v4565, 1
    %v5446 = vperm.slane %v4566, 1
    %v5447 = vperm.slane %v4567, 1
    %v5448 = vperm.slane %v4568, 1
    %v5449 = vperm.slane %v4569, 1
    %v5450 = vperm.slane %v4570, 1
    %v5451 = vperm.slane %v4571, 1
    %v5452 = vperm.slane %v4572, 1
    %v5453 = vperm.slane %v4573, 1
    %v5454 = vperm.slane %v4574, 1
    %v5455 = vperm.slane %v4575, 1
    %v5456 = vperm.slane %v4576, 1
    %v5457 = vperm.slane %v4577, 1
    %v5458 = vperm.slane %v4578, 1
    %v5459 = vperm.slane %v4579, 1
    %v5460 = vperm.slane %v4580, 1
    %v5461 = vperm.slane %v4581, 1
    %v5462 = vperm.slane %v4582, 1
    %v5463 = vperm.slane %v4583, 1
    %v5464 = vperm.slane %v4584, 1
    %v5465 = vperm.slane %v4585, 1
    %v5466 = vperm.slane %v4586, 1
    %v5467 = vperm.slane %v4587, 1
    %v5468 = vperm.slane %v4588, 1
    %v5469 = vperm.slane %v4589, 1
    %v5470 = vperm.slane %v4590, 1
    %v5471 = vperm.slane %v4591, 1
    %v5472 = vperm.slane %v4592, 1
    %v5473 = vperm.slane %v4593, 1
    %v5474 = vperm.slane %v4594, 1
    %v5475 = vperm.slane %v4595, 1
    %v5476 = vperm.slane %v4596, 1
    %v5477 = vperm.slane %v4597, 1
    %v5478 = vperm.slane %v4598, 1
    %v5479 = vperm.slane %v4599, 1
    %v5480 = vperm.slane %v4600, 1
    %v5481 = vperm.slane %v4601, 1
    %v5482 = vperm.slane %v4602, 1
    %v5483 = vperm.slane %v4603, 1
    %v5484 = vperm.slane %v4604, 1
    %v5485 = vperm.slane %v4605, 1
    %v5486 = vperm.slane %v4606, 1
    %v5487 = vperm.slane %v4607, 1
    %v5488 = vperm.slane %v4608, 1
    %v5489 = vperm.slane %v4609, 1
    %v5490 = vperm.slane %v4610, 1
    %v5491 = vperm.slane %v4611, 1
    %v5492 = vperm.slane %v4612, 1
    %v5493 = vperm.slane %v4613, 1
    %v5494 = vperm.slane %v4614, 1
    %v5495 = vperm.slane %v4615, 1
    %v5496 = vperm.slane %v4616, 1
    %v5497 = vperm.slane %v4617, 1
    %v5498 = vperm.slane %v4618, 1
    %v5499 = vperm.slane %v4619, 1
    %v5500 = vperm.slane %v4620, 1
    %v5501 = vperm.slane %v4621, 1
    %v5502 = vperm.slane %v4622, 1
    %v5503 = vperm.slane %v4623, 1
    %v5504 = vperm.slane %v4624, 1
    %v5505 = vperm.slane %v4625, 1
    %v5506 = vperm.slane %v4626, 1
    %v5507 = vperm.slane %v4627, 1
    %v5508 = vperm.slane %v4628, 1
    %v5509 = vperm.slane %v4629, 1
    %v5510 = vperm.slane %v4630, 1
    %v5511 = vperm.slane %v4631, 1
    %v5512 = vperm.slane %v4632, 1
    %v5513 = vperm.slane %v4633, 1
    %v5514 = vperm.slane %v4634, 1
    %v5515 = vperm.slane %v4635, 1
    %v5516 = vperm.slane %v4636, 1
    %v5517 = vperm.slane %v4637, 1
    %v5518 = vperm.slane %v4638, 1
    %v5519 = vperm.slane %v4639, 1
    %v5520 = vperm.slane %v4640, 1
    %v5521 = vperm.slane %v4641, 1
    %v5522 = vperm.slane %v4642, 1
    %v5523 = vperm.slane %v4643, 1
    %v5524 = vperm.slane %v4644, 1
    %v5525 = vperm.slane %v4645, 1
    %v5526 = vperm.slane %v4646, 1
    %v5527 = vperm.slane %v4647, 1
    %v5528 = vperm.slane %v4648, 1
    %v5529 = vperm.slane %v4649, 1
    %v5530 = vperm.slane %v4650, 1
    %v5531 = vperm.slane %v4651, 1
    %v5532 = vperm.slane %v4652, 1
    %v5533 = vperm.slane %v4653, 1
    %v5534 = vperm.slane %v4654, 1
    %v5535 = vperm.slane %v4655, 1
    %v5536 = vperm.slane %v4656, 1
    %v5537 = vperm.slane %v4657, 1
    %v5538 = vperm.slane %v4658, 1
    %v5539 = vperm.slane %v4659, 1
    %v5540 = vperm.slane %v4660, 1
    %v5541 = vperm.slane %v4661, 1
    %v5542 = vperm.slane %v4662, 1
    %v5543 = vperm.slane %v4663, 1
    %v5544 = vperm.slane %v4664, 1
    %v5545 = vperm.slane %v4665, 1
    %v5546 = vperm.slane %v4666, 1
    %v5547 = vperm.slane %v4667, 1
    %v5548 = vperm.slane %v4668, 1
    %v5549 = vperm.slane %v4669, 1
    %v5550 = vperm.slane %v4670, 1
    %v5551 = vperm.slane %v4671, 1
    %v5552 = vperm.slane %v4672, 1
    %v5553 = vperm.slane %v4673, 1
    %v5554 = vperm.slane %v4674, 1
    %v5555 = vperm.slane %v4675, 1
    %v5556 = vperm.slane %v4676, 1
    %v5557 = vperm.slane %v4677, 1
    %v5558 = vperm.slane %v4678, 1
    %v5559 = vperm.slane %v4679, 1
    %v5560 = vperm.slane %v4680, 1
    %v5561 = vperm.slane %v4681, 1
    %v5562 = vperm.slane %v4682, 1
    %v5563 = vperm.slane %v4683, 1
    %v5564 = vperm.slane %v4684, 1
    %v5565 = vperm.slane %v4685, 1
    %v5566 = vperm.slane %v4686, 1
    %v5567 = vperm.slane %v4687, 1
    %v5568 = vperm.slane %v4688, 1
    %v5569 = vperm.slane %v4689, 1
    %v5570 = vperm.slane %v4690, 1
    %v5571 = vperm.slane %v4691, 1
    %v5572 = vperm.slane %v4692, 1
    %v5573 = vperm.slane %v4693, 1
    %v5574 = vperm.slane %v4694, 1
    %v5575 = vperm.slane %v4695, 1
    %v5576 = vperm.slane %v4696, 1
    %v5577 = vperm.slane %v4697, 1
    %v5578 = vperm.slane %v4698, 1
    %v5579 = vperm.slane %v4699, 1
    %v5580 = vperm.slane %v4700, 1
    %v5581 = vperm.slane %v4701, 1
    %v5582 = vperm.slane %v4702, 1
    %v5583 = vperm.slane %v4703, 1
    %v5584 = vperm.slane %v4704, 1
    %v5585 = vperm.slane %v4705, 1
    %v5586 = vperm.slane %v4706, 1
    %v5587 = vperm.slane %v4707, 1
    %v5588 = vperm.slane %v4708, 1
    %v5589 = vperm.slane %v4709, 1
    %v5590 = vperm.slane %v4710, 1
    %v5591 = vperm.slane %v4711, 1
    %v5592 = vperm.slane %v4712, 1
    %v5593 = vperm.slane %v4713, 1
    %v5594 = vperm.slane %v4714, 1
    %v5595 = vmul.f32 %v203, %v5155
    %v5596 = vmul.f32 %v204, %v5156
    %v5597 = vmul.f32 %v205, %v5157
    %v5598 = vmul.f32 %v206, %v5158
    %v5599 = vmul.f32 %v207, %v5159
    %v5600 = vmul.f32 %v208, %v5160
    %v5601 = vmul.f32 %v209, %v5161
    %v5602 = vmul.f32 %v210, %v5162
    %v5603 = vmul.f32 %v211, %v5163
    %v5604 = vmul.f32 %v212, %v5164
    %v5605 = vmul.f32 %v213, %v5165
    %v5606 = vmul.f32 %v214, %v5166
    %v5607 = vmul.f32 %v215, %v5167
    %v5608 = vmul.f32 %v216, %v5168
    %v5609 = vmul.f32 %v217, %v5169
    %v5610 = vmul.f32 %v218, %v5170
    %v5611 = vmul.f32 %v219, %v5171
    %v5612 = vmul.f32 %v220, %v5172
    %v5613 = vmul.f32 %v221, %v5173
    %v5614 = vmul.f32 %v222, %v5174
    %v5615 = vmul.f32 %v223, %v5175
    %v5616 = vmul.f32 %v224, %v5176
    %v5617 = vmul.f32 %v225, %v5177
    %v5618 = vmul.f32 %v226, %v5178
    %v5619 = vmul.f32 %v227, %v5179
    %v5620 = vmul.f32 %v228, %v5180
    %v5621 = vmul.f32 %v229, %v5181
    %v5622 = vmul.f32 %v230, %v5182
    %v5623 = vmul.f32 %v231, %v5183
    %v5624 = vmul.f32 %v232, %v5184
    %v5625 = vmul.f32 %v233, %v5185
    %v5626 = vmul.f32 %v234, %v5186
    %v5627 = vmul.f32 %v235, %v5187
    %v5628 = vmul.f32 %v236, %v5188
    %v5629 = vmul.f32 %v237, %v5189
    %v5630 = vmul.f32 %v238, %v5190
    %v5631 = vmul.f32 %v239, %v5191
    %v5632 = vmul.f32 %v240, %v5192
    %v5633 = vmul.f32 %v241, %v5193
    %v5634 = vmul.f32 %v242, %v5194
    %v5635 = vmul.f32 %v243, %v5195
    %v5636 = vmul.f32 %v244, %v5196
    %v5637 = vmul.f32 %v245, %v5197
    %v5638 = vmul.f32 %v246, %v5198
    %v5639 = vmul.f32 %v247, %v5199
    %v5640 = vmul.f32 %v248, %v5200
    %v5641 = vmul.f32 %v249, %v5201
    %v5642 = vmul.f32 %v250, %v5202
    %v5643 = vmul.f32 %v251, %v5203
    %v5644 = vmul.f32 %v252, %v5204
    %v5645 = vmul.f32 %v253, %v5205
    %v5646 = vmul.f32 %v254, %v5206
    %v5647 = vmul.f32 %v255, %v5207
    %v5648 = vmul.f32 %v256, %v5208
    %v5649 = vmul.f32 %v257, %v5209
    %v5650 = vmul.f32 %v258, %v5210
    %v5651 = vmul.f32 %v259, %v5211
    %v5652 = vmul.f32 %v260, %v5212
    %v5653 = vmul.f32 %v261, %v5213
    %v5654 = vmul.f32 %v262, %v5214
    %v5655 = vmul.f32 %v263, %v5215
    %v5656 = vmul.f32 %v264, %v5216
    %v5657 = vmul.f32 %v265, %v5217
    %v5658 = vmul.f32 %v266, %v5218
    %v5659 = vmul.f32 %v267, %v5219
    %v5660 = vmul.f32 %v268, %v5220
    %v5661 = vmul.f32 %v269, %v5221
    %v5662 = vmul.f32 %v270, %v5222
    %v5663 = vmul.f32 %v271, %v5223
    %v5664 = vmul.f32 %v272, %v5224
    %v5665 = vmul.f32 %v273, %v5225
    %v5666 = vmul.f32 %v274, %v5226
    %v5667 = vmul.f32 %v275, %v5227
    %v5668 = vmul.f32 %v276, %v5228
    %v5669 = vmul.f32 %v277, %v5229
    %v5670 = vmul.f32 %v278, %v5230
    %v5671 = vmul.f32 %v279, %v5231
    %v5672 = vmul.f32 %v280, %v5232
    %v5673 = vmul.f32 %v281, %v5233
    %v5674 = vmul.f32 %v282, %v5234
    %v5675 = vmul.f32 %v283, %v5235
    %v5676 = vmul.f32 %v284, %v5236
    %v5677 = vmul.f32 %v285, %v5237
    %v5678 = vmul.f32 %v286, %v5238
    %v5679 = vmul.f32 %v287, %v5239
    %v5680 = vmul.f32 %v288, %v5240
    %v5681 = vmul.f32 %v289, %v5241
    %v5682 = vmul.f32 %v290, %v5242
    %v5683 = vmul.f32 %v291, %v5243
    %v5684 = vmul.f32 %v292, %v5244
    %v5685 = vmul.f32 %v293, %v5245
    %v5686 = vmul.f32 %v294, %v5246
    %v5687 = vmul.f32 %v295, %v5247
    %v5688 = vmul.f32 %v296, %v5248
    %v5689 = vmul.f32 %v297, %v5249
    %v5690 = vmul.f32 %v298, %v5250
    %v5691 = vmul.f32 %v299, %v5251
    %v5692 = vmul.f32 %v300, %v5252
    %v5693 = vmul.f32 %v301, %v5253
    %v5694 = vmul.f32 %v302, %v5254
    %v5695 = vmul.f32 %v303, %v5255
    %v5696 = vmul.f32 %v304, %v5256
    %v5697 = vmul.f32 %v305, %v5257
    %v5698 = vmul.f32 %v306, %v5258
    %v5699 = vmul.f32 %v307, %v5259
    %v5700 = vmul.f32 %v308, %v5260
    %v5701 = vmul.f32 %v309, %v5261
    %v5702 = vmul.f32 %v310, %v5262
    %v5703 = vmul.f32 %v311, %v5263
    %v5704 = vmul.f32 %v312, %v5264
    %v5705 = vmul.f32 %v313, %v5265
    %v5706 = vmul.f32 %v314, %v5266
    %v5707 = vmul.f32 %v315, %v5267
    %v5708 = vmul.f32 %v316, %v5268
    %v5709 = vmul.f32 %v317, %v5269
    %v5710 = vmul.f32 %v318, %v5270
    %v5711 = vmul.f32 %v319, %v5271
    %v5712 = vmul.f32 %v320, %v5272
    %v5713 = vmul.f32 %v321, %v5273
    %v5714 = vmul.f32 %v322, %v5274
    %v5715 = vmul.f32 %v323, %v5275
    %v5716 = vmul.f32 %v324, %v5276
    %v5717 = vmul.f32 %v325, %v5277
    %v5718 = vmul.f32 %v326, %v5278
    %v5719 = vmul.f32 %v327, %v5279
    %v5720 = vmul.f32 %v328, %v5280
    %v5721 = vmul.f32 %v329, %v5281
    %v5722 = vmul.f32 %v330, %v5282
    %v5723 = vmul.f32 %v331, %v5283
    %v5724 = vmul.f32 %v332, %v5284
    %v5725 = vmul.f32 %v333, %v5285
    %v5726 = vmul.f32 %v334, %v5286
    %v5727 = vmul.f32 %v335, %v5287
    %v5728 = vmul.f32 %v336, %v5288
    %v5729 = vmul.f32 %v337, %v5289
    %v5730 = vmul.f32 %v338, %v5290
    %v5731 = vmul.f32 %v339, %v5291
    %v5732 = vmul.f32 %v340, %v5292
    %v5733 = vmul.f32 %v341, %v5293
    %v5734 = vmul.f32 %v342, %v5294
    %v5735 = vmul.f32 %v343, %v5295
    %v5736 = vmul.f32 %v344, %v5296
    %v5737 = vmul.f32 %v345, %v5297
    %v5738 = vmul.f32 %v346, %v5298
    %v5739 = vmul.f32 %v347, %v5299
    %v5740 = vmul.f32 %v348, %v5300
    %v5741 = vmul.f32 %v349, %v5301
    %v5742 = vmul.f32 %v350, %v5302
    %v5743 = vmul.f32 %v351, %v5303
    %v5744 = vmul.f32 %v352, %v5304
    %v5745 = vmul.f32 %v353, %v5305
    %v5746 = vmul.f32 %v354, %v5306
    %v5747 = vmul.f32 %v355, %v5307
    %v5748 = vmul.f32 %v356, %v5308
    %v5749 = vmul.f32 %v357, %v5309
    %v5750 = vmul.f32 %v358, %v5310
    %v5751 = vmul.f32 %v359, %v5311
    %v5752 = vmul.f32 %v360, %v5312
    %v5753 = vmul.f32 %v361, %v5313
    %v5754 = vmul.f32 %v362, %v5314
    %v5755 = vmul.f32 %v363, %v5315
    %v5756 = vmul.f32 %v364, %v5316
    %v5757 = vmul.f32 %v365, %v5317
    %v5758 = vmul.f32 %v366, %v5318
    %v5759 = vmul.f32 %v367, %v5319
    %v5760 = vmul.f32 %v368, %v5320
    %v5761 = vmul.f32 %v369, %v5321
    %v5762 = vmul.f32 %v370, %v5322
    %v5763 = vmul.f32 %v371, %v5323
    %v5764 = vmul.f32 %v372, %v5324
    %v5765 = vmul.f32 %v373, %v5325
    %v5766 = vmul.f32 %v374, %v5326
    %v5767 = vmul.f32 %v375, %v5327
    %v5768 = vmul.f32 %v376, %v5328
    %v5769 = vmul.f32 %v377, %v5329
    %v5770 = vmul.f32 %v378, %v5330
    %v5771 = vmul.f32 %v379, %v5331
    %v5772 = vmul.f32 %v380, %v5332
    %v5773 = vmul.f32 %v381, %v5333
    %v5774 = vmul.f32 %v382, %v5334
    %v5775 = vmul.f32 %v383, %v5335
    %v5776 = vmul.f32 %v384, %v5336
    %v5777 = vmul.f32 %v385, %v5337
    %v5778 = vmul.f32 %v386, %v5338
    %v5779 = vmul.f32 %v387, %v5339
    %v5780 = vmul.f32 %v388, %v5340
    %v5781 = vmul.f32 %v389, %v5341
    %v5782 = vmul.f32 %v390, %v5342
    %v5783 = vmul.f32 %v391, %v5343
    %v5784 = vmul.f32 %v392, %v5344
    %v5785 = vmul.f32 %v393, %v5345
    %v5786 = vmul.f32 %v394, %v5346
    %v5787 = vmul.f32 %v395, %v5347
    %v5788 = vmul.f32 %v396, %v5348
    %v5789 = vmul.f32 %v397, %v5349
    %v5790 = vmul.f32 %v398, %v5350
    %v5791 = vmul.f32 %v399, %v5351
    %v5792 = vmul.f32 %v400, %v5352
    %v5793 = vmul.f32 %v401, %v5353
    %v5794 = vmul.f32 %v402, %v5354
    %v5795 = vmul.f32 %v403, %v5355
    %v5796 = vmul.f32 %v404, %v5356
    %v5797 = vmul.f32 %v405, %v5357
    %v5798 = vmul.f32 %v406, %v5358
    %v5799 = vmul.f32 %v407, %v5359
    %v5800 = vmul.f32 %v408, %v5360
    %v5801 = vmul.f32 %v409, %v5361
    %v5802 = vmul.f32 %v410, %v5362
    %v5803 = vmul.f32 %v411, %v5363
    %v5804 = vmul.f32 %v412, %v5364
    %v5805 = vmul.f32 %v413, %v5365
    %v5806 = vmul.f32 %v414, %v5366
    %v5807 = vmul.f32 %v415, %v5367
    %v5808 = vmul.f32 %v416, %v5368
    %v5809 = vmul.f32 %v417, %v5369
    %v5810 = vmul.f32 %v418, %v5370
    %v5811 = vmul.f32 %v419, %v5371
    %v5812 = vmul.f32 %v420, %v5372
    %v5813 = vmul.f32 %v421, %v5373
    %v5814 = vmul.f32 %v422, %v5374
    %v5815 = vmul.f32 %v423, %v5375
    %v5816 = vmul.f32 %v424, %v5376
    %v5817 = vmul.f32 %v425, %v5377
    %v5818 = vmul.f32 %v426, %v5378
    %v5819 = vmul.f32 %v427, %v5379
    %v5820 = vmul.f32 %v428, %v5380
    %v5821 = vmul.f32 %v429, %v5381
    %v5822 = vmul.f32 %v430, %v5382
    %v5823 = vmul.f32 %v431, %v5383
    %v5824 = vmul.f32 %v432, %v5384
    %v5825 = vmul.f32 %v433, %v5385
    %v5826 = vmul.f32 %v434, %v5386
    %v5827 = vmul.f32 %v435, %v5387
    %v5828 = vmul.f32 %v436, %v5388
    %v5829 = vmul.f32 %v437, %v5389
    %v5830 = vmul.f32 %v438, %v5390
    %v5831 = vmul.f32 %v439, %v5391
    %v5832 = vmul.f32 %v440, %v5392
    %v5833 = vmul.f32 %v441, %v5393
    %v5834 = vmul.f32 %v442, %v5394
    %v5835 = vmul.f32 %v443, %v5395
    %v5836 = vmul.f32 %v444, %v5396
    %v5837 = vmul.f32 %v445, %v5397
    %v5838 = vmul.f32 %v446, %v5398
    %v5839 = vmul.f32 %v447, %v5399
    %v5840 = vmul.f32 %v448, %v5400
    %v5841 = vmul.f32 %v449, %v5401
    %v5842 = vmul.f32 %v450, %v5402
    %v5843 = vmul.f32 %v451, %v5403
    %v5844 = vmul.f32 %v452, %v5404
    %v5845 = vmul.f32 %v453, %v5405
    %v5846 = vmul.f32 %v454, %v5406
    %v5847 = vmul.f32 %v455, %v5407
    %v5848 = vmul.f32 %v456, %v5408
    %v5849 = vmul.f32 %v457, %v5409
    %v5850 = vmul.f32 %v458, %v5410
    %v5851 = vmul.f32 %v459, %v5411
    %v5852 = vmul.f32 %v460, %v5412
    %v5853 = vmul.f32 %v461, %v5413
    %v5854 = vmul.f32 %v462, %v5414
    %v5855 = vmul.f32 %v463, %v5415
    %v5856 = vmul.f32 %v464, %v5416
    %v5857 = vmul.f32 %v465, %v5417
    %v5858 = vmul.f32 %v466, %v5418
    %v5859 = vmul.f32 %v467, %v5419
    %v5860 = vmul.f32 %v468, %v5420
    %v5861 = vmul.f32 %v469, %v5421
    %v5862 = vmul.f32 %v470, %v5422
    %v5863 = vmul.f32 %v471, %v5423
    %v5864 = vmul.f32 %v472, %v5424
    %v5865 = vmul.f32 %v473, %v5425
    %v5866 = vmul.f32 %v474, %v5426
    %v5867 = vmul.f32 %v475, %v5427
    %v5868 = vmul.f32 %v476, %v5428
    %v5869 = vmul.f32 %v477, %v5429
    %v5870 = vmul.f32 %v478, %v5430
    %v5871 = vmul.f32 %v479, %v5431
    %v5872 = vmul.f32 %v480, %v5432
    %v5873 = vmul.f32 %v481, %v5433
    %v5874 = vmul.f32 %v482, %v5434
    %v5875 = vmul.f32 %v483, %v5435
    %v5876 = vmul.f32 %v484, %v5436
    %v5877 = vmul.f32 %v485, %v5437
    %v5878 = vmul.f32 %v486, %v5438
    %v5879 = vmul.f32 %v487, %v5439
    %v5880 = vmul.f32 %v488, %v5440
    %v5881 = vmul.f32 %v489, %v5441
    %v5882 = vmul.f32 %v490, %v5442
    %v5883 = vmul.f32 %v491, %v5443
    %v5884 = vmul.f32 %v492, %v5444
    %v5885 = vmul.f32 %v493, %v5445
    %v5886 = vmul.f32 %v494, %v5446
    %v5887 = vmul.f32 %v495, %v5447
    %v5888 = vmul.f32 %v496, %v5448
    %v5889 = vmul.f32 %v497, %v5449
    %v5890 = vmul.f32 %v498, %v5450
    %v5891 = vmul.f32 %v499, %v5451
    %v5892 = vmul.f32 %v500, %v5452
    %v5893 = vmul.f32 %v501, %v5453
    %v5894 = vmul.f32 %v502, %v5454
    %v5895 = vmul.f32 %v503, %v5455
    %v5896 = vmul.f32 %v504, %v5456
    %v5897 = vmul.f32 %v505, %v5457
    %v5898 = vmul.f32 %v506, %v5458
    %v5899 = vmul.f32 %v507, %v5459
    %v5900 = vmul.f32 %v508, %v5460
    %v5901 = vmul.f32 %v509, %v5461
    %v5902 = vmul.f32 %v510, %v5462
    %v5903 = vmul.f32 %v511, %v5463
    %v5904 = vmul.f32 %v512, %v5464
    %v5905 = vmul.f32 %v513, %v5465
    %v5906 = vmul.f32 %v514, %v5466
    %v5907 = vmul.f32 %v515, %v5467
    %v5908 = vmul.f32 %v516, %v5468
    %v5909 = vmul.f32 %v517, %v5469
    %v5910 = vmul.f32 %v518, %v5470
    %v5911 = vmul.f32 %v519, %v5471
    %v5912 = vmul.f32 %v520, %v5472
    %v5913 = vmul.f32 %v521, %v5473
    %v5914 = vmul.f32 %v522, %v5474
    %v5915 = vmul.f32 %v523, %v5475
    %v5916 = vmul.f32 %v524, %v5476
    %v5917 = vmul.f32 %v525, %v5477
    %v5918 = vmul.f32 %v526, %v5478
    %v5919 = vmul.f32 %v527, %v5479
    %v5920 = vmul.f32 %v528, %v5480
    %v5921 = vmul.f32 %v529, %v5481
    %v5922 = vmul.f32 %v530, %v5482
    %v5923 = vmul.f32 %v531, %v5483
    %v5924 = vmul.f32 %v532, %v5484
    %v5925 = vmul.f32 %v533, %v5485
    %v5926 = vmul.f32 %v534, %v5486
    %v5927 = vmul.f32 %v535, %v5487
    %v5928 = vmul.f32 %v536, %v5488
    %v5929 = vmul.f32 %v537, %v5489
    %v5930 = vmul.f32 %v538, %v5490
    %v5931 = vmul.f32 %v539, %v5491
    %v5932 = vmul.f32 %v540, %v5492
    %v5933 = vmul.f32 %v541, %v5493
    %v5934 = vmul.f32 %v542, %v5494
    %v5935 = vmul.f32 %v543, %v5495
    %v5936 = vmul.f32 %v544, %v5496
    %v5937 = vmul.f32 %v545, %v5497
    %v5938 = vmul.f32 %v546, %v5498
    %v5939 = vmul.f32 %v547, %v5499
    %v5940 = vmul.f32 %v548, %v5500
    %v5941 = vmul.f32 %v549, %v5501
    %v5942 = vmul.f32 %v550, %v5502
    %v5943 = vmul.f32 %v551, %v5503
    %v5944 = vmul.f32 %v552, %v5504
    %v5945 = vmul.f32 %v553, %v5505
    %v5946 = vmul.f32 %v554, %v5506
    %v5947 = vmul.f32 %v555, %v5507
    %v5948 = vmul.f32 %v556, %v5508
    %v5949 = vmul.f32 %v557, %v5509
    %v5950 = vmul.f32 %v558, %v5510
    %v5951 = vmul.f32 %v559, %v5511
    %v5952 = vmul.f32 %v560, %v5512
    %v5953 = vmul.f32 %v561, %v5513
    %v5954 = vmul.f32 %v562, %v5514
    %v5955 = vmul.f32 %v563, %v5515
    %v5956 = vmul.f32 %v564, %v5516
    %v5957 = vmul.f32 %v565, %v5517
    %v5958 = vmul.f32 %v566, %v5518
    %v5959 = vmul.f32 %v567, %v5519
    %v5960 = vmul.f32 %v568, %v5520
    %v5961 = vmul.f32 %v569, %v5521
    %v5962 = vmul.f32 %v570, %v5522
    %v5963 = vmul.f32 %v571, %v5523
    %v5964 = vmul.f32 %v572, %v5524
    %v5965 = vmul.f32 %v573, %v5525
    %v5966 = vmul.f32 %v574, %v5526
    %v5967 = vmul.f32 %v575, %v5527
    %v5968 = vmul.f32 %v576, %v5528
    %v5969 = vmul.f32 %v577, %v5529
    %v5970 = vmul.f32 %v578, %v5530
    %v5971 = vmul.f32 %v579, %v5531
    %v5972 = vmul.f32 %v580, %v5532
    %v5973 = vmul.f32 %v581, %v5533
    %v5974 = vmul.f32 %v582, %v5534
    %v5975 = vmul.f32 %v583, %v5535
    %v5976 = vmul.f32 %v584, %v5536
    %v5977 = vmul.f32 %v585, %v5537
    %v5978 = vmul.f32 %v586, %v5538
    %v5979 = vmul.f32 %v587, %v5539
    %v5980 = vmul.f32 %v588, %v5540
    %v5981 = vmul.f32 %v589, %v5541
    %v5982 = vmul.f32 %v590, %v5542
    %v5983 = vmul.f32 %v591, %v5543
    %v5984 = vmul.f32 %v592, %v5544
    %v5985 = vmul.f32 %v593, %v5545
    %v5986 = vmul.f32 %v594, %v5546
    %v5987 = vmul.f32 %v595, %v5547
    %v5988 = vmul.f32 %v596, %v5548
    %v5989 = vmul.f32 %v597, %v5549
    %v5990 = vmul.f32 %v598, %v5550
    %v5991 = vmul.f32 %v599, %v5551
    %v5992 = vmul.f32 %v600, %v5552
    %v5993 = vmul.f32 %v601, %v5553
    %v5994 = vmul.f32 %v602, %v5554
    %v5995 = vmul.f32 %v603, %v5555
    %v5996 = vmul.f32 %v604, %v5556
    %v5997 = vmul.f32 %v605, %v5557
    %v5998 = vmul.f32 %v606, %v5558
    %v5999 = vmul.f32 %v607, %v5559
    %v6000 = vmul.f32 %v608, %v5560
    %v6001 = vmul.f32 %v609, %v5561
    %v6002 = vmul.f32 %v610, %v5562
    %v6003 = vmul.f32 %v611, %v5563
    %v6004 = vmul.f32 %v612, %v5564
    %v6005 = vmul.f32 %v613, %v5565
    %v6006 = vmul.f32 %v614, %v5566
    %v6007 = vmul.f32 %v615, %v5567
    %v6008 = vmul.f32 %v616, %v5568
    %v6009 = vmul.f32 %v617, %v5569
    %v6010 = vmul.f32 %v618, %v5570
    %v6011 = vmul.f32 %v619, %v5571
    %v6012 = vmul.f32 %v620, %v5572
    %v6013 = vmul.f32 %v621, %v5573
    %v6014 = vmul.f32 %v622, %v5574
    %v6015 = vmul.f32 %v623, %v5575
    %v6016 = vmul.f32 %v624, %v5576
    %v6017 = vmul.f32 %v625, %v5577
    %v6018 = vmul.f32 %v626, %v5578
    %v6019 = vmul.f32 %v627, %v5579
    %v6020 = vmul.f32 %v628, %v5580
    %v6021 = vmul.f32 %v629, %v5581
    %v6022 = vmul.f32 %v630, %v5582
    %v6023 = vmul.f32 %v631, %v5583
    %v6024 = vmul.f32 %v632, %v5584
    %v6025 = vmul.f32 %v633, %v5585
    %v6026 = vmul.f32 %v634, %v5586
    %v6027 = vmul.f32 %v635, %v5587
    %v6028 = vmul.f32 %v636, %v5588
    %v6029 = vmul.f32 %v637, %v5589
    %v6030 = vmul.f32 %v638, %v5590
    %v6031 = vmul.f32 %v639, %v5591
    %v6032 = vmul.f32 %v640, %v5592
    %v6033 = vmul.f32 %v641, %v5593
    %v6034 = vmul.f32 %v642, %v5594
    %v6035 = vmul.f32 %v643, %v5155
    %v6036 = vmul.f32 %v644, %v5156
    %v6037 = vmul.f32 %v645, %v5157
    %v6038 = vmul.f32 %v646, %v5158
    %v6039 = vmul.f32 %v647, %v5159
    %v6040 = vmul.f32 %v648, %v5160
    %v6041 = vmul.f32 %v649, %v5161
    %v6042 = vmul.f32 %v650, %v5162
    %v6043 = vmul.f32 %v651, %v5163
    %v6044 = vmul.f32 %v652, %v5164
    %v6045 = vmul.f32 %v653, %v5165
    %v6046 = vmul.f32 %v654, %v5166
    %v6047 = vmul.f32 %v655, %v5167
    %v6048 = vmul.f32 %v656, %v5168
    %v6049 = vmul.f32 %v657, %v5169
    %v6050 = vmul.f32 %v658, %v5170
    %v6051 = vmul.f32 %v659, %v5171
    %v6052 = vmul.f32 %v660, %v5172
    %v6053 = vmul.f32 %v661, %v5173
    %v6054 = vmul.f32 %v662, %v5174
    %v6055 = vmul.f32 %v663, %v5175
    %v6056 = vmul.f32 %v664, %v5176
    %v6057 = vmul.f32 %v665, %v5177
    %v6058 = vmul.f32 %v666, %v5178
    %v6059 = vmul.f32 %v667, %v5179
    %v6060 = vmul.f32 %v668, %v5180
    %v6061 = vmul.f32 %v669, %v5181
    %v6062 = vmul.f32 %v670, %v5182
    %v6063 = vmul.f32 %v671, %v5183
    %v6064 = vmul.f32 %v672, %v5184
    %v6065 = vmul.f32 %v673, %v5185
    %v6066 = vmul.f32 %v674, %v5186
    %v6067 = vmul.f32 %v675, %v5187
    %v6068 = vmul.f32 %v676, %v5188
    %v6069 = vmul.f32 %v677, %v5189
    %v6070 = vmul.f32 %v678, %v5190
    %v6071 = vmul.f32 %v679, %v5191
    %v6072 = vmul.f32 %v680, %v5192
    %v6073 = vmul.f32 %v681, %v5193
    %v6074 = vmul.f32 %v682, %v5194
    %v6075 = vmul.f32 %v683, %v5195
    %v6076 = vmul.f32 %v684, %v5196
    %v6077 = vmul.f32 %v685, %v5197
    %v6078 = vmul.f32 %v686, %v5198
    %v6079 = vmul.f32 %v687, %v5199
    %v6080 = vmul.f32 %v688, %v5200
    %v6081 = vmul.f32 %v689, %v5201
    %v6082 = vmul.f32 %v690, %v5202
    %v6083 = vmul.f32 %v691, %v5203
    %v6084 = vmul.f32 %v692, %v5204
    %v6085 = vmul.f32 %v693, %v5205
    %v6086 = vmul.f32 %v694, %v5206
    %v6087 = vmul.f32 %v695, %v5207
    %v6088 = vmul.f32 %v696, %v5208
    %v6089 = vmul.f32 %v697, %v5209
    %v6090 = vmul.f32 %v698, %v5210
    %v6091 = vmul.f32 %v699, %v5211
    %v6092 = vmul.f32 %v700, %v5212
    %v6093 = vmul.f32 %v701, %v5213
    %v6094 = vmul.f32 %v702, %v5214
    %v6095 = vmul.f32 %v703, %v5215
    %v6096 = vmul.f32 %v704, %v5216
    %v6097 = vmul.f32 %v705, %v5217
    %v6098 = vmul.f32 %v706, %v5218
    %v6099 = vmul.f32 %v707, %v5219
    %v6100 = vmul.f32 %v708, %v5220
    %v6101 = vmul.f32 %v709, %v5221
    %v6102 = vmul.f32 %v710, %v5222
    %v6103 = vmul.f32 %v711, %v5223
    %v6104 = vmul.f32 %v712, %v5224
    %v6105 = vmul.f32 %v713, %v5225
    %v6106 = vmul.f32 %v714, %v5226
    %v6107 = vmul.f32 %v715, %v5227
    %v6108 = vmul.f32 %v716, %v5228
    %v6109 = vmul.f32 %v717, %v5229
    %v6110 = vmul.f32 %v718, %v5230
    %v6111 = vmul.f32 %v719, %v5231
    %v6112 = vmul.f32 %v720, %v5232
    %v6113 = vmul.f32 %v721, %v5233
    %v6114 = vmul.f32 %v722, %v5234
    %v6115 = vmul.f32 %v723, %v5235
    %v6116 = vmul.f32 %v724, %v5236
    %v6117 = vmul.f32 %v725, %v5237
    %v6118 = vmul.f32 %v726, %v5238
    %v6119 = vmul.f32 %v727, %v5239
    %v6120 = vmul.f32 %v728, %v5240
    %v6121 = vmul.f32 %v729, %v5241
    %v6122 = vmul.f32 %v730, %v5242
    %v6123 = vmul.f32 %v731, %v5243
    %v6124 = vmul.f32 %v732, %v5244
    %v6125 = vmul.f32 %v733, %v5245
    %v6126 = vmul.f32 %v734, %v5246
    %v6127 = vmul.f32 %v735, %v5247
    %v6128 = vmul.f32 %v736, %v5248
    %v6129 = vmul.f32 %v737, %v5249
    %v6130 = vmul.f32 %v738, %v5250
    %v6131 = vmul.f32 %v739, %v5251
    %v6132 = vmul.f32 %v740, %v5252
    %v6133 = vmul.f32 %v741, %v5253
    %v6134 = vmul.f32 %v742, %v5254
    %v6135 = vmul.f32 %v743, %v5255
    %v6136 = vmul.f32 %v744, %v5256
    %v6137 = vmul.f32 %v745, %v5257
    %v6138 = vmul.f32 %v746, %v5258
    %v6139 = vmul.f32 %v747, %v5259
    %v6140 = vmul.f32 %v748, %v5260
    %v6141 = vmul.f32 %v749, %v5261
    %v6142 = vmul.f32 %v750, %v5262
    %v6143 = vmul.f32 %v751, %v5263
    %v6144 = vmul.f32 %v752, %v5264
    %v6145 = vmul.f32 %v753, %v5265
    %v6146 = vmul.f32 %v754, %v5266
    %v6147 = vmul.f32 %v755, %v5267
    %v6148 = vmul.f32 %v756, %v5268
    %v6149 = vmul.f32 %v757, %v5269
    %v6150 = vmul.f32 %v758, %v5270
    %v6151 = vmul.f32 %v759, %v5271
    %v6152 = vmul.f32 %v760, %v5272
    %v6153 = vmul.f32 %v761, %v5273
    %v6154 = vmul.f32 %v762, %v5274
    %v6155 = vmul.f32 %v763, %v5275
    %v6156 = vmul.f32 %v764, %v5276
    %v6157 = vmul.f32 %v765, %v5277
    %v6158 = vmul.f32 %v766, %v5278
    %v6159 = vmul.f32 %v767, %v5279
    %v6160 = vmul.f32 %v768, %v5280
    %v6161 = vmul.f32 %v769, %v5281
    %v6162 = vmul.f32 %v770, %v5282
    %v6163 = vmul.f32 %v771, %v5283
    %v6164 = vmul.f32 %v772, %v5284
    %v6165 = vmul.f32 %v773, %v5285
    %v6166 = vmul.f32 %v774, %v5286
    %v6167 = vmul.f32 %v775, %v5287
    %v6168 = vmul.f32 %v776, %v5288
    %v6169 = vmul.f32 %v777, %v5289
    %v6170 = vmul.f32 %v778, %v5290
    %v6171 = vmul.f32 %v779, %v5291
    %v6172 = vmul.f32 %v780, %v5292
    %v6173 = vmul.f32 %v781, %v5293
    %v6174 = vmul.f32 %v782, %v5294
    %v6175 = vmul.f32 %v783, %v5295
    %v6176 = vmul.f32 %v784, %v5296
    %v6177 = vmul.f32 %v785, %v5297
    %v6178 = vmul.f32 %v786, %v5298
    %v6179 = vmul.f32 %v787, %v5299
    %v6180 = vmul.f32 %v788, %v5300
    %v6181 = vmul.f32 %v789, %v5301
    %v6182 = vmul.f32 %v790, %v5302
    %v6183 = vmul.f32 %v791, %v5303
    %v6184 = vmul.f32 %v792, %v5304
    %v6185 = vmul.f32 %v793, %v5305
    %v6186 = vmul.f32 %v794, %v5306
    %v6187 = vmul.f32 %v795, %v5307
    %v6188 = vmul.f32 %v796, %v5308
    %v6189 = vmul.f32 %v797, %v5309
    %v6190 = vmul.f32 %v798, %v5310
    %v6191 = vmul.f32 %v799, %v5311
    %v6192 = vmul.f32 %v800, %v5312
    %v6193 = vmul.f32 %v801, %v5313
    %v6194 = vmul.f32 %v802, %v5314
    %v6195 = vmul.f32 %v803, %v5315
    %v6196 = vmul.f32 %v804, %v5316
    %v6197 = vmul.f32 %v805, %v5317
    %v6198 = vmul.f32 %v806, %v5318
    %v6199 = vmul.f32 %v807, %v5319
    %v6200 = vmul.f32 %v808, %v5320
    %v6201 = vmul.f32 %v809, %v5321
    %v6202 = vmul.f32 %v810, %v5322
    %v6203 = vmul.f32 %v811, %v5323
    %v6204 = vmul.f32 %v812, %v5324
    %v6205 = vmul.f32 %v813, %v5325
    %v6206 = vmul.f32 %v814, %v5326
    %v6207 = vmul.f32 %v815, %v5327
    %v6208 = vmul.f32 %v816, %v5328
    %v6209 = vmul.f32 %v817, %v5329
    %v6210 = vmul.f32 %v818, %v5330
    %v6211 = vmul.f32 %v819, %v5331
    %v6212 = vmul.f32 %v820, %v5332
    %v6213 = vmul.f32 %v821, %v5333
    %v6214 = vmul.f32 %v822, %v5334
    %v6215 = vmul.f32 %v823, %v5335
    %v6216 = vmul.f32 %v824, %v5336
    %v6217 = vmul.f32 %v825, %v5337
    %v6218 = vmul.f32 %v826, %v5338
    %v6219 = vmul.f32 %v827, %v5339
    %v6220 = vmul.f32 %v828, %v5340
    %v6221 = vmul.f32 %v829, %v5341
    %v6222 = vmul.f32 %v830, %v5342
    %v6223 = vmul.f32 %v831, %v5343
    %v6224 = vmul.f32 %v832, %v5344
    %v6225 = vmul.f32 %v833, %v5345
    %v6226 = vmul.f32 %v834, %v5346
    %v6227 = vmul.f32 %v835, %v5347
    %v6228 = vmul.f32 %v836, %v5348
    %v6229 = vmul.f32 %v837, %v5349
    %v6230 = vmul.f32 %v838, %v5350
    %v6231 = vmul.f32 %v839, %v5351
    %v6232 = vmul.f32 %v840, %v5352
    %v6233 = vmul.f32 %v841, %v5353
    %v6234 = vmul.f32 %v842, %v5354
    %v6235 = vmul.f32 %v843, %v5355
    %v6236 = vmul.f32 %v844, %v5356
    %v6237 = vmul.f32 %v845, %v5357
    %v6238 = vmul.f32 %v846, %v5358
    %v6239 = vmul.f32 %v847, %v5359
    %v6240 = vmul.f32 %v848, %v5360
    %v6241 = vmul.f32 %v849, %v5361
    %v6242 = vmul.f32 %v850, %v5362
    %v6243 = vmul.f32 %v851, %v5363
    %v6244 = vmul.f32 %v852, %v5364
    %v6245 = vmul.f32 %v853, %v5365
    %v6246 = vmul.f32 %v854, %v5366
    %v6247 = vmul.f32 %v855, %v5367
    %v6248 = vmul.f32 %v856, %v5368
    %v6249 = vmul.f32 %v857, %v5369
    %v6250 = vmul.f32 %v858, %v5370
    %v6251 = vmul.f32 %v859, %v5371
    %v6252 = vmul.f32 %v860, %v5372
    %v6253 = vmul.f32 %v861, %v5373
    %v6254 = vmul.f32 %v862, %v5374
    %v6255 = vmul.f32 %v863, %v5375
    %v6256 = vmul.f32 %v864, %v5376
    %v6257 = vmul.f32 %v865, %v5377
    %v6258 = vmul.f32 %v866, %v5378
    %v6259 = vmul.f32 %v867, %v5379
    %v6260 = vmul.f32 %v868, %v5380
    %v6261 = vmul.f32 %v869, %v5381
    %v6262 = vmul.f32 %v870, %v5382
    %v6263 = vmul.f32 %v871, %v5383
    %v6264 = vmul.f32 %v872, %v5384
    %v6265 = vmul.f32 %v873, %v5385
    %v6266 = vmul.f32 %v874, %v5386
    %v6267 = vmul.f32 %v875, %v5387
    %v6268 = vmul.f32 %v876, %v5388
    %v6269 = vmul.f32 %v877, %v5389
    %v6270 = vmul.f32 %v878, %v5390
    %v6271 = vmul.f32 %v879, %v5391
    %v6272 = vmul.f32 %v880, %v5392
    %v6273 = vmul.f32 %v881, %v5393
    %v6274 = vmul.f32 %v882, %v5394
    %v6275 = vmul.f32 %v883, %v5395
    %v6276 = vmul.f32 %v884, %v5396
    %v6277 = vmul.f32 %v885, %v5397
    %v6278 = vmul.f32 %v886, %v5398
    %v6279 = vmul.f32 %v887, %v5399
    %v6280 = vmul.f32 %v888, %v5400
    %v6281 = vmul.f32 %v889, %v5401
    %v6282 = vmul.f32 %v890, %v5402
    %v6283 = vmul.f32 %v891, %v5403
    %v6284 = vmul.f32 %v892, %v5404
    %v6285 = vmul.f32 %v893, %v5405
    %v6286 = vmul.f32 %v894, %v5406
    %v6287 = vmul.f32 %v895, %v5407
    %v6288 = vmul.f32 %v896, %v5408
    %v6289 = vmul.f32 %v897, %v5409
    %v6290 = vmul.f32 %v898, %v5410
    %v6291 = vmul.f32 %v899, %v5411
    %v6292 = vmul.f32 %v900, %v5412
    %v6293 = vmul.f32 %v901, %v5413
    %v6294 = vmul.f32 %v902, %v5414
    %v6295 = vmul.f32 %v903, %v5415
    %v6296 = vmul.f32 %v904, %v5416
    %v6297 = vmul.f32 %v905, %v5417
    %v6298 = vmul.f32 %v906, %v5418
    %v6299 = vmul.f32 %v907, %v5419
    %v6300 = vmul.f32 %v908, %v5420
    %v6301 = vmul.f32 %v909, %v5421
    %v6302 = vmul.f32 %v910, %v5422
    %v6303 = vmul.f32 %v911, %v5423
    %v6304 = vmul.f32 %v912, %v5424
    %v6305 = vmul.f32 %v913, %v5425
    %v6306 = vmul.f32 %v914, %v5426
    %v6307 = vmul.f32 %v915, %v5427
    %v6308 = vmul.f32 %v916, %v5428
    %v6309 = vmul.f32 %v917, %v5429
    %v6310 = vmul.f32 %v918, %v5430
    %v6311 = vmul.f32 %v919, %v5431
    %v6312 = vmul.f32 %v920, %v5432
    %v6313 = vmul.f32 %v921, %v5433
    %v6314 = vmul.f32 %v922, %v5434
    %v6315 = vmul.f32 %v923, %v5435
    %v6316 = vmul.f32 %v924, %v5436
    %v6317 = vmul.f32 %v925, %v5437
    %v6318 = vmul.f32 %v926, %v5438
    %v6319 = vmul.f32 %v927, %v5439
    %v6320 = vmul.f32 %v928, %v5440
    %v6321 = vmul.f32 %v929, %v5441
    %v6322 = vmul.f32 %v930, %v5442
    %v6323 = vmul.f32 %v931, %v5443
    %v6324 = vmul.f32 %v932, %v5444
    %v6325 = vmul.f32 %v933, %v5445
    %v6326 = vmul.f32 %v934, %v5446
    %v6327 = vmul.f32 %v935, %v5447
    %v6328 = vmul.f32 %v936, %v5448
    %v6329 = vmul.f32 %v937, %v5449
    %v6330 = vmul.f32 %v938, %v5450
    %v6331 = vmul.f32 %v939, %v5451
    %v6332 = vmul.f32 %v940, %v5452
    %v6333 = vmul.f32 %v941, %v5453
    %v6334 = vmul.f32 %v942, %v5454
    %v6335 = vmul.f32 %v943, %v5455
    %v6336 = vmul.f32 %v944, %v5456
    %v6337 = vmul.f32 %v945, %v5457
    %v6338 = vmul.f32 %v946, %v5458
    %v6339 = vmul.f32 %v947, %v5459
    %v6340 = vmul.f32 %v948, %v5460
    %v6341 = vmul.f32 %v949, %v5461
    %v6342 = vmul.f32 %v950, %v5462
    %v6343 = vmul.f32 %v951, %v5463
    %v6344 = vmul.f32 %v952, %v5464
    %v6345 = vmul.f32 %v953, %v5465
    %v6346 = vmul.f32 %v954, %v5466
    %v6347 = vmul.f32 %v955, %v5467
    %v6348 = vmul.f32 %v956, %v5468
    %v6349 = vmul.f32 %v957, %v5469
    %v6350 = vmul.f32 %v958, %v5470
    %v6351 = vmul.f32 %v959, %v5471
    %v6352 = vmul.f32 %v960, %v5472
    %v6353 = vmul.f32 %v961, %v5473
    %v6354 = vmul.f32 %v962, %v5474
    %v6355 = vmul.f32 %v963, %v5475
    %v6356 = vmul.f32 %v964, %v5476
    %v6357 = vmul.f32 %v965, %v5477
    %v6358 = vmul.f32 %v966, %v5478
    %v6359 = vmul.f32 %v967, %v5479
    %v6360 = vmul.f32 %v968, %v5480
    %v6361 = vmul.f32 %v969, %v5481
    %v6362 = vmul.f32 %v970, %v5482
    %v6363 = vmul.f32 %v971, %v5483
    %v6364 = vmul.f32 %v972, %v5484
    %v6365 = vmul.f32 %v973, %v5485
    %v6366 = vmul.f32 %v974, %v5486
    %v6367 = vmul.f32 %v975, %v5487
    %v6368 = vmul.f32 %v976, %v5488
    %v6369 = vmul.f32 %v977, %v5489
    %v6370 = vmul.f32 %v978, %v5490
    %v6371 = vmul.f32 %v979, %v5491
    %v6372 = vmul.f32 %v980, %v5492
    %v6373 = vmul.f32 %v981, %v5493
    %v6374 = vmul.f32 %v982, %v5494
    %v6375 = vmul.f32 %v983, %v5495
    %v6376 = vmul.f32 %v984, %v5496
    %v6377 = vmul.f32 %v985, %v5497
    %v6378 = vmul.f32 %v986, %v5498
    %v6379 = vmul.f32 %v987, %v5499
    %v6380 = vmul.f32 %v988, %v5500
    %v6381 = vmul.f32 %v989, %v5501
    %v6382 = vmul.f32 %v990, %v5502
    %v6383 = vmul.f32 %v991, %v5503
    %v6384 = vmul.f32 %v992, %v5504
    %v6385 = vmul.f32 %v993, %v5505
    %v6386 = vmul.f32 %v994, %v5506
    %v6387 = vmul.f32 %v995, %v5507
    %v6388 = vmul.f32 %v996, %v5508
    %v6389 = vmul.f32 %v997, %v5509
    %v6390 = vmul.f32 %v998, %v5510
    %v6391 = vmul.f32 %v999, %v5511
    %v6392 = vmul.f32 %v1000, %v5512
    %v6393 = vmul.f32 %v1001, %v5513
    %v6394 = vmul.f32 %v1002, %v5514
    %v6395 = vmul.f32 %v1003, %v5515
    %v6396 = vmul.f32 %v1004, %v5516
    %v6397 = vmul.f32 %v1005, %v5517
    %v6398 = vmul.f32 %v1006, %v5518
    %v6399 = vmul.f32 %v1007, %v5519
    %v6400 = vmul.f32 %v1008, %v5520
    %v6401 = vmul.f32 %v1009, %v5521
    %v6402 = vmul.f32 %v1010, %v5522
    %v6403 = vmul.f32 %v1011, %v5523
    %v6404 = vmul.f32 %v1012, %v5524
    %v6405 = vmul.f32 %v1013, %v5525
    %v6406 = vmul.f32 %v1014, %v5526
    %v6407 = vmul.f32 %v1015, %v5527
    %v6408 = vmul.f32 %v1016, %v5528
    %v6409 = vmul.f32 %v1017, %v5529
    %v6410 = vmul.f32 %v1018, %v5530
    %v6411 = vmul.f32 %v1019, %v5531
    %v6412 = vmul.f32 %v1020, %v5532
    %v6413 = vmul.f32 %v1021, %v5533
    %v6414 = vmul.f32 %v1022, %v5534
    %v6415 = vmul.f32 %v1023, %v5535
    %v6416 = vmul.f32 %v1024, %v5536
    %v6417 = vmul.f32 %v1025, %v5537
    %v6418 = vmul.f32 %v1026, %v5538
    %v6419 = vmul.f32 %v1027, %v5539
    %v6420 = vmul.f32 %v1028, %v5540
    %v6421 = vmul.f32 %v1029, %v5541
    %v6422 = vmul.f32 %v1030, %v5542
    %v6423 = vmul.f32 %v1031, %v5543
    %v6424 = vmul.f32 %v1032, %v5544
    %v6425 = vmul.f32 %v1033, %v5545
    %v6426 = vmul.f32 %v1034, %v5546
    %v6427 = vmul.f32 %v1035, %v5547
    %v6428 = vmul.f32 %v1036, %v5548
    %v6429 = vmul.f32 %v1037, %v5549
    %v6430 = vmul.f32 %v1038, %v5550
    %v6431 = vmul.f32 %v1039, %v5551
    %v6432 = vmul.f32 %v1040, %v5552
    %v6433 = vmul.f32 %v1041, %v5553
    %v6434 = vmul.f32 %v1042, %v5554
    %v6435 = vmul.f32 %v1043, %v5555
    %v6436 = vmul.f32 %v1044, %v5556
    %v6437 = vmul.f32 %v1045, %v5557
    %v6438 = vmul.f32 %v1046, %v5558
    %v6439 = vmul.f32 %v1047, %v5559
    %v6440 = vmul.f32 %v1048, %v5560
    %v6441 = vmul.f32 %v1049, %v5561
    %v6442 = vmul.f32 %v1050, %v5562
    %v6443 = vmul.f32 %v1051, %v5563
    %v6444 = vmul.f32 %v1052, %v5564
    %v6445 = vmul.f32 %v1053, %v5565
    %v6446 = vmul.f32 %v1054, %v5566
    %v6447 = vmul.f32 %v1055, %v5567
    %v6448 = vmul.f32 %v1056, %v5568
    %v6449 = vmul.f32 %v1057, %v5569
    %v6450 = vmul.f32 %v1058, %v5570
    %v6451 = vmul.f32 %v1059, %v5571
    %v6452 = vmul.f32 %v1060, %v5572
    %v6453 = vmul.f32 %v1061, %v5573
    %v6454 = vmul.f32 %v1062, %v5574
    %v6455 = vmul.f32 %v1063, %v5575
    %v6456 = vmul.f32 %v1064, %v5576
    %v6457 = vmul.f32 %v1065, %v5577
    %v6458 = vmul.f32 %v1066, %v5578
    %v6459 = vmul.f32 %v1067, %v5579
    %v6460 = vmul.f32 %v1068, %v5580
    %v6461 = vmul.f32 %v1069, %v5581
    %v6462 = vmul.f32 %v1070, %v5582
    %v6463 = vmul.f32 %v1071, %v5583
    %v6464 = vmul.f32 %v1072, %v5584
    %v6465 = vmul.f32 %v1073, %v5585
    %v6466 = vmul.f32 %v1074, %v5586
    %v6467 = vmul.f32 %v1075, %v5587
    %v6468 = vmul.f32 %v1076, %v5588
    %v6469 = vmul.f32 %v1077, %v5589
    %v6470 = vmul.f32 %v1078, %v5590
    %v6471 = vmul.f32 %v1079, %v5591
    %v6472 = vmul.f32 %v1080, %v5592
    %v6473 = vmul.f32 %v1081, %v5593
    %v6474 = vmul.f32 %v1082, %v5594
    %v6475 = vadd.f32 %v5595, %v5596
    %v6476 = vadd.f32 %v6475, %v5597
    %v6477 = vadd.f32 %v6476, %v5598
    %v6478 = vadd.f32 %v6477, %v5599
    %v6479 = vadd.f32 %v6478, %v5600
    %v6480 = vadd.f32 %v6479, %v5601
    %v6481 = vadd.f32 %v6480, %v5602
    %v6482 = vadd.f32 %v6481, %v5603
    %v6483 = vadd.f32 %v6482, %v5604
    %v6484 = vadd.f32 %v6483, %v5605
    %v6485 = vadd.f32 %v6484, %v5606
    %v6486 = vadd.f32 %v6485, %v5607
    %v6487 = vadd.f32 %v6486, %v5608
    %v6488 = vadd.f32 %v6487, %v5609
    %v6489 = vadd.f32 %v6488, %v5610
    %v6490 = vadd.f32 %v6489, %v5611
    %v6491 = vadd.f32 %v6490, %v5612
    %v6492 = vadd.f32 %v6491, %v5613
    %v6493 = vadd.f32 %v6492, %v5614
    %v6494 = vadd.f32 %v6493, %v5615
    %v6495 = vadd.f32 %v6494, %v5616
    %v6496 = vadd.f32 %v6495, %v5617
    %v6497 = vadd.f32 %v6496, %v5618
    %v6498 = vadd.f32 %v6497, %v5619
    %v6499 = vadd.f32 %v6498, %v5620
    %v6500 = vadd.f32 %v6499, %v5621
    %v6501 = vadd.f32 %v6500, %v5622
    %v6502 = vadd.f32 %v6501, %v5623
    %v6503 = vadd.f32 %v6502, %v5624
    %v6504 = vadd.f32 %v6503, %v5625
    %v6505 = vadd.f32 %v6504, %v5626
    %v6506 = vadd.f32 %v6505, %v5627
    %v6507 = vadd.f32 %v6506, %v5628
    %v6508 = vadd.f32 %v6507, %v5629
    %v6509 = vadd.f32 %v6508, %v5630
    %v6510 = vadd.f32 %v6509, %v5631
    %v6511 = vadd.f32 %v6510, %v5632
    %v6512 = vadd.f32 %v6511, %v5633
    %v6513 = vadd.f32 %v6512, %v5634
    %v6514 = vadd.f32 %v6513, %v5635
    %v6515 = vadd.f32 %v6514, %v5636
    %v6516 = vadd.f32 %v6515, %v5637
    %v6517 = vadd.f32 %v6516, %v5638
    %v6518 = vadd.f32 %v6517, %v5639
    %v6519 = vadd.f32 %v6518, %v5640
    %v6520 = vadd.f32 %v6519, %v5641
    %v6521 = vadd.f32 %v6520, %v5642
    %v6522 = vadd.f32 %v6521, %v5643
    %v6523 = vadd.f32 %v6522, %v5644
    %v6524 = vadd.f32 %v6523, %v5645
    %v6525 = vadd.f32 %v6524, %v5646
    %v6526 = vadd.f32 %v6525, %v5647
    %v6527 = vadd.f32 %v6526, %v5648
    %v6528 = vadd.f32 %v6527, %v5649
    %v6529 = vadd.f32 %v6528, %v5650
    %v6530 = vadd.f32 %v6529, %v5651
    %v6531 = vadd.f32 %v6530, %v5652
    %v6532 = vadd.f32 %v6531, %v5653
    %v6533 = vadd.f32 %v6532, %v5654
    %v6534 = vadd.f32 %v6533, %v5655
    %v6535 = vadd.f32 %v6534, %v5656
    %v6536 = vadd.f32 %v6535, %v5657
    %v6537 = vadd.f32 %v6536, %v5658
    %v6538 = vadd.f32 %v6537, %v5659
    %v6539 = vadd.f32 %v6538, %v5660
    %v6540 = vadd.f32 %v6539, %v5661
    %v6541 = vadd.f32 %v6540, %v5662
    %v6542 = vadd.f32 %v6541, %v5663
    %v6543 = vadd.f32 %v6542, %v5664
    %v6544 = vadd.f32 %v6543, %v5665
    %v6545 = vadd.f32 %v6544, %v5666
    %v6546 = vadd.f32 %v6545, %v5667
    %v6547 = vadd.f32 %v6546, %v5668
    %v6548 = vadd.f32 %v6547, %v5669
    %v6549 = vadd.f32 %v6548, %v5670
    %v6550 = vadd.f32 %v6549, %v5671
    %v6551 = vadd.f32 %v6550, %v5672
    %v6552 = vadd.f32 %v6551, %v5673
    %v6553 = vadd.f32 %v6552, %v5674
    %v6554 = vadd.f32 %v6553, %v5675
    %v6555 = vadd.f32 %v6554, %v5676
    %v6556 = vadd.f32 %v6555, %v5677
    %v6557 = vadd.f32 %v6556, %v5678
    %v6558 = vadd.f32 %v6557, %v5679
    %v6559 = vadd.f32 %v6558, %v5680
    %v6560 = vadd.f32 %v6559, %v5681
    %v6561 = vadd.f32 %v6560, %v5682
    %v6562 = vadd.f32 %v6561, %v5683
    %v6563 = vadd.f32 %v6562, %v5684
    %v6564 = vadd.f32 %v6563, %v5685
    %v6565 = vadd.f32 %v6564, %v5686
    %v6566 = vadd.f32 %v6565, %v5687
    %v6567 = vadd.f32 %v6566, %v5688
    %v6568 = vadd.f32 %v6567, %v5689
    %v6569 = vadd.f32 %v6568, %v5690
    %v6570 = vadd.f32 %v6569, %v5691
    %v6571 = vadd.f32 %v6570, %v5692
    %v6572 = vadd.f32 %v6571, %v5693
    %v6573 = vadd.f32 %v6572, %v5694
    %v6574 = vadd.f32 %v6573, %v5695
    %v6575 = vadd.f32 %v6574, %v5696
    %v6576 = vadd.f32 %v6575, %v5697
    %v6577 = vadd.f32 %v6576, %v5698
    %v6578 = vadd.f32 %v6577, %v5699
    %v6579 = vadd.f32 %v6578, %v5700
    %v6580 = vadd.f32 %v6579, %v5701
    %v6581 = vadd.f32 %v6580, %v5702
    %v6582 = vadd.f32 %v6581, %v5703
    %v6583 = vadd.f32 %v6582, %v5704
    %v6584 = vadd.f32 %v6583, %v5705
    %v6585 = vadd.f32 %v6584, %v5706
    %v6586 = vadd.f32 %v6585, %v5707
    %v6587 = vadd.f32 %v6586, %v5708
    %v6588 = vadd.f32 %v6587, %v5709
    %v6589 = vadd.f32 %v6588, %v5710
    %v6590 = vadd.f32 %v6589, %v5711
    %v6591 = vadd.f32 %v6590, %v5712
    %v6592 = vadd.f32 %v6591, %v5713
    %v6593 = vadd.f32 %v6592, %v5714
    %v6594 = vadd.f32 %v6593, %v5715
    %v6595 = vadd.f32 %v6594, %v5716
    %v6596 = vadd.f32 %v6595, %v5717
    %v6597 = vadd.f32 %v6596, %v5718
    %v6598 = vadd.f32 %v6597, %v5719
    %v6599 = vadd.f32 %v6598, %v5720
    %v6600 = vadd.f32 %v6599, %v5721
    %v6601 = vadd.f32 %v6600, %v5722
    %v6602 = vadd.f32 %v6601, %v5723
    %v6603 = vadd.f32 %v6602, %v5724
    %v6604 = vadd.f32 %v6603, %v5725
    %v6605 = vadd.f32 %v6604, %v5726
    %v6606 = vadd.f32 %v6605, %v5727
    %v6607 = vadd.f32 %v6606, %v5728
    %v6608 = vadd.f32 %v6607, %v5729
    %v6609 = vadd.f32 %v6608, %v5730
    %v6610 = vadd.f32 %v6609, %v5731
    %v6611 = vadd.f32 %v6610, %v5732
    %v6612 = vadd.f32 %v6611, %v5733
    %v6613 = vadd.f32 %v6612, %v5734
    %v6614 = vadd.f32 %v6613, %v5735
    %v6615 = vadd.f32 %v6614, %v5736
    %v6616 = vadd.f32 %v6615, %v5737
    %v6617 = vadd.f32 %v6616, %v5738
    %v6618 = vadd.f32 %v6617, %v5739
    %v6619 = vadd.f32 %v6618, %v5740
    %v6620 = vadd.f32 %v6619, %v5741
    %v6621 = vadd.f32 %v6620, %v5742
    %v6622 = vadd.f32 %v6621, %v5743
    %v6623 = vadd.f32 %v6622, %v5744
    %v6624 = vadd.f32 %v6623, %v5745
    %v6625 = vadd.f32 %v6624, %v5746
    %v6626 = vadd.f32 %v6625, %v5747
    %v6627 = vadd.f32 %v6626, %v5748
    %v6628 = vadd.f32 %v6627, %v5749
    %v6629 = vadd.f32 %v6628, %v5750
    %v6630 = vadd.f32 %v6629, %v5751
    %v6631 = vadd.f32 %v6630, %v5752
    %v6632 = vadd.f32 %v6631, %v5753
    %v6633 = vadd.f32 %v6632, %v5754
    %v6634 = vadd.f32 %v6633, %v5755
    %v6635 = vadd.f32 %v6634, %v5756
    %v6636 = vadd.f32 %v6635, %v5757
    %v6637 = vadd.f32 %v6636, %v5758
    %v6638 = vadd.f32 %v6637, %v5759
    %v6639 = vadd.f32 %v6638, %v5760
    %v6640 = vadd.f32 %v6639, %v5761
    %v6641 = vadd.f32 %v6640, %v5762
    %v6642 = vadd.f32 %v6641, %v5763
    %v6643 = vadd.f32 %v6642, %v5764
    %v6644 = vadd.f32 %v6643, %v5765
    %v6645 = vadd.f32 %v6644, %v5766
    %v6646 = vadd.f32 %v6645, %v5767
    %v6647 = vadd.f32 %v6646, %v5768
    %v6648 = vadd.f32 %v6647, %v5769
    %v6649 = vadd.f32 %v6648, %v5770
    %v6650 = vadd.f32 %v6649, %v5771
    %v6651 = vadd.f32 %v6650, %v5772
    %v6652 = vadd.f32 %v6651, %v5773
    %v6653 = vadd.f32 %v6652, %v5774
    %v6654 = vadd.f32 %v6653, %v5775
    %v6655 = vadd.f32 %v6654, %v5776
    %v6656 = vadd.f32 %v6655, %v5777
    %v6657 = vadd.f32 %v6656, %v5778
    %v6658 = vadd.f32 %v6657, %v5779
    %v6659 = vadd.f32 %v6658, %v5780
    %v6660 = vadd.f32 %v6659, %v5781
    %v6661 = vadd.f32 %v6660, %v5782
    %v6662 = vadd.f32 %v6661, %v5783
    %v6663 = vadd.f32 %v6662, %v5784
    %v6664 = vadd.f32 %v6663, %v5785
    %v6665 = vadd.f32 %v6664, %v5786
    %v6666 = vadd.f32 %v6665, %v5787
    %v6667 = vadd.f32 %v6666, %v5788
    %v6668 = vadd.f32 %v6667, %v5789
    %v6669 = vadd.f32 %v6668, %v5790
    %v6670 = vadd.f32 %v6669, %v5791
    %v6671 = vadd.f32 %v6670, %v5792
    %v6672 = vadd.f32 %v6671, %v5793
    %v6673 = vadd.f32 %v6672, %v5794
    %v6674 = vadd.f32 %v6673, %v5795
    %v6675 = vadd.f32 %v6674, %v5796
    %v6676 = vadd.f32 %v6675, %v5797
    %v6677 = vadd.f32 %v6676, %v5798
    %v6678 = vadd.f32 %v6677, %v5799
    %v6679 = vadd.f32 %v6678, %v5800
    %v6680 = vadd.f32 %v6679, %v5801
    %v6681 = vadd.f32 %v6680, %v5802
    %v6682 = vadd.f32 %v6681, %v5803
    %v6683 = vadd.f32 %v6682, %v5804
    %v6684 = vadd.f32 %v6683, %v5805
    %v6685 = vadd.f32 %v6684, %v5806
    %v6686 = vadd.f32 %v6685, %v5807
    %v6687 = vadd.f32 %v6686, %v5808
    %v6688 = vadd.f32 %v6687, %v5809
    %v6689 = vadd.f32 %v6688, %v5810
    %v6690 = vadd.f32 %v6689, %v5811
    %v6691 = vadd.f32 %v6690, %v5812
    %v6692 = vadd.f32 %v6691, %v5813
    %v6693 = vadd.f32 %v6692, %v5814
    %v6694 = vadd.f32 %v6693, %v5815
    %v6695 = vadd.f32 %v6694, %v5816
    %v6696 = vadd.f32 %v6695, %v5817
    %v6697 = vadd.f32 %v6696, %v5818
    %v6698 = vadd.f32 %v6697, %v5819
    %v6699 = vadd.f32 %v6698, %v5820
    %v6700 = vadd.f32 %v6699, %v5821
    %v6701 = vadd.f32 %v6700, %v5822
    %v6702 = vadd.f32 %v6701, %v5823
    %v6703 = vadd.f32 %v6702, %v5824
    %v6704 = vadd.f32 %v6703, %v5825
    %v6705 = vadd.f32 %v6704, %v5826
    %v6706 = vadd.f32 %v6705, %v5827
    %v6707 = vadd.f32 %v6706, %v5828
    %v6708 = vadd.f32 %v6707, %v5829
    %v6709 = vadd.f32 %v6708, %v5830
    %v6710 = vadd.f32 %v6709, %v5831
    %v6711 = vadd.f32 %v6710, %v5832
    %v6712 = vadd.f32 %v6711, %v5833
    %v6713 = vadd.f32 %v6712, %v5834
    %v6714 = vadd.f32 %v6713, %v5835
    %v6715 = vadd.f32 %v6714, %v5836
    %v6716 = vadd.f32 %v6715, %v5837
    %v6717 = vadd.f32 %v6716, %v5838
    %v6718 = vadd.f32 %v6717, %v5839
    %v6719 = vadd.f32 %v6718, %v5840
    %v6720 = vadd.f32 %v6719, %v5841
    %v6721 = vadd.f32 %v6720, %v5842
    %v6722 = vadd.f32 %v6721, %v5843
    %v6723 = vadd.f32 %v6722, %v5844
    %v6724 = vadd.f32 %v6723, %v5845
    %v6725 = vadd.f32 %v6724, %v5846
    %v6726 = vadd.f32 %v6725, %v5847
    %v6727 = vadd.f32 %v6726, %v5848
    %v6728 = vadd.f32 %v6727, %v5849
    %v6729 = vadd.f32 %v6728, %v5850
    %v6730 = vadd.f32 %v6729, %v5851
    %v6731 = vadd.f32 %v6730, %v5852
    %v6732 = vadd.f32 %v6731, %v5853
    %v6733 = vadd.f32 %v6732, %v5854
    %v6734 = vadd.f32 %v6733, %v5855
    %v6735 = vadd.f32 %v6734, %v5856
    %v6736 = vadd.f32 %v6735, %v5857
    %v6737 = vadd.f32 %v6736, %v5858
    %v6738 = vadd.f32 %v6737, %v5859
    %v6739 = vadd.f32 %v6738, %v5860
    %v6740 = vadd.f32 %v6739, %v5861
    %v6741 = vadd.f32 %v6740, %v5862
    %v6742 = vadd.f32 %v6741, %v5863
    %v6743 = vadd.f32 %v6742, %v5864
    %v6744 = vadd.f32 %v6743, %v5865
    %v6745 = vadd.f32 %v6744, %v5866
    %v6746 = vadd.f32 %v6745, %v5867
    %v6747 = vadd.f32 %v6746, %v5868
    %v6748 = vadd.f32 %v6747, %v5869
    %v6749 = vadd.f32 %v6748, %v5870
    %v6750 = vadd.f32 %v6749, %v5871
    %v6751 = vadd.f32 %v6750, %v5872
    %v6752 = vadd.f32 %v6751, %v5873
    %v6753 = vadd.f32 %v6752, %v5874
    %v6754 = vadd.f32 %v6753, %v5875
    %v6755 = vadd.f32 %v6754, %v5876
    %v6756 = vadd.f32 %v6755, %v5877
    %v6757 = vadd.f32 %v6756, %v5878
    %v6758 = vadd.f32 %v6757, %v5879
    %v6759 = vadd.f32 %v6758, %v5880
    %v6760 = vadd.f32 %v6759, %v5881
    %v6761 = vadd.f32 %v6760, %v5882
    %v6762 = vadd.f32 %v6761, %v5883
    %v6763 = vadd.f32 %v6762, %v5884
    %v6764 = vadd.f32 %v6763, %v5885
    %v6765 = vadd.f32 %v6764, %v5886
    %v6766 = vadd.f32 %v6765, %v5887
    %v6767 = vadd.f32 %v6766, %v5888
    %v6768 = vadd.f32 %v6767, %v5889
    %v6769 = vadd.f32 %v6768, %v5890
    %v6770 = vadd.f32 %v6769, %v5891
    %v6771 = vadd.f32 %v6770, %v5892
    %v6772 = vadd.f32 %v6771, %v5893
    %v6773 = vadd.f32 %v6772, %v5894
    %v6774 = vadd.f32 %v6773, %v5895
    %v6775 = vadd.f32 %v6774, %v5896
    %v6776 = vadd.f32 %v6775, %v5897
    %v6777 = vadd.f32 %v6776, %v5898
    %v6778 = vadd.f32 %v6777, %v5899
    %v6779 = vadd.f32 %v6778, %v5900
    %v6780 = vadd.f32 %v6779, %v5901
    %v6781 = vadd.f32 %v6780, %v5902
    %v6782 = vadd.f32 %v6781, %v5903
    %v6783 = vadd.f32 %v6782, %v5904
    %v6784 = vadd.f32 %v6783, %v5905
    %v6785 = vadd.f32 %v6784, %v5906
    %v6786 = vadd.f32 %v6785, %v5907
    %v6787 = vadd.f32 %v6786, %v5908
    %v6788 = vadd.f32 %v6787, %v5909
    %v6789 = vadd.f32 %v6788, %v5910
    %v6790 = vadd.f32 %v6789, %v5911
    %v6791 = vadd.f32 %v6790, %v5912
    %v6792 = vadd.f32 %v6791, %v5913
    %v6793 = vadd.f32 %v6792, %v5914
    %v6794 = vadd.f32 %v6793, %v5915
    %v6795 = vadd.f32 %v6794, %v5916
    %v6796 = vadd.f32 %v6795, %v5917
    %v6797 = vadd.f32 %v6796, %v5918
    %v6798 = vadd.f32 %v6797, %v5919
    %v6799 = vadd.f32 %v6798, %v5920
    %v6800 = vadd.f32 %v6799, %v5921
    %v6801 = vadd.f32 %v6800, %v5922
    %v6802 = vadd.f32 %v6801, %v5923
    %v6803 = vadd.f32 %v6802, %v5924
    %v6804 = vadd.f32 %v6803, %v5925
    %v6805 = vadd.f32 %v6804, %v5926
    %v6806 = vadd.f32 %v6805, %v5927
    %v6807 = vadd.f32 %v6806, %v5928
    %v6808 = vadd.f32 %v6807, %v5929
    %v6809 = vadd.f32 %v6808, %v5930
    %v6810 = vadd.f32 %v6809, %v5931
    %v6811 = vadd.f32 %v6810, %v5932
    %v6812 = vadd.f32 %v6811, %v5933
    %v6813 = vadd.f32 %v6812, %v5934
    %v6814 = vadd.f32 %v6813, %v5935
    %v6815 = vadd.f32 %v6814, %v5936
    %v6816 = vadd.f32 %v6815, %v5937
    %v6817 = vadd.f32 %v6816, %v5938
    %v6818 = vadd.f32 %v6817, %v5939
    %v6819 = vadd.f32 %v6818, %v5940
    %v6820 = vadd.f32 %v6819, %v5941
    %v6821 = vadd.f32 %v6820, %v5942
    %v6822 = vadd.f32 %v6821, %v5943
    %v6823 = vadd.f32 %v6822, %v5944
    %v6824 = vadd.f32 %v6823, %v5945
    %v6825 = vadd.f32 %v6824, %v5946
    %v6826 = vadd.f32 %v6825, %v5947
    %v6827 = vadd.f32 %v6826, %v5948
    %v6828 = vadd.f32 %v6827, %v5949
    %v6829 = vadd.f32 %v6828, %v5950
    %v6830 = vadd.f32 %v6829, %v5951
    %v6831 = vadd.f32 %v6830, %v5952
    %v6832 = vadd.f32 %v6831, %v5953
    %v6833 = vadd.f32 %v6832, %v5954
    %v6834 = vadd.f32 %v6833, %v5955
    %v6835 = vadd.f32 %v6834, %v5956
    %v6836 = vadd.f32 %v6835, %v5957
    %v6837 = vadd.f32 %v6836, %v5958
    %v6838 = vadd.f32 %v6837, %v5959
    %v6839 = vadd.f32 %v6838, %v5960
    %v6840 = vadd.f32 %v6839, %v5961
    %v6841 = vadd.f32 %v6840, %v5962
    %v6842 = vadd.f32 %v6841, %v5963
    %v6843 = vadd.f32 %v6842, %v5964
    %v6844 = vadd.f32 %v6843, %v5965
    %v6845 = vadd.f32 %v6844, %v5966
    %v6846 = vadd.f32 %v6845, %v5967
    %v6847 = vadd.f32 %v6846, %v5968
    %v6848 = vadd.f32 %v6847, %v5969
    %v6849 = vadd.f32 %v6848, %v5970
    %v6850 = vadd.f32 %v6849, %v5971
    %v6851 = vadd.f32 %v6850, %v5972
    %v6852 = vadd.f32 %v6851, %v5973
    %v6853 = vadd.f32 %v6852, %v5974
    %v6854 = vadd.f32 %v6853, %v5975
    %v6855 = vadd.f32 %v6854, %v5976
    %v6856 = vadd.f32 %v6855, %v5977
    %v6857 = vadd.f32 %v6856, %v5978
    %v6858 = vadd.f32 %v6857, %v5979
    %v6859 = vadd.f32 %v6858, %v5980
    %v6860 = vadd.f32 %v6859, %v5981
    %v6861 = vadd.f32 %v6860, %v5982
    %v6862 = vadd.f32 %v6861, %v5983
    %v6863 = vadd.f32 %v6862, %v5984
    %v6864 = vadd.f32 %v6863, %v5985
    %v6865 = vadd.f32 %v6864, %v5986
    %v6866 = vadd.f32 %v6865, %v5987
    %v6867 = vadd.f32 %v6866, %v5988
    %v6868 = vadd.f32 %v6867, %v5989
    %v6869 = vadd.f32 %v6868, %v5990
    %v6870 = vadd.f32 %v6869, %v5991
    %v6871 = vadd.f32 %v6870, %v5992
    %v6872 = vadd.f32 %v6871, %v5993
    %v6873 = vadd.f32 %v6872, %v5994
    %v6874 = vadd.f32 %v6873, %v5995
    %v6875 = vadd.f32 %v6874, %v5996
    %v6876 = vadd.f32 %v6875, %v5997
    %v6877 = vadd.f32 %v6876, %v5998
    %v6878 = vadd.f32 %v6877, %v5999
    %v6879 = vadd.f32 %v6878, %v6000
    %v6880 = vadd.f32 %v6879, %v6001
    %v6881 = vadd.f32 %v6880, %v6002
    %v6882 = vadd.f32 %v6881, %v6003
    %v6883 = vadd.f32 %v6882, %v6004
    %v6884 = vadd.f32 %v6883, %v6005
    %v6885 = vadd.f32 %v6884, %v6006
    %v6886 = vadd.f32 %v6885, %v6007
    %v6887 = vadd.f32 %v6886, %v6008
    %v6888 = vadd.f32 %v6887, %v6009
    %v6889 = vadd.f32 %v6888, %v6010
    %v6890 = vadd.f32 %v6889, %v6011
    %v6891 = vadd.f32 %v6890, %v6012
    %v6892 = vadd.f32 %v6891, %v6013
    %v6893 = vadd.f32 %v6892, %v6014
    %v6894 = vadd.f32 %v6893, %v6015
    %v6895 = vadd.f32 %v6894, %v6016
    %v6896 = vadd.f32 %v6895, %v6017
    %v6897 = vadd.f32 %v6896, %v6018
    %v6898 = vadd.f32 %v6897, %v6019
    %v6899 = vadd.f32 %v6898, %v6020
    %v6900 = vadd.f32 %v6899, %v6021
    %v6901 = vadd.f32 %v6900, %v6022
    %v6902 = vadd.f32 %v6901, %v6023
    %v6903 = vadd.f32 %v6902, %v6024
    %v6904 = vadd.f32 %v6903, %v6025
    %v6905 = vadd.f32 %v6904, %v6026
    %v6906 = vadd.f32 %v6905, %v6027
    %v6907 = vadd.f32 %v6906, %v6028
    %v6908 = vadd.f32 %v6907, %v6029
    %v6909 = vadd.f32 %v6908, %v6030
    %v6910 = vadd.f32 %v6909, %v6031
    %v6911 = vadd.f32 %v6910, %v6032
    %v6912 = vadd.f32 %v6911, %v6033
    %v6913 = vadd.f32 %v6912, %v6034
    %6914 = vadd.xlane.f32.xlu0 %v6913
    %v6915 = vpop.xlane.xlu0 %6914
    %v6916 = vadd.f32 %v6035, %v6036
    %v6917 = vadd.f32 %v6916, %v6037
    %v6918 = vadd.f32 %v6917, %v6038
    %v6919 = vadd.f32 %v6918, %v6039
    %v6920 = vadd.f32 %v6919, %v6040
    %v6921 = vadd.f32 %v6920, %v6041
    %v6922 = vadd.f32 %v6921, %v6042
    %v6923 = vadd.f32 %v6922, %v6043
    %v6924 = vadd.f32 %v6923, %v6044
    %v6925 = vadd.f32 %v6924, %v6045
    %v6926 = vadd.f32 %v6925, %v6046
    %v6927 = vadd.f32 %v6926, %v6047
    %v6928 = vadd.f32 %v6927, %v6048
    %v6929 = vadd.f32 %v6928, %v6049
    %v6930 = vadd.f32 %v6929, %v6050
    %v6931 = vadd.f32 %v6930, %v6051
    %v6932 = vadd.f32 %v6931, %v6052
    %v6933 = vadd.f32 %v6932, %v6053
    %v6934 = vadd.f32 %v6933, %v6054
    %v6935 = vadd.f32 %v6934, %v6055
    %v6936 = vadd.f32 %v6935, %v6056
    %v6937 = vadd.f32 %v6936, %v6057
    %v6938 = vadd.f32 %v6937, %v6058
    %v6939 = vadd.f32 %v6938, %v6059
    %v6940 = vadd.f32 %v6939, %v6060
    %v6941 = vadd.f32 %v6940, %v6061
    %v6942 = vadd.f32 %v6941, %v6062
    %v6943 = vadd.f32 %v6942, %v6063
    %v6944 = vadd.f32 %v6943, %v6064
    %v6945 = vadd.f32 %v6944, %v6065
    %v6946 = vadd.f32 %v6945, %v6066
    %v6947 = vadd.f32 %v6946, %v6067
    %v6948 = vadd.f32 %v6947, %v6068
    %v6949 = vadd.f32 %v6948, %v6069
    %v6950 = vadd.f32 %v6949, %v6070
    %v6951 = vadd.f32 %v6950, %v6071
    %v6952 = vadd.f32 %v6951, %v6072
    %v6953 = vadd.f32 %v6952, %v6073
    %v6954 = vadd.f32 %v6953, %v6074
    %v6955 = vadd.f32 %v6954, %v6075
    %v6956 = vadd.f32 %v6955, %v6076
    %v6957 = vadd.f32 %v6956, %v6077
    %v6958 = vadd.f32 %v6957, %v6078
    %v6959 = vadd.f32 %v6958, %v6079
    %v6960 = vadd.f32 %v6959, %v6080
    %v6961 = vadd.f32 %v6960, %v6081
    %v6962 = vadd.f32 %v6961, %v6082
    %v6963 = vadd.f32 %v6962, %v6083
    %v6964 = vadd.f32 %v6963, %v6084
    %v6965 = vadd.f32 %v6964, %v6085
    %v6966 = vadd.f32 %v6965, %v6086
    %v6967 = vadd.f32 %v6966, %v6087
    %v6968 = vadd.f32 %v6967, %v6088
    %v6969 = vadd.f32 %v6968, %v6089
    %v6970 = vadd.f32 %v6969, %v6090
    %v6971 = vadd.f32 %v6970, %v6091
    %v6972 = vadd.f32 %v6971, %v6092
    %v6973 = vadd.f32 %v6972, %v6093
    %v6974 = vadd.f32 %v6973, %v6094
    %v6975 = vadd.f32 %v6974, %v6095
    %v6976 = vadd.f32 %v6975, %v6096
    %v6977 = vadd.f32 %v6976, %v6097
    %v6978 = vadd.f32 %v6977, %v6098
    %v6979 = vadd.f32 %v6978, %v6099
    %v6980 = vadd.f32 %v6979, %v6100
    %v6981 = vadd.f32 %v6980, %v6101
    %v6982 = vadd.f32 %v6981, %v6102
    %v6983 = vadd.f32 %v6982, %v6103
    %v6984 = vadd.f32 %v6983, %v6104
    %v6985 = vadd.f32 %v6984, %v6105
    %v6986 = vadd.f32 %v6985, %v6106
    %v6987 = vadd.f32 %v6986, %v6107
    %v6988 = vadd.f32 %v6987, %v6108
    %v6989 = vadd.f32 %v6988, %v6109
    %v6990 = vadd.f32 %v6989, %v6110
    %v6991 = vadd.f32 %v6990, %v6111
    %v6992 = vadd.f32 %v6991, %v6112
    %v6993 = vadd.f32 %v6992, %v6113
    %v6994 = vadd.f32 %v6993, %v6114
    %v6995 = vadd.f32 %v6994, %v6115
    %v6996 = vadd.f32 %v6995, %v6116
    %v6997 = vadd.f32 %v6996, %v6117
    %v6998 = vadd.f32 %v6997, %v6118
    %v6999 = vadd.f32 %v6998, %v6119
    %v7000 = vadd.f32 %v6999, %v6120
    %v7001 = vadd.f32 %v7000, %v6121
    %v7002 = vadd.f32 %v7001, %v6122
    %v7003 = vadd.f32 %v7002, %v6123
    %v7004 = vadd.f32 %v7003, %v6124
    %v7005 = vadd.f32 %v7004, %v6125
    %v7006 = vadd.f32 %v7005, %v6126
    %v7007 = vadd.f32 %v7006, %v6127
    %v7008 = vadd.f32 %v7007, %v6128
    %v7009 = vadd.f32 %v7008, %v6129
    %v7010 = vadd.f32 %v7009, %v6130
    %v7011 = vadd.f32 %v7010, %v6131
    %v7012 = vadd.f32 %v7011, %v6132
    %v7013 = vadd.f32 %v7012, %v6133
    %v7014 = vadd.f32 %v7013, %v6134
    %v7015 = vadd.f32 %v7014, %v6135
    %v7016 = vadd.f32 %v7015, %v6136
    %v7017 = vadd.f32 %v7016, %v6137
    %v7018 = vadd.f32 %v7017, %v6138
    %v7019 = vadd.f32 %v7018, %v6139
    %v7020 = vadd.f32 %v7019, %v6140
    %v7021 = vadd.f32 %v7020, %v6141
    %v7022 = vadd.f32 %v7021, %v6142
    %v7023 = vadd.f32 %v7022, %v6143
    %v7024 = vadd.f32 %v7023, %v6144
    %v7025 = vadd.f32 %v7024, %v6145
    %v7026 = vadd.f32 %v7025, %v6146
    %v7027 = vadd.f32 %v7026, %v6147
    %v7028 = vadd.f32 %v7027, %v6148
    %v7029 = vadd.f32 %v7028, %v6149
    %v7030 = vadd.f32 %v7029, %v6150
    %v7031 = vadd.f32 %v7030, %v6151
    %v7032 = vadd.f32 %v7031, %v6152
    %v7033 = vadd.f32 %v7032, %v6153
    %v7034 = vadd.f32 %v7033, %v6154
    %v7035 = vadd.f32 %v7034, %v6155
    %v7036 = vadd.f32 %v7035, %v6156
    %v7037 = vadd.f32 %v7036, %v6157
    %v7038 = vadd.f32 %v7037, %v6158
    %v7039 = vadd.f32 %v7038, %v6159
    %v7040 = vadd.f32 %v7039, %v6160
    %v7041 = vadd.f32 %v7040, %v6161
    %v7042 = vadd.f32 %v7041, %v6162
    %v7043 = vadd.f32 %v7042, %v6163
    %v7044 = vadd.f32 %v7043, %v6164
    %v7045 = vadd.f32 %v7044, %v6165
    %v7046 = vadd.f32 %v7045, %v6166
    %v7047 = vadd.f32 %v7046, %v6167
    %v7048 = vadd.f32 %v7047, %v6168
    %v7049 = vadd.f32 %v7048, %v6169
    %v7050 = vadd.f32 %v7049, %v6170
    %v7051 = vadd.f32 %v7050, %v6171
    %v7052 = vadd.f32 %v7051, %v6172
    %v7053 = vadd.f32 %v7052, %v6173
    %v7054 = vadd.f32 %v7053, %v6174
    %v7055 = vadd.f32 %v7054, %v6175
    %v7056 = vadd.f32 %v7055, %v6176
    %v7057 = vadd.f32 %v7056, %v6177
    %v7058 = vadd.f32 %v7057, %v6178
    %v7059 = vadd.f32 %v7058, %v6179
    %v7060 = vadd.f32 %v7059, %v6180
    %v7061 = vadd.f32 %v7060, %v6181
    %v7062 = vadd.f32 %v7061, %v6182
    %v7063 = vadd.f32 %v7062, %v6183
    %v7064 = vadd.f32 %v7063, %v6184
    %v7065 = vadd.f32 %v7064, %v6185
    %v7066 = vadd.f32 %v7065, %v6186
    %v7067 = vadd.f32 %v7066, %v6187
    %v7068 = vadd.f32 %v7067, %v6188
    %v7069 = vadd.f32 %v7068, %v6189
    %v7070 = vadd.f32 %v7069, %v6190
    %v7071 = vadd.f32 %v7070, %v6191
    %v7072 = vadd.f32 %v7071, %v6192
    %v7073 = vadd.f32 %v7072, %v6193
    %v7074 = vadd.f32 %v7073, %v6194
    %v7075 = vadd.f32 %v7074, %v6195
    %v7076 = vadd.f32 %v7075, %v6196
    %v7077 = vadd.f32 %v7076, %v6197
    %v7078 = vadd.f32 %v7077, %v6198
    %v7079 = vadd.f32 %v7078, %v6199
    %v7080 = vadd.f32 %v7079, %v6200
    %v7081 = vadd.f32 %v7080, %v6201
    %v7082 = vadd.f32 %v7081, %v6202
    %v7083 = vadd.f32 %v7082, %v6203
    %v7084 = vadd.f32 %v7083, %v6204
    %v7085 = vadd.f32 %v7084, %v6205
    %v7086 = vadd.f32 %v7085, %v6206
    %v7087 = vadd.f32 %v7086, %v6207
    %v7088 = vadd.f32 %v7087, %v6208
    %v7089 = vadd.f32 %v7088, %v6209
    %v7090 = vadd.f32 %v7089, %v6210
    %v7091 = vadd.f32 %v7090, %v6211
    %v7092 = vadd.f32 %v7091, %v6212
    %v7093 = vadd.f32 %v7092, %v6213
    %v7094 = vadd.f32 %v7093, %v6214
    %v7095 = vadd.f32 %v7094, %v6215
    %v7096 = vadd.f32 %v7095, %v6216
    %v7097 = vadd.f32 %v7096, %v6217
    %v7098 = vadd.f32 %v7097, %v6218
    %v7099 = vadd.f32 %v7098, %v6219
    %v7100 = vadd.f32 %v7099, %v6220
    %v7101 = vadd.f32 %v7100, %v6221
    %v7102 = vadd.f32 %v7101, %v6222
    %v7103 = vadd.f32 %v7102, %v6223
    %v7104 = vadd.f32 %v7103, %v6224
    %v7105 = vadd.f32 %v7104, %v6225
    %v7106 = vadd.f32 %v7105, %v6226
    %v7107 = vadd.f32 %v7106, %v6227
    %v7108 = vadd.f32 %v7107, %v6228
    %v7109 = vadd.f32 %v7108, %v6229
    %v7110 = vadd.f32 %v7109, %v6230
    %v7111 = vadd.f32 %v7110, %v6231
    %v7112 = vadd.f32 %v7111, %v6232
    %v7113 = vadd.f32 %v7112, %v6233
    %v7114 = vadd.f32 %v7113, %v6234
    %v7115 = vadd.f32 %v7114, %v6235
    %v7116 = vadd.f32 %v7115, %v6236
    %v7117 = vadd.f32 %v7116, %v6237
    %v7118 = vadd.f32 %v7117, %v6238
    %v7119 = vadd.f32 %v7118, %v6239
    %v7120 = vadd.f32 %v7119, %v6240
    %v7121 = vadd.f32 %v7120, %v6241
    %v7122 = vadd.f32 %v7121, %v6242
    %v7123 = vadd.f32 %v7122, %v6243
    %v7124 = vadd.f32 %v7123, %v6244
    %v7125 = vadd.f32 %v7124, %v6245
    %v7126 = vadd.f32 %v7125, %v6246
    %v7127 = vadd.f32 %v7126, %v6247
    %v7128 = vadd.f32 %v7127, %v6248
    %v7129 = vadd.f32 %v7128, %v6249
    %v7130 = vadd.f32 %v7129, %v6250
    %v7131 = vadd.f32 %v7130, %v6251
    %v7132 = vadd.f32 %v7131, %v6252
    %v7133 = vadd.f32 %v7132, %v6253
    %v7134 = vadd.f32 %v7133, %v6254
    %v7135 = vadd.f32 %v7134, %v6255
    %v7136 = vadd.f32 %v7135, %v6256
    %v7137 = vadd.f32 %v7136, %v6257
    %v7138 = vadd.f32 %v7137, %v6258
    %v7139 = vadd.f32 %v7138, %v6259
    %v7140 = vadd.f32 %v7139, %v6260
    %v7141 = vadd.f32 %v7140, %v6261
    %v7142 = vadd.f32 %v7141, %v6262
    %v7143 = vadd.f32 %v7142, %v6263
    %v7144 = vadd.f32 %v7143, %v6264
    %v7145 = vadd.f32 %v7144, %v6265
    %v7146 = vadd.f32 %v7145, %v6266
    %v7147 = vadd.f32 %v7146, %v6267
    %v7148 = vadd.f32 %v7147, %v6268
    %v7149 = vadd.f32 %v7148, %v6269
    %v7150 = vadd.f32 %v7149, %v6270
    %v7151 = vadd.f32 %v7150, %v6271
    %v7152 = vadd.f32 %v7151, %v6272
    %v7153 = vadd.f32 %v7152, %v6273
    %v7154 = vadd.f32 %v7153, %v6274
    %v7155 = vadd.f32 %v7154, %v6275
    %v7156 = vadd.f32 %v7155, %v6276
    %v7157 = vadd.f32 %v7156, %v6277
    %v7158 = vadd.f32 %v7157, %v6278
    %v7159 = vadd.f32 %v7158, %v6279
    %v7160 = vadd.f32 %v7159, %v6280
    %v7161 = vadd.f32 %v7160, %v6281
    %v7162 = vadd.f32 %v7161, %v6282
    %v7163 = vadd.f32 %v7162, %v6283
    %v7164 = vadd.f32 %v7163, %v6284
    %v7165 = vadd.f32 %v7164, %v6285
    %v7166 = vadd.f32 %v7165, %v6286
    %v7167 = vadd.f32 %v7166, %v6287
    %v7168 = vadd.f32 %v7167, %v6288
    %v7169 = vadd.f32 %v7168, %v6289
    %v7170 = vadd.f32 %v7169, %v6290
    %v7171 = vadd.f32 %v7170, %v6291
    %v7172 = vadd.f32 %v7171, %v6292
    %v7173 = vadd.f32 %v7172, %v6293
    %v7174 = vadd.f32 %v7173, %v6294
    %v7175 = vadd.f32 %v7174, %v6295
    %v7176 = vadd.f32 %v7175, %v6296
    %v7177 = vadd.f32 %v7176, %v6297
    %v7178 = vadd.f32 %v7177, %v6298
    %v7179 = vadd.f32 %v7178, %v6299
    %v7180 = vadd.f32 %v7179, %v6300
    %v7181 = vadd.f32 %v7180, %v6301
    %v7182 = vadd.f32 %v7181, %v6302
    %v7183 = vadd.f32 %v7182, %v6303
    %v7184 = vadd.f32 %v7183, %v6304
    %v7185 = vadd.f32 %v7184, %v6305
    %v7186 = vadd.f32 %v7185, %v6306
    %v7187 = vadd.f32 %v7186, %v6307
    %v7188 = vadd.f32 %v7187, %v6308
    %v7189 = vadd.f32 %v7188, %v6309
    %v7190 = vadd.f32 %v7189, %v6310
    %v7191 = vadd.f32 %v7190, %v6311
    %v7192 = vadd.f32 %v7191, %v6312
    %v7193 = vadd.f32 %v7192, %v6313
    %v7194 = vadd.f32 %v7193, %v6314
    %v7195 = vadd.f32 %v7194, %v6315
    %v7196 = vadd.f32 %v7195, %v6316
    %v7197 = vadd.f32 %v7196, %v6317
    %v7198 = vadd.f32 %v7197, %v6318
    %v7199 = vadd.f32 %v7198, %v6319
    %v7200 = vadd.f32 %v7199, %v6320
    %v7201 = vadd.f32 %v7200, %v6321
    %v7202 = vadd.f32 %v7201, %v6322
    %v7203 = vadd.f32 %v7202, %v6323
    %v7204 = vadd.f32 %v7203, %v6324
    %v7205 = vadd.f32 %v7204, %v6325
    %v7206 = vadd.f32 %v7205, %v6326
    %v7207 = vadd.f32 %v7206, %v6327
    %v7208 = vadd.f32 %v7207, %v6328
    %v7209 = vadd.f32 %v7208, %v6329
    %v7210 = vadd.f32 %v7209, %v6330
    %v7211 = vadd.f32 %v7210, %v6331
    %v7212 = vadd.f32 %v7211, %v6332
    %v7213 = vadd.f32 %v7212, %v6333
    %v7214 = vadd.f32 %v7213, %v6334
    %v7215 = vadd.f32 %v7214, %v6335
    %v7216 = vadd.f32 %v7215, %v6336
    %v7217 = vadd.f32 %v7216, %v6337
    %v7218 = vadd.f32 %v7217, %v6338
    %v7219 = vadd.f32 %v7218, %v6339
    %v7220 = vadd.f32 %v7219, %v6340
    %v7221 = vadd.f32 %v7220, %v6341
    %v7222 = vadd.f32 %v7221, %v6342
    %v7223 = vadd.f32 %v7222, %v6343
    %v7224 = vadd.f32 %v7223, %v6344
    %v7225 = vadd.f32 %v7224, %v6345
    %v7226 = vadd.f32 %v7225, %v6346
    %v7227 = vadd.f32 %v7226, %v6347
    %v7228 = vadd.f32 %v7227, %v6348
    %v7229 = vadd.f32 %v7228, %v6349
    %v7230 = vadd.f32 %v7229, %v6350
    %v7231 = vadd.f32 %v7230, %v6351
    %v7232 = vadd.f32 %v7231, %v6352
    %v7233 = vadd.f32 %v7232, %v6353
    %v7234 = vadd.f32 %v7233, %v6354
    %v7235 = vadd.f32 %v7234, %v6355
    %v7236 = vadd.f32 %v7235, %v6356
    %v7237 = vadd.f32 %v7236, %v6357
    %v7238 = vadd.f32 %v7237, %v6358
    %v7239 = vadd.f32 %v7238, %v6359
    %v7240 = vadd.f32 %v7239, %v6360
    %v7241 = vadd.f32 %v7240, %v6361
    %v7242 = vadd.f32 %v7241, %v6362
    %v7243 = vadd.f32 %v7242, %v6363
    %v7244 = vadd.f32 %v7243, %v6364
    %v7245 = vadd.f32 %v7244, %v6365
    %v7246 = vadd.f32 %v7245, %v6366
    %v7247 = vadd.f32 %v7246, %v6367
    %v7248 = vadd.f32 %v7247, %v6368
    %v7249 = vadd.f32 %v7248, %v6369
    %v7250 = vadd.f32 %v7249, %v6370
    %v7251 = vadd.f32 %v7250, %v6371
    %v7252 = vadd.f32 %v7251, %v6372
    %v7253 = vadd.f32 %v7252, %v6373
    %v7254 = vadd.f32 %v7253, %v6374
    %v7255 = vadd.f32 %v7254, %v6375
    %v7256 = vadd.f32 %v7255, %v6376
    %v7257 = vadd.f32 %v7256, %v6377
    %v7258 = vadd.f32 %v7257, %v6378
    %v7259 = vadd.f32 %v7258, %v6379
    %v7260 = vadd.f32 %v7259, %v6380
    %v7261 = vadd.f32 %v7260, %v6381
    %v7262 = vadd.f32 %v7261, %v6382
    %v7263 = vadd.f32 %v7262, %v6383
    %v7264 = vadd.f32 %v7263, %v6384
    %v7265 = vadd.f32 %v7264, %v6385
    %v7266 = vadd.f32 %v7265, %v6386
    %v7267 = vadd.f32 %v7266, %v6387
    %v7268 = vadd.f32 %v7267, %v6388
    %v7269 = vadd.f32 %v7268, %v6389
    %v7270 = vadd.f32 %v7269, %v6390
    %v7271 = vadd.f32 %v7270, %v6391
    %v7272 = vadd.f32 %v7271, %v6392
    %v7273 = vadd.f32 %v7272, %v6393
    %v7274 = vadd.f32 %v7273, %v6394
    %v7275 = vadd.f32 %v7274, %v6395
    %v7276 = vadd.f32 %v7275, %v6396
    %v7277 = vadd.f32 %v7276, %v6397
    %v7278 = vadd.f32 %v7277, %v6398
    %v7279 = vadd.f32 %v7278, %v6399
    %v7280 = vadd.f32 %v7279, %v6400
    %v7281 = vadd.f32 %v7280, %v6401
    %v7282 = vadd.f32 %v7281, %v6402
    %v7283 = vadd.f32 %v7282, %v6403
    %v7284 = vadd.f32 %v7283, %v6404
    %v7285 = vadd.f32 %v7284, %v6405
    %v7286 = vadd.f32 %v7285, %v6406
    %v7287 = vadd.f32 %v7286, %v6407
    %v7288 = vadd.f32 %v7287, %v6408
    %v7289 = vadd.f32 %v7288, %v6409
    %v7290 = vadd.f32 %v7289, %v6410
    %v7291 = vadd.f32 %v7290, %v6411
    %v7292 = vadd.f32 %v7291, %v6412
    %v7293 = vadd.f32 %v7292, %v6413
    %v7294 = vadd.f32 %v7293, %v6414
    %v7295 = vadd.f32 %v7294, %v6415
    %v7296 = vadd.f32 %v7295, %v6416
    %v7297 = vadd.f32 %v7296, %v6417
    %v7298 = vadd.f32 %v7297, %v6418
    %v7299 = vadd.f32 %v7298, %v6419
    %v7300 = vadd.f32 %v7299, %v6420
    %v7301 = vadd.f32 %v7300, %v6421
    %v7302 = vadd.f32 %v7301, %v6422
    %v7303 = vadd.f32 %v7302, %v6423
    %v7304 = vadd.f32 %v7303, %v6424
    %v7305 = vadd.f32 %v7304, %v6425
    %v7306 = vadd.f32 %v7305, %v6426
    %v7307 = vadd.f32 %v7306, %v6427
    %v7308 = vadd.f32 %v7307, %v6428
    %v7309 = vadd.f32 %v7308, %v6429
    %v7310 = vadd.f32 %v7309, %v6430
    %v7311 = vadd.f32 %v7310, %v6431
    %v7312 = vadd.f32 %v7311, %v6432
    %v7313 = vadd.f32 %v7312, %v6433
    %v7314 = vadd.f32 %v7313, %v6434
    %v7315 = vadd.f32 %v7314, %v6435
    %v7316 = vadd.f32 %v7315, %v6436
    %v7317 = vadd.f32 %v7316, %v6437
    %v7318 = vadd.f32 %v7317, %v6438
    %v7319 = vadd.f32 %v7318, %v6439
    %v7320 = vadd.f32 %v7319, %v6440
    %v7321 = vadd.f32 %v7320, %v6441
    %v7322 = vadd.f32 %v7321, %v6442
    %v7323 = vadd.f32 %v7322, %v6443
    %v7324 = vadd.f32 %v7323, %v6444
    %v7325 = vadd.f32 %v7324, %v6445
    %v7326 = vadd.f32 %v7325, %v6446
    %v7327 = vadd.f32 %v7326, %v6447
    %v7328 = vadd.f32 %v7327, %v6448
    %v7329 = vadd.f32 %v7328, %v6449
    %v7330 = vadd.f32 %v7329, %v6450
    %v7331 = vadd.f32 %v7330, %v6451
    %v7332 = vadd.f32 %v7331, %v6452
    %v7333 = vadd.f32 %v7332, %v6453
    %v7334 = vadd.f32 %v7333, %v6454
    %v7335 = vadd.f32 %v7334, %v6455
    %v7336 = vadd.f32 %v7335, %v6456
    %v7337 = vadd.f32 %v7336, %v6457
    %v7338 = vadd.f32 %v7337, %v6458
    %v7339 = vadd.f32 %v7338, %v6459
    %v7340 = vadd.f32 %v7339, %v6460
    %v7341 = vadd.f32 %v7340, %v6461
    %v7342 = vadd.f32 %v7341, %v6462
    %v7343 = vadd.f32 %v7342, %v6463
    %v7344 = vadd.f32 %v7343, %v6464
    %v7345 = vadd.f32 %v7344, %v6465
    %v7346 = vadd.f32 %v7345, %v6466
    %v7347 = vadd.f32 %v7346, %v6467
    %v7348 = vadd.f32 %v7347, %v6468
    %v7349 = vadd.f32 %v7348, %v6469
    %v7350 = vadd.f32 %v7349, %v6470
    %v7351 = vadd.f32 %v7350, %v6471
    %v7352 = vadd.f32 %v7351, %v6472
    %v7353 = vadd.f32 %v7352, %v6473
    %v7354 = vadd.f32 %v7353, %v6474
    %7355 = vadd.xlane.f32.xlu0 %v7354
    %v7356 = vpop.xlane.xlu0 %7355
    %v7359 = vlaneseq
    %v7360 = vand.u32 %v7359, 127
    %v7361 = vperm.slane %v3833, %v7360
    %v7362 = vadd.s32 %v7360, 4294967288
    %v7363 = vperm.slane %v4274, %v7362
    %vm7364 = vcmask 130112
    %v7365 = vsel %vm7364, %v7363, %v7361
    %v7369 = vperm.slane %v6915, %v7360
    %v7370 = vperm.slane %v7356, %v7362
    %v7371 = vsel %vm7364, %v7370, %v7369
    %vm7373 = vcmask 1040384
    %v7374 = vsel %vm7373, %v7365, %v7371
    %v7375 = vld [vmem:[#allocation7] sm:$0x1]
    %v7377 = vperm.slane %v7375, 0
    %v7379 = vadd.f32 %v7374, %v7377
    %vm7380 = vcmp.gt.f32.partialorder %v7379, 0.0
    %v7381 = vmul.f32 %v7379, 0.1
    %v7382 = vsel %vm7380, %v7379, %v7381
    %v7383 = vld [vmem:[#allocation8] sm:$0xff]
    %v7384 = vld [vmem:[#allocation8 + $0x8] sm:$0xff]
    %v7385 = vld [vmem:[#allocation10] sm:$0x1]
    %v7387 = vperm.slane %v7385, 0
    %vm7389 = vcmask 130048
    %v7391 = vsel %vm7389, %v7382, 0
    %7393 = vmatpush.msra.mxu0 0.0
    %7394 = vmatpush.msra.mxu0 0.0
    %7395 = vmatpush.msra.mxu0 0.0
    %7396 = vmatpush.msra.mxu0 0.0
    %7397 = vmatpush.msra.mxu0 0.0
    %7398 = vmatpush.msra.mxu0 0.0
    %7399 = vmatpush.msra.mxu0 0.0
    %7400 = vmatpush.msra.mxu0 0.0
    %7401 = vmatpush.msra.mxu0 0.0
    %7402 = vmatpush.msra.mxu0 0.0
    %7403 = vmatpush.msra.mxu0 0.0
    %7404 = vmatpush.msra.mxu0 0.0
    %7405 = vmatpush.msra.mxu0 0.0
    %7406 = vmatpush.msra.mxu0 0.0
    %7407 = vmatpush.msra.mxu0 %v7384
    %7408 = vmatpush.msra.mxu0 %v7383
    %7409 = vmatmul.f32.gmra.mxu0 %v7391
    %v7410 = vpop.f32.mrf.mxu0
    %v7411 = vadd.f32 %v7387, %v7410
    %7412 = vdwg.mxu0
    %7413 = vst [vmem:[#allocation11] sm:$0x3] %v7411
    // Predicated region
    $region42: #{tpu_custom_call.1} parent=1 // pred_check
      _
    $region43: #{tpu_custom_call.1} parent=1 // pred_check_branch
      %7415 = sbr.rel (0) target = $region45
    $region44: #{tpu_custom_call.1} parent=1 // pred_region
      %7417 = vsyncadd [#allocation4], 0
      %s7419 = sshll.u32 [#allocation11], 4
      %s7420 = int_to_ptr.vmem [resolvable:$true] %s7419
      %s7421 = sshll.u32 %s5, 4
      %s7422 = int_to_ptr.hbm [resolvable:$true] %s7421
      %7424 = dma.vmem_to_hbm [thread:$0]  %s7420, 32, %s7422, [#allocation4]
    $region45: #{tpu_custom_call.1} parent=1 // pred_fallthru
      _
    // Predicated region
    $region46: #{tpu_custom_call.1} parent=1 // pred_check
      _
    $region47: #{tpu_custom_call.1} parent=1 // pred_check_branch
      %7426 = sbr.rel (0) target = $region49
    $region48: #{tpu_custom_call.1} parent=1 // pred_region
      %7428 = dma.done [#allocation4], 32
    $region49: #{tpu_custom_call.1} parent=1 // pred_fallthru
      _
    %7429 = vsyncpa [#allocation3], 1
    %7430 = vsyncpa [#allocation6], 1
    %7431 = vsyncpa [#allocation9], 1
    %7432 = vsyncpa [#allocation4], 1

</llo_original>
